<compile_context>
chip_gen: v7x
topology: tpu7x:2x2x1
jax: 0.10.0
libtpu: 0.0.40
codegen_flags: <defaults>
</compile_context>

<pallas_src>
import functools

import jax
import jax.numpy as jnp
from jax import lax
from jax.experimental import pallas as pl
from jax.experimental.pallas import tpu as pltpu


# Static NatureCNN geometry (obs_size=64 -> cnn_feat_size=4, as the module forces).
_C1_OC, _C1_K, _C1_S = 32, 8, 4      # conv1: 32 filters, 8x8, stride 4
_C2_OC, _C2_K, _C2_S = 64, 4, 2      # conv2: 64 filters, 4x4, stride 2
_C3_OC, _C3_K, _C3_S = 64, 3, 1      # conv3: 64 filters, 3x3, stride 1
_H1 = 15                             # (64-8)//4 + 1
_H2 = 6                              # (15-4)//2 + 1
_H3 = 4                              # (6-3)//1 + 1


# -----------------------------------------------------------------------------
# Fused per-slot NatureCNN kernel (one grid step == one slot, whole net in VMEM)
# -----------------------------------------------------------------------------
def _fused_nature_cnn_kernel(p1_ref, w1_ref, b1_ref, w2_ref, b2_ref,
                             w3_ref, b3_ref, fw_ref, fb_ref, out_ref, *, batch):
    B = batch
    f32 = jnp.float32

    # ---- conv1: single MXU matmul over phase-ordered, slot-shared patches ----
    # p1 rows are ordered (hp, wp, b, h2, w2) with conv1-output pixel
    # (b, 2*h2+hp, 2*w2+wp); rows for the padded 16th row/col are zeros.
    y1 = jnp.dot(p1_ref[...], w1_ref[0], preferred_element_type=f32)      # (4*B*64, 32)
    y1 = jnp.maximum(y1 + b1_ref[0], 0.0)
    a1 = y1.reshape(2, 2, B, 8, 8, _C1_OC)                                # (hp,wp,b,h2,w2,c)

    # ---- conv2: 4x4 stride 2 -> (B,6,6,64); patches via contiguous phase slices
    pieces = []
    for i in range(_C2_K):
        hp, hq = i % 2, i // 2
        for j in range(_C2_K):
            wp, wq = j % 2, j // 2
            # conv1 output at (b, 2*oh2+i, 2*ow2+j) == a1[hp, wp, b, oh2+hq, ow2+wq]
            pieces.append(a1[hp, wp, :, hq:hq + _H2, wq:wq + _H2, :])     # (B,6,6,32)
    p2 = jnp.concatenate(pieces, axis=-1)                                 # (B,6,6,512)
    p2 = p2.reshape(B * _H2 * _H2, _C2_K * _C2_K * _C1_OC).astype(jnp.bfloat16)
    y2 = jnp.dot(p2, w2_ref[0], preferred_element_type=f32)               # (B*36, 64)
    y2 = jnp.maximum(y2 + b2_ref[0], 0.0)
    a2 = y2.reshape(B, _H2, _H2, _C2_OC)

    # ---- conv3: 3x3 stride 1 -> (B,4,4,64) -----------------------------------
    pieces = []
    for i in range(_C3_K):
        for j in range(_C3_K):
            pieces.append(a2[:, i:i + _H3, j:j + _H3, :])                 # (B,4,4,64)
    p3 = jnp.concatenate(pieces, axis=-1)                                 # (B,4,4,576)
    p3 = p3.reshape(B * _H3 * _H3, _C3_K * _C3_K * _C2_OC).astype(jnp.bfloat16)
    y3 = jnp.dot(p3, w3_ref[0], preferred_element_type=f32)               # (B*16, 64)
    y3 = jnp.maximum(y3 + b3_ref[0], 0.0)
    a3 = y3.reshape(B, _H3, _H3, _C3_OC)

    # ---- FC head + ReLU (flatten (h, w, c) via lane concatenation) -----------
    pieces = [a3[:, h, w, :] for h in range(_H3) for w in range(_H3)]     # each (B,64)
    flat = jnp.concatenate(pieces, axis=-1).astype(jnp.bfloat16)          # (B, 1024)
    y4 = jnp.dot(flat, fw_ref[0], preferred_element_type=f32)             # (B, rep)
    y4 = jnp.maximum(y4 + fb_ref[0], 0.0)
    out_ref[0] = y4.astype(out_ref.dtype)


# -----------------------------------------------------------------------------
# Wrapper-side conv1 im2col of the slot-shared observation (XLA glue, tiny)
# -----------------------------------------------------------------------------
def _conv1_patches(obs_nchw):
    """(B,C,64,64) NCHW -> (4*B*64, K1pad) bf16 patch matrix, rows ordered
    (hp, wp, b, h2, w2) so the conv1 output lands directly in the even/odd phase
    layout the in-kernel conv2 im2col consumes; K zero-padded to a multiple of 128."""
    B = obs_nchw.shape[0]
    x = jnp.transpose(obs_nchw, (0, 2, 3, 1))                     # NHWC
    cols = []
    for i in range(_C1_K):
        for j in range(_C1_K):
            cols.append(x[:, i:i + _C1_S * _H1:_C1_S, j:j + _C1_S * _H1:_C1_S, :])
    p = jnp.stack(cols, axis=3).reshape(B, _H1, _H1, -1)          # cols ordered (i, j, c)
    p = jnp.pad(p, ((0, 0), (0, 1), (0, 1), (0, 0)))              # 15x15 -> 16x16 output grid
    p = p.reshape(B, 8, 2, 8, 2, -1).transpose(2, 4, 0, 1, 3, 5)  # (hp, wp, b, h2, w2, k)
    p = p.reshape(4 * B * 64, -1)
    kpad = -p.shape[-1] % 128
    if kpad:
        p = jnp.pad(p, ((0, 0), (0, kpad)))
    return p.astype(jnp.bfloat16)


# -----------------------------------------------------------------------------
# Parameter init: weights stored directly in bf16 matmul layout, biases (S,1,N) f32.
# Also returns the raw torch-layout f32 weights for the plain-JAX parity check.
# -----------------------------------------------------------------------------
def init_multiple_cnn_params(key, obs_channels, obs_size, rep_dim, num_slots):
    s = obs_size
    s = (s - 8) // 4 + 1
    s = (s - 4) // 2 + 1
    s = (s - 3) // 1 + 1
    assert s == _H3, "NatureCNN config forces cnn_feat_size == 4 (i.e. obs_size == 64)"
    n_flat = _C3_OC * s * s

    k1 = _C1_K * _C1_K * obs_channels
    k1_pad = ((k1 + 127) // 128) * 128

    def conv_w(k, oc, ic, ksz):
        fan_in = ic * ksz * ksz
        return jax.random.normal(k, (oc, ic, ksz, ksz), jnp.float32) * (2.0 / fan_in) ** 0.5

    def conv_wmat(w, k_pad=None):
        # torch (OC, C, KH, KW) -> ((KH, KW, C), OC) matmul layout (matches patch cols)
        oc, c, kh, kw = w.shape
        m = jnp.transpose(w, (2, 3, 1, 0)).reshape(kh * kw * c, oc)
        if k_pad is not None and k_pad > m.shape[0]:
            m = jnp.pad(m, ((0, k_pad - m.shape[0]), (0, 0)))
        return m

    raw = []
    w1m, b1m, w2m, b2m, w3m, b3m, fwm, fbm = ([] for _ in range(8))
    for sk in jax.random.split(key, num_slots):
        k1w, k1b, k2w, k2b, k3w, k3b, kfw, kfb = jax.random.split(sk, 8)
        w1 = conv_w(k1w, _C1_OC, obs_channels, _C1_K)
        w2 = conv_w(k2w, _C2_OC, _C1_OC, _C2_K)
        w3 = conv_w(k3w, _C3_OC, _C2_OC, _C3_K)
        b1 = 0.1 * jax.random.normal(k1b, (_C1_OC,), jnp.float32)
        b2 = 0.1 * jax.random.normal(k2b, (_C2_OC,), jnp.float32)
        b3 = 0.1 * jax.random.normal(k3b, (_C3_OC,), jnp.float32)
        fw = jax.random.normal(kfw, (rep_dim, n_flat), jnp.float32) * (2.0 / n_flat) ** 0.5
        fb = 0.1 * jax.random.normal(kfb, (rep_dim,), jnp.float32)
        raw.append(dict(w1=w1, b1=b1, w2=w2, b2=b2, w3=w3, b3=b3, fw=fw, fb=fb))

        w1m.append(conv_wmat(w1, k1_pad))
        w2m.append(conv_wmat(w2))
        w3m.append(conv_wmat(w3))
        # FC rows permuted once from torch (c,h,w)-flatten order to our (h,w,c) order.
        fwm.append(fw.reshape(rep_dim, _C3_OC, s, s).transpose(2, 3, 1, 0).reshape(n_flat, rep_dim))
        b1m.append(b1); b2m.append(b2); b3m.append(b3); fbm.append(fb)

    params = dict(
        w1=jnp.stack(w1m).astype(jnp.bfloat16),                 # (S, K1pad, 32)
        b1=jnp.stack(b1m).reshape(num_slots, 1, _C1_OC),        # (S, 1, 32) f32
        w2=jnp.stack(w2m).astype(jnp.bfloat16),                 # (S, 512, 64)
        b2=jnp.stack(b2m).reshape(num_slots, 1, _C2_OC),
        w3=jnp.stack(w3m).astype(jnp.bfloat16),                 # (S, 576, 64)
        b3=jnp.stack(b3m).reshape(num_slots, 1, _C3_OC),
        fw=jnp.stack(fwm).astype(jnp.bfloat16),                 # (S, 1024, rep)
        fb=jnp.stack(fbm).reshape(num_slots, 1, rep_dim),
    )
    return params, raw


# -----------------------------------------------------------------------------
# MultipleCNN forward: ONE pallas_call for the whole network; output (B, S, rep).
# -----------------------------------------------------------------------------
@jax.jit
def multiple_cnn_forward(params, obs):
    """obs: (B, C, H, W) float32 NCHW (torch convention) -> (B, num_slots, rep_dim)."""
    B = obs.shape[0]
    S = params["w1"].shape[0]
    rep = params["fw"].shape[-1]

    p1 = _conv1_patches(obs)                                     # shared by all slots
    m1, k1p = p1.shape

    out = pl.pallas_call(
        functools.partial(_fused_nature_cnn_kernel, batch=B),
        out_shape=jax.ShapeDtypeStruct((S, B, rep), jnp.float32),
        grid_spec=pltpu.PrefetchScalarGridSpec(
            num_scalar_prefetch=0,
            grid=(S,),
            in_specs=[
                pl.BlockSpec((m1, k1p), lambda s: (0, 0)),                       # conv1 patches (shared)
                pl.BlockSpec((1, k1p, _C1_OC), lambda s: (s, 0, 0)),             # w1
                pl.BlockSpec((1, 1, _C1_OC), lambda s: (s, 0, 0)),               # b1
                pl.BlockSpec((1, _C2_K * _C2_K * _C1_OC, _C2_OC), lambda s: (s, 0, 0)),  # w2
                pl.BlockSpec((1, 1, _C2_OC), lambda s: (s, 0, 0)),               # b2
                pl.BlockSpec((1, _C3_K * _C3_K * _C2_OC, _C3_OC), lambda s: (s, 0, 0)),  # w3
                pl.BlockSpec((1, 1, _C3_OC), lambda s: (s, 0, 0)),               # b3
                pl.BlockSpec((1, _C3_OC * _H3 * _H3, rep), lambda s: (s, 0, 0)),  # fc w
                pl.BlockSpec((1, 1, rep), lambda s: (s, 0, 0)),                  # fc b
            ],
            out_specs=pl.BlockSpec((1, B, rep), lambda s: (s, 0, 0)),
        ),
        compiler_params=pltpu.CompilerParams(
            dimension_semantics=("parallel",),                   # one slot per TC on v7x
        ),
    )(p1, params["w1"], params["b1"], params["w2"], params["b2"],
      params["w3"], params["b3"], params["fw"], params["fb"])

    return jnp.transpose(out, (1, 0, 2))                         # (B, num_slots, rep_dim)


# -----------------------------------------------------------------------------
# Plain-JAX reference (f32, highest precision) used only for the parity check.
# -----------------------------------------------------------------------------
def _reference_forward(raw_params, obs):
    hp = lax.Precision.HIGHEST
    reps = []
    for p in raw_params:
        x = obs
        for w, b, stride in ((p["w1"], p["b1"], _C1_S),
                             (p["w2"], p["b2"], _C2_S),
                             (p["w3"], p["b3"], _C3_S)):
            x = lax.conv_general_dilated(
                x, w, window_strides=(stride, stride), padding="VALID",
                dimension_numbers=("NCHW", "OIHW", "NCHW"), precision=hp)
            x = jnp.maximum(x + b.reshape(1, -1, 1, 1), 0.0)
        flat = x.reshape(x.shape[0], -1)                         # torch NCHW flatten
        y = jnp.maximum(jnp.matmul(flat, p["fw"].T, precision=hp) + p["fb"], 0.0)
        reps.append(y)
    return jnp.stack(reps, axis=1)


if __name__ == "__main__":
    # Config implied by the module: obs_size=64 (cnn_feat_size=4), obs_channels=3,
    # rep_dim=32, num_modules (slots)=2, batch=2.
    B, C, H, W = 2, 3, 64, 64
    rep_dim, num_slots = 32, 2

    root = jax.random.PRNGKey(0)
    obs_key, param_key = jax.random.split(root)
    obs = jax.random.normal(obs_key, (B, C, H, W), jnp.float32)
    params, raw_params = init_multiple_cnn_params(param_key, C, H, rep_dim, num_slots)

    reps = jax.block_until_ready(multiple_cnn_forward(params, obs))
    assert reps.shape == (B, num_slots, rep_dim), reps.shape

    ref = jax.block_until_ready(_reference_forward(raw_params, obs))
    max_err = float(jnp.max(jnp.abs(reps - ref)))
    # bf16 MXU inputs with f32 accumulation: allow small drift vs the f32 reference.
    assert max_err < 0.2, f"parity check failed: max_abs_err={max_err}"

    print("KERNEL_OK")
</pallas_src>

<mosaic_0001>
module attributes {stable_mosaic.version = 11 : i64} {
  func.func @_fused_nature_cnn_kernel(%arg0: i32, %arg1: memref<512x256xbf16, #tpu.memory_space<vmem>>, %arg2: memref<1x256x32xbf16, #tpu.memory_space<vmem>>, %arg3: memref<1x1x32xf32, #tpu.memory_space<vmem>>, %arg4: memref<1x512x64xbf16, #tpu.memory_space<vmem>>, %arg5: memref<1x1x64xf32, #tpu.memory_space<vmem>>, %arg6: memref<1x576x64xbf16, #tpu.memory_space<vmem>>, %arg7: memref<1x1x64xf32, #tpu.memory_space<vmem>>, %arg8: memref<1x1024x32xbf16, #tpu.memory_space<vmem>>, %arg9: memref<1x1x32xf32, #tpu.memory_space<vmem>>, %arg10: memref<1x2x32xf32, #tpu.memory_space<vmem>>) attributes {dimension_semantics = [#tpu.dimension_semantics<parallel>], iteration_bounds = array<i64: 2>, scalar_prefetch = 0 : i64, scratch_operands = 0 : i64, tpu.core_type = #tpu.core_type<tc>, window_params = [{pipeline_mode = #tpu.pipeline_mode<synchronous>, transform_indices = @transform_0, window_bounds = array<i64: 512, 256>}, {transform_indices = @transform_1, window_bounds = array<i64: 1, 256, 32>}, {transform_indices = @transform_2, window_bounds = array<i64: 1, 1, 32>}, {transform_indices = @transform_3, window_bounds = array<i64: 1, 512, 64>}, {transform_indices = @transform_4, window_bounds = array<i64: 1, 1, 64>}, {transform_indices = @transform_5, window_bounds = array<i64: 1, 576, 64>}, {transform_indices = @transform_6, window_bounds = array<i64: 1, 1, 64>}, {transform_indices = @transform_7, window_bounds = array<i64: 1, 1024, 32>}, {transform_indices = @transform_8, window_bounds = array<i64: 1, 1, 32>}, {transform_indices = @transform_9, window_bounds = array<i64: 1, 2, 32>}]} {
    %c0 = arith.constant 0 : index
    %c0_0 = arith.constant 0 : index
    %0 = vector.load %arg1[%c0, %c0_0] : memref<512x256xbf16, #tpu.memory_space<vmem>>, vector<512x256xbf16>
    %c0_1 = arith.constant 0 : index
    %c0_2 = arith.constant 0 : index
    %c0_3 = arith.constant 0 : index
    %1 = vector.load %arg2[%c0_1, %c0_2, %c0_3] : memref<1x256x32xbf16, #tpu.memory_space<vmem>>, vector<1x256x32xbf16>
    %2 = vector.shape_cast %1 : vector<1x256x32xbf16> to vector<256x32xbf16>
    %cst = arith.constant dense<0.000000e+00> : vector<512x32xf32>
    %3 = tpu.matmul %0, %2, %cst {dimension_numbers = #tpu.dot_dimension_numbers<[1], [0], [0], [1], [0, 0, 1, 1], [], []>} : vector<512x256xbf16>, vector<256x32xbf16>, vector<512x32xf32> -> vector<512x32xf32>
    %c0_4 = arith.constant 0 : index
    %c0_5 = arith.constant 0 : index
    %c0_6 = arith.constant 0 : index
    %4 = vector.load %arg3[%c0_4, %c0_5, %c0_6] : memref<1x1x32xf32, #tpu.memory_space<vmem>>, vector<1x1x32xf32>
    %5 = vector.shape_cast %4 : vector<1x1x32xf32> to vector<1x32xf32>
    %6 = vector.broadcast %5 : vector<1x32xf32> to vector<512x32xf32>
    %7 = arith.addf %3, %6 : vector<512x32xf32>
    %cst_7 = arith.constant 0.000000e+00 : f32
    %8 = vector.broadcast %cst_7 : f32 to vector<512x32xf32>
    %9 = arith.maximumf %7, %8 : vector<512x32xf32>
    %10 = vector.shape_cast %9 : vector<512x32xf32> to vector<2x2x2x8x8x32xf32>
    %11 = vector.extract_strided_slice %10 {offsets = [0, 0, 0, 0, 0, 0], sizes = [1, 1, 2, 6, 6, 32], strides = [1, 1, 1, 1, 1, 1]} : vector<2x2x2x8x8x32xf32> to vector<1x1x2x6x6x32xf32>
    %12 = vector.shape_cast %11 : vector<1x1x2x6x6x32xf32> to vector<2x6x6x32xf32>
    %13 = vector.extract_strided_slice %10 {offsets = [0, 1, 0, 0, 0, 0], sizes = [1, 1, 2, 6, 6, 32], strides = [1, 1, 1, 1, 1, 1]} : vector<2x2x2x8x8x32xf32> to vector<1x1x2x6x6x32xf32>
    %14 = vector.shape_cast %13 : vector<1x1x2x6x6x32xf32> to vector<2x6x6x32xf32>
    %15 = vector.extract_strided_slice %10 {offsets = [0, 0, 0, 0, 1, 0], sizes = [1, 1, 2, 6, 6, 32], strides = [1, 1, 1, 1, 1, 1]} : vector<2x2x2x8x8x32xf32> to vector<1x1x2x6x6x32xf32>
    %16 = vector.shape_cast %15 : vector<1x1x2x6x6x32xf32> to vector<2x6x6x32xf32>
    %17 = vector.extract_strided_slice %10 {offsets = [0, 1, 0, 0, 1, 0], sizes = [1, 1, 2, 6, 6, 32], strides = [1, 1, 1, 1, 1, 1]} : vector<2x2x2x8x8x32xf32> to vector<1x1x2x6x6x32xf32>
    %18 = vector.shape_cast %17 : vector<1x1x2x6x6x32xf32> to vector<2x6x6x32xf32>
    %19 = vector.extract_strided_slice %10 {offsets = [1, 0, 0, 0, 0, 0], sizes = [1, 1, 2, 6, 6, 32], strides = [1, 1, 1, 1, 1, 1]} : vector<2x2x2x8x8x32xf32> to vector<1x1x2x6x6x32xf32>
    %20 = vector.shape_cast %19 : vector<1x1x2x6x6x32xf32> to vector<2x6x6x32xf32>
    %21 = vector.extract_strided_slice %10 {offsets = [1, 1, 0, 0, 0, 0], sizes = [1, 1, 2, 6, 6, 32], strides = [1, 1, 1, 1, 1, 1]} : vector<2x2x2x8x8x32xf32> to vector<1x1x2x6x6x32xf32>
    %22 = vector.shape_cast %21 : vector<1x1x2x6x6x32xf32> to vector<2x6x6x32xf32>
    %23 = vector.extract_strided_slice %10 {offsets = [1, 0, 0, 0, 1, 0], sizes = [1, 1, 2, 6, 6, 32], strides = [1, 1, 1, 1, 1, 1]} : vector<2x2x2x8x8x32xf32> to vector<1x1x2x6x6x32xf32>
    %24 = vector.shape_cast %23 : vector<1x1x2x6x6x32xf32> to vector<2x6x6x32xf32>
    %25 = vector.extract_strided_slice %10 {offsets = [1, 1, 0, 0, 1, 0], sizes = [1, 1, 2, 6, 6, 32], strides = [1, 1, 1, 1, 1, 1]} : vector<2x2x2x8x8x32xf32> to vector<1x1x2x6x6x32xf32>
    %26 = vector.shape_cast %25 : vector<1x1x2x6x6x32xf32> to vector<2x6x6x32xf32>
    %27 = vector.extract_strided_slice %10 {offsets = [0, 0, 0, 1, 0, 0], sizes = [1, 1, 2, 6, 6, 32], strides = [1, 1, 1, 1, 1, 1]} : vector<2x2x2x8x8x32xf32> to vector<1x1x2x6x6x32xf32>
    %28 = vector.shape_cast %27 : vector<1x1x2x6x6x32xf32> to vector<2x6x6x32xf32>
    %29 = vector.extract_strided_slice %10 {offsets = [0, 1, 0, 1, 0, 0], sizes = [1, 1, 2, 6, 6, 32], strides = [1, 1, 1, 1, 1, 1]} : vector<2x2x2x8x8x32xf32> to vector<1x1x2x6x6x32xf32>
    %30 = vector.shape_cast %29 : vector<1x1x2x6x6x32xf32> to vector<2x6x6x32xf32>
    %31 = vector.extract_strided_slice %10 {offsets = [0, 0, 0, 1, 1, 0], sizes = [1, 1, 2, 6, 6, 32], strides = [1, 1, 1, 1, 1, 1]} : vector<2x2x2x8x8x32xf32> to vector<1x1x2x6x6x32xf32>
    %32 = vector.shape_cast %31 : vector<1x1x2x6x6x32xf32> to vector<2x6x6x32xf32>
    %33 = vector.extract_strided_slice %10 {offsets = [0, 1, 0, 1, 1, 0], sizes = [1, 1, 2, 6, 6, 32], strides = [1, 1, 1, 1, 1, 1]} : vector<2x2x2x8x8x32xf32> to vector<1x1x2x6x6x32xf32>
    %34 = vector.shape_cast %33 : vector<1x1x2x6x6x32xf32> to vector<2x6x6x32xf32>
    %35 = vector.extract_strided_slice %10 {offsets = [1, 0, 0, 1, 0, 0], sizes = [1, 1, 2, 6, 6, 32], strides = [1, 1, 1, 1, 1, 1]} : vector<2x2x2x8x8x32xf32> to vector<1x1x2x6x6x32xf32>
    %36 = vector.shape_cast %35 : vector<1x1x2x6x6x32xf32> to vector<2x6x6x32xf32>
    %37 = vector.extract_strided_slice %10 {offsets = [1, 1, 0, 1, 0, 0], sizes = [1, 1, 2, 6, 6, 32], strides = [1, 1, 1, 1, 1, 1]} : vector<2x2x2x8x8x32xf32> to vector<1x1x2x6x6x32xf32>
    %38 = vector.shape_cast %37 : vector<1x1x2x6x6x32xf32> to vector<2x6x6x32xf32>
    %39 = vector.extract_strided_slice %10 {offsets = [1, 0, 0, 1, 1, 0], sizes = [1, 1, 2, 6, 6, 32], strides = [1, 1, 1, 1, 1, 1]} : vector<2x2x2x8x8x32xf32> to vector<1x1x2x6x6x32xf32>
    %40 = vector.shape_cast %39 : vector<1x1x2x6x6x32xf32> to vector<2x6x6x32xf32>
    %41 = vector.extract_strided_slice %10 {offsets = [1, 1, 0, 1, 1, 0], sizes = [1, 1, 2, 6, 6, 32], strides = [1, 1, 1, 1, 1, 1]} : vector<2x2x2x8x8x32xf32> to vector<1x1x2x6x6x32xf32>
    %42 = vector.shape_cast %41 : vector<1x1x2x6x6x32xf32> to vector<2x6x6x32xf32>
    %43 = tpu.concatenate %12, %14, %16, %18, %20, %22, %24, %26, %28, %30, %32, %34, %36, %38, %40, %42 in 3 : vector<2x6x6x32xf32>, vector<2x6x6x32xf32>, vector<2x6x6x32xf32>, vector<2x6x6x32xf32>, vector<2x6x6x32xf32>, vector<2x6x6x32xf32>, vector<2x6x6x32xf32>, vector<2x6x6x32xf32>, vector<2x6x6x32xf32>, vector<2x6x6x32xf32>, vector<2x6x6x32xf32>, vector<2x6x6x32xf32>, vector<2x6x6x32xf32>, vector<2x6x6x32xf32>, vector<2x6x6x32xf32>, vector<2x6x6x32xf32> -> vector<2x6x6x512xf32>
    %44 = vector.shape_cast %43 : vector<2x6x6x512xf32> to vector<72x512xf32>
    %45 = arith.truncf %44 : vector<72x512xf32> to vector<72x512xbf16>
    %c0_8 = arith.constant 0 : index
    %c0_9 = arith.constant 0 : index
    %c0_10 = arith.constant 0 : index
    %46 = vector.load %arg4[%c0_8, %c0_9, %c0_10] : memref<1x512x64xbf16, #tpu.memory_space<vmem>>, vector<1x512x64xbf16>
    %47 = vector.shape_cast %46 : vector<1x512x64xbf16> to vector<512x64xbf16>
    %cst_11 = arith.constant dense<0.000000e+00> : vector<72x64xf32>
    %48 = tpu.matmul %45, %47, %cst_11 {dimension_numbers = #tpu.dot_dimension_numbers<[1], [0], [0], [1], [0, 0, 1, 1], [], []>} : vector<72x512xbf16>, vector<512x64xbf16>, vector<72x64xf32> -> vector<72x64xf32>
    %c0_12 = arith.constant 0 : index
    %c0_13 = arith.constant 0 : index
    %c0_14 = arith.constant 0 : index
    %49 = vector.load %arg5[%c0_12, %c0_13, %c0_14] : memref<1x1x64xf32, #tpu.memory_space<vmem>>, vector<1x1x64xf32>
    %50 = vector.shape_cast %49 : vector<1x1x64xf32> to vector<1x64xf32>
    %51 = vector.broadcast %50 : vector<1x64xf32> to vector<72x64xf32>
    %52 = arith.addf %48, %51 : vector<72x64xf32>
    %cst_15 = arith.constant 0.000000e+00 : f32
    %53 = vector.broadcast %cst_15 : f32 to vector<72x64xf32>
    %54 = arith.maximumf %52, %53 : vector<72x64xf32>
    %55 = vector.shape_cast %54 : vector<72x64xf32> to vector<2x6x6x64xf32>
    %56 = vector.extract_strided_slice %55 {offsets = [0, 0, 0, 0], sizes = [2, 4, 4, 64], strides = [1, 1, 1, 1]} : vector<2x6x6x64xf32> to vector<2x4x4x64xf32>
    %57 = vector.extract_strided_slice %55 {offsets = [0, 0, 1, 0], sizes = [2, 4, 4, 64], strides = [1, 1, 1, 1]} : vector<2x6x6x64xf32> to vector<2x4x4x64xf32>
    %58 = vector.extract_strided_slice %55 {offsets = [0, 0, 2, 0], sizes = [2, 4, 4, 64], strides = [1, 1, 1, 1]} : vector<2x6x6x64xf32> to vector<2x4x4x64xf32>
    %59 = vector.extract_strided_slice %55 {offsets = [0, 1, 0, 0], sizes = [2, 4, 4, 64], strides = [1, 1, 1, 1]} : vector<2x6x6x64xf32> to vector<2x4x4x64xf32>
    %60 = vector.extract_strided_slice %55 {offsets = [0, 1, 1, 0], sizes = [2, 4, 4, 64], strides = [1, 1, 1, 1]} : vector<2x6x6x64xf32> to vector<2x4x4x64xf32>
    %61 = vector.extract_strided_slice %55 {offsets = [0, 1, 2, 0], sizes = [2, 4, 4, 64], strides = [1, 1, 1, 1]} : vector<2x6x6x64xf32> to vector<2x4x4x64xf32>
    %62 = vector.extract_strided_slice %55 {offsets = [0, 2, 0, 0], sizes = [2, 4, 4, 64], strides = [1, 1, 1, 1]} : vector<2x6x6x64xf32> to vector<2x4x4x64xf32>
    %63 = vector.extract_strided_slice %55 {offsets = [0, 2, 1, 0], sizes = [2, 4, 4, 64], strides = [1, 1, 1, 1]} : vector<2x6x6x64xf32> to vector<2x4x4x64xf32>
    %64 = vector.extract_strided_slice %55 {offsets = [0, 2, 2, 0], sizes = [2, 4, 4, 64], strides = [1, 1, 1, 1]} : vector<2x6x6x64xf32> to vector<2x4x4x64xf32>
    %65 = tpu.concatenate %56, %57, %58, %59, %60, %61, %62, %63, %64 in 3 : vector<2x4x4x64xf32>, vector<2x4x4x64xf32>, vector<2x4x4x64xf32>, vector<2x4x4x64xf32>, vector<2x4x4x64xf32>, vector<2x4x4x64xf32>, vector<2x4x4x64xf32>, vector<2x4x4x64xf32>, vector<2x4x4x64xf32> -> vector<2x4x4x576xf32>
    %66 = vector.shape_cast %65 : vector<2x4x4x576xf32> to vector<32x576xf32>
    %67 = arith.truncf %66 : vector<32x576xf32> to vector<32x576xbf16>
    %c0_16 = arith.constant 0 : index
    %c0_17 = arith.constant 0 : index
    %c0_18 = arith.constant 0 : index
    %68 = vector.load %arg6[%c0_16, %c0_17, %c0_18] : memref<1x576x64xbf16, #tpu.memory_space<vmem>>, vector<1x576x64xbf16>
    %69 = vector.shape_cast %68 : vector<1x576x64xbf16> to vector<576x64xbf16>
    %cst_19 = arith.constant dense<0.000000e+00> : vector<32x64xf32>
    %70 = tpu.matmul %67, %69, %cst_19 {dimension_numbers = #tpu.dot_dimension_numbers<[1], [0], [0], [1], [0, 0, 1, 1], [], []>} : vector<32x576xbf16>, vector<576x64xbf16>, vector<32x64xf32> -> vector<32x64xf32>
    %c0_20 = arith.constant 0 : index
    %c0_21 = arith.constant 0 : index
    %c0_22 = arith.constant 0 : index
    %71 = vector.load %arg7[%c0_20, %c0_21, %c0_22] : memref<1x1x64xf32, #tpu.memory_space<vmem>>, vector<1x1x64xf32>
    %72 = vector.shape_cast %71 : vector<1x1x64xf32> to vector<1x64xf32>
    %73 = vector.broadcast %72 : vector<1x64xf32> to vector<32x64xf32>
    %74 = arith.addf %70, %73 : vector<32x64xf32>
    %cst_23 = arith.constant 0.000000e+00 : f32
    %75 = vector.broadcast %cst_23 : f32 to vector<32x64xf32>
    %76 = arith.maximumf %74, %75 : vector<32x64xf32>
    %77 = vector.shape_cast %76 : vector<32x64xf32> to vector<2x4x4x64xf32>
    %78 = vector.extract_strided_slice %77 {offsets = [0, 0, 0, 0], sizes = [2, 1, 1, 64], strides = [1, 1, 1, 1]} : vector<2x4x4x64xf32> to vector<2x1x1x64xf32>
    %79 = vector.shape_cast %78 : vector<2x1x1x64xf32> to vector<2x64xf32>
    %80 = vector.extract_strided_slice %77 {offsets = [0, 0, 1, 0], sizes = [2, 1, 1, 64], strides = [1, 1, 1, 1]} : vector<2x4x4x64xf32> to vector<2x1x1x64xf32>
    %81 = vector.shape_cast %80 : vector<2x1x1x64xf32> to vector<2x64xf32>
    %82 = vector.extract_strided_slice %77 {offsets = [0, 0, 2, 0], sizes = [2, 1, 1, 64], strides = [1, 1, 1, 1]} : vector<2x4x4x64xf32> to vector<2x1x1x64xf32>
    %83 = vector.shape_cast %82 : vector<2x1x1x64xf32> to vector<2x64xf32>
    %84 = vector.extract_strided_slice %77 {offsets = [0, 0, 3, 0], sizes = [2, 1, 1, 64], strides = [1, 1, 1, 1]} : vector<2x4x4x64xf32> to vector<2x1x1x64xf32>
    %85 = vector.shape_cast %84 : vector<2x1x1x64xf32> to vector<2x64xf32>
    %86 = vector.extract_strided_slice %77 {offsets = [0, 1, 0, 0], sizes = [2, 1, 1, 64], strides = [1, 1, 1, 1]} : vector<2x4x4x64xf32> to vector<2x1x1x64xf32>
    %87 = vector.shape_cast %86 : vector<2x1x1x64xf32> to vector<2x64xf32>
    %88 = vector.extract_strided_slice %77 {offsets = [0, 1, 1, 0], sizes = [2, 1, 1, 64], strides = [1, 1, 1, 1]} : vector<2x4x4x64xf32> to vector<2x1x1x64xf32>
    %89 = vector.shape_cast %88 : vector<2x1x1x64xf32> to vector<2x64xf32>
    %90 = vector.extract_strided_slice %77 {offsets = [0, 1, 2, 0], sizes = [2, 1, 1, 64], strides = [1, 1, 1, 1]} : vector<2x4x4x64xf32> to vector<2x1x1x64xf32>
    %91 = vector.shape_cast %90 : vector<2x1x1x64xf32> to vector<2x64xf32>
    %92 = vector.extract_strided_slice %77 {offsets = [0, 1, 3, 0], sizes = [2, 1, 1, 64], strides = [1, 1, 1, 1]} : vector<2x4x4x64xf32> to vector<2x1x1x64xf32>
    %93 = vector.shape_cast %92 : vector<2x1x1x64xf32> to vector<2x64xf32>
    %94 = vector.extract_strided_slice %77 {offsets = [0, 2, 0, 0], sizes = [2, 1, 1, 64], strides = [1, 1, 1, 1]} : vector<2x4x4x64xf32> to vector<2x1x1x64xf32>
    %95 = vector.shape_cast %94 : vector<2x1x1x64xf32> to vector<2x64xf32>
    %96 = vector.extract_strided_slice %77 {offsets = [0, 2, 1, 0], sizes = [2, 1, 1, 64], strides = [1, 1, 1, 1]} : vector<2x4x4x64xf32> to vector<2x1x1x64xf32>
    %97 = vector.shape_cast %96 : vector<2x1x1x64xf32> to vector<2x64xf32>
    %98 = vector.extract_strided_slice %77 {offsets = [0, 2, 2, 0], sizes = [2, 1, 1, 64], strides = [1, 1, 1, 1]} : vector<2x4x4x64xf32> to vector<2x1x1x64xf32>
    %99 = vector.shape_cast %98 : vector<2x1x1x64xf32> to vector<2x64xf32>
    %100 = vector.extract_strided_slice %77 {offsets = [0, 2, 3, 0], sizes = [2, 1, 1, 64], strides = [1, 1, 1, 1]} : vector<2x4x4x64xf32> to vector<2x1x1x64xf32>
    %101 = vector.shape_cast %100 : vector<2x1x1x64xf32> to vector<2x64xf32>
    %102 = vector.extract_strided_slice %77 {offsets = [0, 3, 0, 0], sizes = [2, 1, 1, 64], strides = [1, 1, 1, 1]} : vector<2x4x4x64xf32> to vector<2x1x1x64xf32>
    %103 = vector.shape_cast %102 : vector<2x1x1x64xf32> to vector<2x64xf32>
    %104 = vector.extract_strided_slice %77 {offsets = [0, 3, 1, 0], sizes = [2, 1, 1, 64], strides = [1, 1, 1, 1]} : vector<2x4x4x64xf32> to vector<2x1x1x64xf32>
    %105 = vector.shape_cast %104 : vector<2x1x1x64xf32> to vector<2x64xf32>
    %106 = vector.extract_strided_slice %77 {offsets = [0, 3, 2, 0], sizes = [2, 1, 1, 64], strides = [1, 1, 1, 1]} : vector<2x4x4x64xf32> to vector<2x1x1x64xf32>
    %107 = vector.shape_cast %106 : vector<2x1x1x64xf32> to vector<2x64xf32>
    %108 = vector.extract_strided_slice %77 {offsets = [0, 3, 3, 0], sizes = [2, 1, 1, 64], strides = [1, 1, 1, 1]} : vector<2x4x4x64xf32> to vector<2x1x1x64xf32>
    %109 = vector.shape_cast %108 : vector<2x1x1x64xf32> to vector<2x64xf32>
    %110 = tpu.concatenate %79, %81, %83, %85, %87, %89, %91, %93, %95, %97, %99, %101, %103, %105, %107, %109 in 1 : vector<2x64xf32>, vector<2x64xf32>, vector<2x64xf32>, vector<2x64xf32>, vector<2x64xf32>, vector<2x64xf32>, vector<2x64xf32>, vector<2x64xf32>, vector<2x64xf32>, vector<2x64xf32>, vector<2x64xf32>, vector<2x64xf32>, vector<2x64xf32>, vector<2x64xf32>, vector<2x64xf32>, vector<2x64xf32> -> vector<2x1024xf32>
    %111 = arith.truncf %110 : vector<2x1024xf32> to vector<2x1024xbf16>
    %c0_24 = arith.constant 0 : index
    %c0_25 = arith.constant 0 : index
    %c0_26 = arith.constant 0 : index
    %112 = vector.load %arg8[%c0_24, %c0_25, %c0_26] : memref<1x1024x32xbf16, #tpu.memory_space<vmem>>, vector<1x1024x32xbf16>
    %113 = vector.shape_cast %112 : vector<1x1024x32xbf16> to vector<1024x32xbf16>
    %cst_27 = arith.constant dense<0.000000e+00> : vector<2x32xf32>
    %114 = tpu.matmul %111, %113, %cst_27 {dimension_numbers = #tpu.dot_dimension_numbers<[1], [0], [0], [1], [0, 0, 1, 1], [], []>} : vector<2x1024xbf16>, vector<1024x32xbf16>, vector<2x32xf32> -> vector<2x32xf32>
    %c0_28 = arith.constant 0 : index
    %c0_29 = arith.constant 0 : index
    %c0_30 = arith.constant 0 : index
    %115 = vector.load %arg9[%c0_28, %c0_29, %c0_30] : memref<1x1x32xf32, #tpu.memory_space<vmem>>, vector<1x1x32xf32>
    %116 = vector.shape_cast %115 : vector<1x1x32xf32> to vector<1x32xf32>
    %117 = vector.broadcast %116 : vector<1x32xf32> to vector<2x32xf32>
    %118 = arith.addf %114, %117 : vector<2x32xf32>
    %cst_31 = arith.constant 0.000000e+00 : f32
    %119 = vector.broadcast %cst_31 : f32 to vector<2x32xf32>
    %120 = arith.maximumf %118, %119 : vector<2x32xf32>
    %c0_32 = arith.constant 0 : index
    %c0_33 = arith.constant 0 : index
    %c0_34 = arith.constant 0 : index
    %121 = vector.load %arg10[%c0_32, %c0_33, %c0_34] : memref<1x2x32xf32, #tpu.memory_space<vmem>>, vector<1x2x32xf32>
    %122 = vector.shape_cast %121 : vector<1x2x32xf32> to vector<2x32xf32>
    %123 = vector.shape_cast %120 : vector<2x32xf32> to vector<1x2x32xf32>
    tpu.vector_store %arg10[%c0_32, %c0_33, %c0_34], %123 {strides = array<i32>} : memref<1x2x32xf32, #tpu.memory_space<vmem>>, vector<1x2x32xf32>,
    return
  }
  func.func @transform_0(%arg0: i32) -> (i32, i32) {
    %c0_i32 = arith.constant 0 : i32
    %c0_i32_0 = arith.constant 0 : i32
    %c0_i32_1 = arith.constant 0 : i32
    return %c0_i32, %c0_i32_0 : i32, i32
  }
  func.func @transform_1(%arg0: i32) -> (i32, i32, i32) {
    %c0_i32 = arith.constant 0 : i32
    %c0_i32_0 = arith.constant 0 : i32
    %c0_i32_1 = arith.constant 0 : i32
    return %arg0, %c0_i32, %c0_i32_0 : i32, i32, i32
  }
  func.func @transform_2(%arg0: i32) -> (i32, i32, i32) {
    %c0_i32 = arith.constant 0 : i32
    %c0_i32_0 = arith.constant 0 : i32
    %c0_i32_1 = arith.constant 0 : i32
    return %arg0, %c0_i32, %c0_i32_0 : i32, i32, i32
  }
  func.func @transform_3(%arg0: i32) -> (i32, i32, i32) {
    %c0_i32 = arith.constant 0 : i32
    %c0_i32_0 = arith.constant 0 : i32
    %c0_i32_1 = arith.constant 0 : i32
    return %arg0, %c0_i32, %c0_i32_0 : i32, i32, i32
  }
  func.func @transform_4(%arg0: i32) -> (i32, i32, i32) {
    %c0_i32 = arith.constant 0 : i32
    %c0_i32_0 = arith.constant 0 : i32
    %c0_i32_1 = arith.constant 0 : i32
    return %arg0, %c0_i32, %c0_i32_0 : i32, i32, i32
  }
  func.func @transform_5(%arg0: i32) -> (i32, i32, i32) {
    %c0_i32 = arith.constant 0 : i32
    %c0_i32_0 = arith.constant 0 : i32
    %c0_i32_1 = arith.constant 0 : i32
    return %arg0, %c0_i32, %c0_i32_0 : i32, i32, i32
  }
  func.func @transform_6(%arg0: i32) -> (i32, i32, i32) {
    %c0_i32 = arith.constant 0 : i32
    %c0_i32_0 = arith.constant 0 : i32
    %c0_i32_1 = arith.constant 0 : i32
    return %arg0, %c0_i32, %c0_i32_0 : i32, i32, i32
  }
  func.func @transform_7(%arg0: i32) -> (i32, i32, i32) {
    %c0_i32 = arith.constant 0 : i32
    %c0_i32_0 = arith.constant 0 : i32
    %c0_i32_1 = arith.constant 0 : i32
    return %arg0, %c0_i32, %c0_i32_0 : i32, i32, i32
  }
  func.func @transform_8(%arg0: i32) -> (i32, i32, i32) {
    %c0_i32 = arith.constant 0 : i32
    %c0_i32_0 = arith.constant 0 : i32
    %c0_i32_1 = arith.constant 0 : i32
    return %arg0, %c0_i32, %c0_i32_0 : i32, i32, i32
  }
  func.func @transform_9(%arg0: i32) -> (i32, i32, i32) {
    %c0_i32 = arith.constant 0 : i32
    %c0_i32_0 = arith.constant 0 : i32
    %c0_i32_1 = arith.constant 0 : i32
    return %arg0, %c0_i32, %c0_i32_0 : i32, i32, i32
  }
}

</mosaic_0001>

<llo_original>
// kernel: multiple_cnn_forward.1
$region0: #{multiple_cnn_forward.1}
  #allocation0 [shape = 'u32[]', space=smem, size = 0x4, offset = 0x4, fixed_abs, tag = 'smem constant byte address 0x4 - core index']
  #allocation1 [shape = 'u32[144,128]{1,0:T(1,128)}', space=vmem, size = 0x12000, scoped, tag = 'internal scratch']
  %s0 = inlined_call_operand.vmem [shape: bf16[512,256], index: 0, kind: input, shape index: {}]
  %s1 = inlined_call_operand.vmem [shape: bf16[2,256,32], index: 1, kind: input, shape index: {}]
  %s2 = inlined_call_operand.vmem [shape: f32[2,1,32], index: 2, kind: input, shape index: {}]
  %s3 = inlined_call_operand.vmem [shape: bf16[2,512,64], index: 3, kind: input, shape index: {}]
  %s4 = inlined_call_operand.vmem [shape: f32[2,1,64], index: 4, kind: input, shape index: {}]
  %s5 = inlined_call_operand.vmem [shape: bf16[2,576,64], index: 5, kind: input, shape index: {}]
  %s6 = inlined_call_operand.vmem [shape: f32[2,1,64], index: 6, kind: input, shape index: {}]
  %s7 = inlined_call_operand.vmem [shape: bf16[2,1024,32], index: 7, kind: input, shape index: {}]
  %s8 = inlined_call_operand.vmem [shape: f32[2,1,32], index: 8, kind: input, shape index: {}]
  %s9 = inlined_call_operand.vmem [shape: f32[2,2,32], index: 9, kind: output, shape index: {}]
  %s10 = sld [smem:[#allocation0]]
  $region69: #{multiple_cnn_forward.1} parent=0
    _
  %s12 = ssub.s32 1, %s10
  %s13 = scalar_select 0, %s12, %s10
  loop: start=0, step=1, limit=4
  $region2: #{multiple_cnn_forward.1} parent=0 // loop_pre_header
    _
  $region3: #{multiple_cnn_forward.1} parent=0 // loop_header
    %s15 = sphi 0, %s19
    %p16 = scmp.ge.s32.totalorder %s15, 4
    %s23 = sphi 0, %s23
    %s25 = sphi 0, %s23
    %s26 = sphi 0, %s25
    %s40 = sphi 0, %s26
    %s46 = sphi 0, %s48
    %s49 = sphi 0, %s46
    %s50 = sphi 0, %s49
    %s66 = sphi 0, %s50
    %s72 = sphi 0, %s74
    %s75 = sphi 0, %s72
    %s76 = sphi 0, %s75
    %s92 = sphi 0, %s76
    %s98 = sphi 0, %s100
    %s101 = sphi 0, %s98
    %s102 = sphi 0, %s101
    %s118 = sphi 0, %s102
    %s124 = sphi 0, %s126
    %s127 = sphi 0, %s124
    %s128 = sphi 0, %s127
    %s144 = sphi 0, %s128
    %s150 = sphi 0, %s152
    %s153 = sphi 0, %s150
    %s154 = sphi 0, %s153
    %s170 = sphi 0, %s154
    %s176 = sphi 0, %s178
    %s179 = sphi 0, %s176
    %s180 = sphi 0, %s179
    %s196 = sphi 0, %s180
    %s202 = sphi 0, %s204
    %s205 = sphi 0, %s202
    %s206 = sphi 0, %s205
    %s222 = sphi 0, %s206
    %s228 = sphi 0, %s230
    %s231 = sphi 0, %s228
    %s232 = sphi 0, %s231
    %s248 = sphi 0, %s232
    %s254 = sphi 0, %s256
    %s257 = sphi 0, %s254
    %s258 = sphi 0, %s257
    %s274 = sphi 0, %s258
  $region4: #{multiple_cnn_forward.1} parent=0 // loop_header_branch
    %18 = sbr.rel (%p16) target = $region8
  $region5: #{multiple_cnn_forward.1} parent=0 // loop_body
    %s20 = ssub.s32 %s15, 1
    %s21 = ssub.s32 %s15, 2
    %s22 = sadd.s32 %s15, 1
    %s24 = sadd.s32 %s23, 1
    %p27 = scmp.eq.s32.totalorder %s15, 1
    %p28 = scmp.ne.s32.totalorder %s23, %s25
    %p29 = scmp.eq.s32.totalorder %s15, 0
    %p30 = por %p28, %p29
    %p31 = scmp.ne.s32.totalorder %s23, %s25
    %p32 = scmp.eq.s32.totalorder %s20, 1
    %p33 = por %p31, %p32
    %p34 = scmp.ne.s32.totalorder %s25, %s26
    %p35 = scmp.eq.s32.totalorder %s20, 0
    %p36 = por %p34, %p35
    %p37 = scmp.ne.s32.totalorder %s25, %s26
    %p38 = scmp.eq.s32.totalorder %s21, 1
    %p39 = por %p37, %p38
    %p41 = scmp.ne.s32.totalorder %s26, %s40
    %p42 = scmp.eq.s32.totalorder %s21, 0
    %p43 = por %p41, %p42
    %s44 = ssub.s32 %s15, %s22
    %p45 = scmp.eq.s32.totalorder %s44, 0
    %s47 = sadd.s32 %s46, 1
    %s48 = scalar_select %p45, %s46, %s47
    %p51 = pneg %p45
    %p52 = scmp.eq.s32.totalorder %s15, 1
    %p53 = por %p51, %p52
    %p54 = scmp.ne.s32.totalorder %s46, %s49
    %p55 = scmp.eq.s32.totalorder %s15, 0
    %p56 = por %p54, %p55
    %p57 = scmp.ne.s32.totalorder %s46, %s49
    %p58 = scmp.eq.s32.totalorder %s20, 1
    %p59 = por %p57, %p58
    %p60 = scmp.ne.s32.totalorder %s49, %s50
    %p61 = scmp.eq.s32.totalorder %s20, 0
    %p62 = por %p60, %p61
    %p63 = scmp.ne.s32.totalorder %s49, %s50
    %p64 = scmp.eq.s32.totalorder %s21, 1
    %p65 = por %p63, %p64
    %p67 = scmp.ne.s32.totalorder %s50, %s66
    %p68 = scmp.eq.s32.totalorder %s21, 0
    %p69 = por %p67, %p68
    %s70 = ssub.s32 %s15, %s22
    %p71 = scmp.eq.s32.totalorder %s70, 0
    %s73 = sadd.s32 %s72, 1
    %s74 = scalar_select %p71, %s72, %s73
    %p77 = pneg %p71
    %p78 = scmp.eq.s32.totalorder %s15, 1
    %p79 = por %p77, %p78
    %p80 = scmp.ne.s32.totalorder %s72, %s75
    %p81 = scmp.eq.s32.totalorder %s15, 0
    %p82 = por %p80, %p81
    %p83 = scmp.ne.s32.totalorder %s72, %s75
    %p84 = scmp.eq.s32.totalorder %s20, 1
    %p85 = por %p83, %p84
    %p86 = scmp.ne.s32.totalorder %s75, %s76
    %p87 = scmp.eq.s32.totalorder %s20, 0
    %p88 = por %p86, %p87
    %p89 = scmp.ne.s32.totalorder %s75, %s76
    %p90 = scmp.eq.s32.totalorder %s21, 1
    %p91 = por %p89, %p90
    %p93 = scmp.ne.s32.totalorder %s76, %s92
    %p94 = scmp.eq.s32.totalorder %s21, 0
    %p95 = por %p93, %p94
    %s96 = ssub.s32 %s15, %s22
    %p97 = scmp.eq.s32.totalorder %s96, 0
    %s99 = sadd.s32 %s98, 1
    %s100 = scalar_select %p97, %s98, %s99
    %p103 = pneg %p97
    %p104 = scmp.eq.s32.totalorder %s15, 1
    %p105 = por %p103, %p104
    %p106 = scmp.ne.s32.totalorder %s98, %s101
    %p107 = scmp.eq.s32.totalorder %s15, 0
    %p108 = por %p106, %p107
    %p109 = scmp.ne.s32.totalorder %s98, %s101
    %p110 = scmp.eq.s32.totalorder %s20, 1
    %p111 = por %p109, %p110
    %p112 = scmp.ne.s32.totalorder %s101, %s102
    %p113 = scmp.eq.s32.totalorder %s20, 0
    %p114 = por %p112, %p113
    %p115 = scmp.ne.s32.totalorder %s101, %s102
    %p116 = scmp.eq.s32.totalorder %s21, 1
    %p117 = por %p115, %p116
    %p119 = scmp.ne.s32.totalorder %s102, %s118
    %p120 = scmp.eq.s32.totalorder %s21, 0
    %p121 = por %p119, %p120
    %s122 = ssub.s32 %s15, %s22
    %p123 = scmp.eq.s32.totalorder %s122, 0
    %s125 = sadd.s32 %s124, 1
    %s126 = scalar_select %p123, %s124, %s125
    %p129 = pneg %p123
    %p130 = scmp.eq.s32.totalorder %s15, 1
    %p131 = por %p129, %p130
    %p132 = scmp.ne.s32.totalorder %s124, %s127
    %p133 = scmp.eq.s32.totalorder %s15, 0
    %p134 = por %p132, %p133
    %p135 = scmp.ne.s32.totalorder %s124, %s127
    %p136 = scmp.eq.s32.totalorder %s20, 1
    %p137 = por %p135, %p136
    %p138 = scmp.ne.s32.totalorder %s127, %s128
    %p139 = scmp.eq.s32.totalorder %s20, 0
    %p140 = por %p138, %p139
    %p141 = scmp.ne.s32.totalorder %s127, %s128
    %p142 = scmp.eq.s32.totalorder %s21, 1
    %p143 = por %p141, %p142
    %p145 = scmp.ne.s32.totalorder %s128, %s144
    %p146 = scmp.eq.s32.totalorder %s21, 0
    %p147 = por %p145, %p146
    %s148 = ssub.s32 %s15, %s22
    %p149 = scmp.eq.s32.totalorder %s148, 0
    %s151 = sadd.s32 %s150, 1
    %s152 = scalar_select %p149, %s150, %s151
    %p155 = pneg %p149
    %p156 = scmp.eq.s32.totalorder %s15, 1
    %p157 = por %p155, %p156
    %p158 = scmp.ne.s32.totalorder %s150, %s153
    %p159 = scmp.eq.s32.totalorder %s15, 0
    %p160 = por %p158, %p159
    %p161 = scmp.ne.s32.totalorder %s150, %s153
    %p162 = scmp.eq.s32.totalorder %s20, 1
    %p163 = por %p161, %p162
    %p164 = scmp.ne.s32.totalorder %s153, %s154
    %p165 = scmp.eq.s32.totalorder %s20, 0
    %p166 = por %p164, %p165
    %p167 = scmp.ne.s32.totalorder %s153, %s154
    %p168 = scmp.eq.s32.totalorder %s21, 1
    %p169 = por %p167, %p168
    %p171 = scmp.ne.s32.totalorder %s154, %s170
    %p172 = scmp.eq.s32.totalorder %s21, 0
    %p173 = por %p171, %p172
    %s174 = ssub.s32 %s15, %s22
    %p175 = scmp.eq.s32.totalorder %s174, 0
    %s177 = sadd.s32 %s176, 1
    %s178 = scalar_select %p175, %s176, %s177
    %p181 = pneg %p175
    %p182 = scmp.eq.s32.totalorder %s15, 1
    %p183 = por %p181, %p182
    %p184 = scmp.ne.s32.totalorder %s176, %s179
    %p185 = scmp.eq.s32.totalorder %s15, 0
    %p186 = por %p184, %p185
    %p187 = scmp.ne.s32.totalorder %s176, %s179
    %p188 = scmp.eq.s32.totalorder %s20, 1
    %p189 = por %p187, %p188
    %p190 = scmp.ne.s32.totalorder %s179, %s180
    %p191 = scmp.eq.s32.totalorder %s20, 0
    %p192 = por %p190, %p191
    %p193 = scmp.ne.s32.totalorder %s179, %s180
    %p194 = scmp.eq.s32.totalorder %s21, 1
    %p195 = por %p193, %p194
    %p197 = scmp.ne.s32.totalorder %s180, %s196
    %p198 = scmp.eq.s32.totalorder %s21, 0
    %p199 = por %p197, %p198
    %s200 = ssub.s32 %s15, %s22
    %p201 = scmp.eq.s32.totalorder %s200, 0
    %s203 = sadd.s32 %s202, 1
    %s204 = scalar_select %p201, %s202, %s203
    %p207 = pneg %p201
    %p208 = scmp.eq.s32.totalorder %s15, 1
    %p209 = por %p207, %p208
    %p210 = scmp.ne.s32.totalorder %s202, %s205
    %p211 = scmp.eq.s32.totalorder %s15, 0
    %p212 = por %p210, %p211
    %p213 = scmp.ne.s32.totalorder %s202, %s205
    %p214 = scmp.eq.s32.totalorder %s20, 1
    %p215 = por %p213, %p214
    %p216 = scmp.ne.s32.totalorder %s205, %s206
    %p217 = scmp.eq.s32.totalorder %s20, 0
    %p218 = por %p216, %p217
    %p219 = scmp.ne.s32.totalorder %s205, %s206
    %p220 = scmp.eq.s32.totalorder %s21, 1
    %p221 = por %p219, %p220
    %p223 = scmp.ne.s32.totalorder %s206, %s222
    %p224 = scmp.eq.s32.totalorder %s21, 0
    %p225 = por %p223, %p224
    %s226 = ssub.s32 %s15, %s22
    %p227 = scmp.eq.s32.totalorder %s226, 0
    %s229 = sadd.s32 %s228, 1
    %s230 = scalar_select %p227, %s228, %s229
    %p233 = pneg %p227
    %p234 = scmp.eq.s32.totalorder %s15, 1
    %p235 = por %p233, %p234
    %p236 = scmp.ne.s32.totalorder %s228, %s231
    %p237 = scmp.eq.s32.totalorder %s15, 0
    %p238 = por %p236, %p237
    %p239 = scmp.ne.s32.totalorder %s228, %s231
    %p240 = scmp.eq.s32.totalorder %s20, 1
    %p241 = por %p239, %p240
    %p242 = scmp.ne.s32.totalorder %s231, %s232
    %p243 = scmp.eq.s32.totalorder %s20, 0
    %p244 = por %p242, %p243
    %p245 = scmp.ne.s32.totalorder %s231, %s232
    %p246 = scmp.eq.s32.totalorder %s21, 1
    %p247 = por %p245, %p246
    %p249 = scmp.ne.s32.totalorder %s232, %s248
    %p250 = scmp.eq.s32.totalorder %s21, 0
    %p251 = por %p249, %p250
    %s252 = ssub.s32 %s15, %s22
    %p253 = scmp.eq.s32.totalorder %s252, 0
    %s255 = sadd.s32 %s254, 1
    %s256 = scalar_select %p253, %s254, %s255
    %p259 = pneg %p253
    %p260 = scmp.eq.s32.totalorder %s15, 1
    %p261 = por %p259, %p260
    %p262 = scmp.ne.s32.totalorder %s254, %s257
    %p263 = scmp.eq.s32.totalorder %s15, 0
    %p264 = por %p262, %p263
    %p265 = scmp.ne.s32.totalorder %s254, %s257
    %p266 = scmp.eq.s32.totalorder %s20, 1
    %p267 = por %p265, %p266
    %p268 = scmp.ne.s32.totalorder %s257, %s258
    %p269 = scmp.eq.s32.totalorder %s20, 0
    %p270 = por %p268, %p269
    %p271 = scmp.ne.s32.totalorder %s257, %s258
    %p272 = scmp.eq.s32.totalorder %s21, 1
    %p273 = por %p271, %p272
    %p275 = scmp.ne.s32.totalorder %s258, %s274
    %p276 = scmp.eq.s32.totalorder %s21, 0
    %p277 = por %p275, %p276
    %p278 = scmp.le.s32.totalorder 1, %s15
    %p279 = scmp.lt.s32.totalorder %s15, 3
    %p280 = pnand %p278, %p279
    %p281 = pneg %p280
    // Predicated region
    $region9: #{multiple_cnn_forward.1} parent=5 // pred_check
      _
    $region10: #{multiple_cnn_forward.1} parent=5 // pred_check_branch
      %283 = sbr.rel (%p280) target = $region12
    $region11: #{multiple_cnn_forward.1} parent=5 // pred_region
      %s284 = ssub.s32 %s15, 1
      // Predicated region
      $region13: #{multiple_cnn_forward.1} parent=11 // pred_check
        %p285 = pneg %p36
      $region14: #{multiple_cnn_forward.1} parent=11 // pred_check_branch
        %287 = sbr.rel (%p285) target = $region16
      $region15: #{multiple_cnn_forward.1} parent=11 // pred_region
        _
      $region16: #{multiple_cnn_forward.1} parent=11 // pred_fallthru
        _
    $region12: #{multiple_cnn_forward.1} parent=5 // pred_fallthru
      _
    %p288 = scmp.lt.s32.totalorder %s15, 2
    // Predicated region
    $region17: #{multiple_cnn_forward.1} parent=5 // pred_check
      %p289 = pneg %p288
    $region18: #{multiple_cnn_forward.1} parent=5 // pred_check_branch
      %291 = sbr.rel (%p289) target = $region20
    $region19: #{multiple_cnn_forward.1} parent=5 // pred_region
      // Predicated region
      $region21: #{multiple_cnn_forward.1} parent=19 // pred_check
        %p292 = pneg %p56
      $region22: #{multiple_cnn_forward.1} parent=19 // pred_check_branch
        %294 = sbr.rel (%p292) target = $region24
      $region23: #{multiple_cnn_forward.1} parent=19 // pred_region
        %p295 = scmp.lt.s32.totalorder %s15, 1
        %s296 = scalar_select %p295, %s15, 1
        %s297 = smul.addr %s296, 32
        %s298 = smul.addr %s297, 4
        %s299 = scalar_lea.vmem %s1, %s298
      $region24: #{multiple_cnn_forward.1} parent=19 // pred_fallthru
        _
      // Predicated region
      $region25: #{multiple_cnn_forward.1} parent=19 // pred_check
        %p300 = pneg %p82
      $region26: #{multiple_cnn_forward.1} parent=19 // pred_check_branch
        %302 = sbr.rel (%p300) target = $region28
      $region27: #{multiple_cnn_forward.1} parent=19 // pred_region
        %p303 = scmp.lt.s32.totalorder %s15, 1
        %s304 = scalar_select %p303, %s15, 1
        %s305 = scalar_lea.vmem %s2, %s304
      $region28: #{multiple_cnn_forward.1} parent=19 // pred_fallthru
        _
      // Predicated region
      $region29: #{multiple_cnn_forward.1} parent=19 // pred_check
        %p306 = pneg %p108
      $region30: #{multiple_cnn_forward.1} parent=19 // pred_check_branch
        %308 = sbr.rel (%p306) target = $region32
      $region31: #{multiple_cnn_forward.1} parent=19 // pred_region
        %p309 = scmp.lt.s32.totalorder %s15, 1
        %s310 = scalar_select %p309, %s15, 1
        %s311 = smul.addr %s310, 64
        %s312 = smul.addr %s311, 4
        %s313 = scalar_lea.vmem %s3, %s312
      $region32: #{multiple_cnn_forward.1} parent=19 // pred_fallthru
        _
      // Predicated region
      $region33: #{multiple_cnn_forward.1} parent=19 // pred_check
        %p314 = pneg %p134
      $region34: #{multiple_cnn_forward.1} parent=19 // pred_check_branch
        %316 = sbr.rel (%p314) target = $region36
      $region35: #{multiple_cnn_forward.1} parent=19 // pred_region
        %p317 = scmp.lt.s32.totalorder %s15, 1
        %s318 = scalar_select %p317, %s15, 1
        %s319 = scalar_lea.vmem %s4, %s318
      $region36: #{multiple_cnn_forward.1} parent=19 // pred_fallthru
        _
      // Predicated region
      $region37: #{multiple_cnn_forward.1} parent=19 // pred_check
        %p320 = pneg %p160
      $region38: #{multiple_cnn_forward.1} parent=19 // pred_check_branch
        %322 = sbr.rel (%p320) target = $region40
      $region39: #{multiple_cnn_forward.1} parent=19 // pred_region
        %p323 = scmp.lt.s32.totalorder %s15, 1
        %s324 = scalar_select %p323, %s15, 1
        %s325 = smul.addr %s324, 72
        %s326 = smul.addr %s325, 4
        %s327 = scalar_lea.vmem %s5, %s326
      $region40: #{multiple_cnn_forward.1} parent=19 // pred_fallthru
        _
      // Predicated region
      $region41: #{multiple_cnn_forward.1} parent=19 // pred_check
        %p328 = pneg %p186
      $region42: #{multiple_cnn_forward.1} parent=19 // pred_check_branch
        %330 = sbr.rel (%p328) target = $region44
      $region43: #{multiple_cnn_forward.1} parent=19 // pred_region
        %p331 = scmp.lt.s32.totalorder %s15, 1
        %s332 = scalar_select %p331, %s15, 1
        %s333 = scalar_lea.vmem %s6, %s332
      $region44: #{multiple_cnn_forward.1} parent=19 // pred_fallthru
        _
      // Predicated region
      $region45: #{multiple_cnn_forward.1} parent=19 // pred_check
        %p334 = pneg %p212
      $region46: #{multiple_cnn_forward.1} parent=19 // pred_check_branch
        %336 = sbr.rel (%p334) target = $region48
      $region47: #{multiple_cnn_forward.1} parent=19 // pred_region
        %p337 = scmp.lt.s32.totalorder %s15, 1
        %s338 = scalar_select %p337, %s15, 1
        %s339 = smul.addr %s338, 128
        %s340 = smul.addr %s339, 4
        %s341 = scalar_lea.vmem %s7, %s340
      $region48: #{multiple_cnn_forward.1} parent=19 // pred_fallthru
        _
      // Predicated region
      $region49: #{multiple_cnn_forward.1} parent=19 // pred_check
        %p342 = pneg %p238
      $region50: #{multiple_cnn_forward.1} parent=19 // pred_check_branch
        %344 = sbr.rel (%p342) target = $region52
      $region51: #{multiple_cnn_forward.1} parent=19 // pred_region
        %p345 = scmp.lt.s32.totalorder %s15, 1
        %s346 = scalar_select %p345, %s15, 1
        %s347 = scalar_lea.vmem %s8, %s346
      $region52: #{multiple_cnn_forward.1} parent=19 // pred_fallthru
        _
    $region20: #{multiple_cnn_forward.1} parent=5 // pred_fallthru
      _
    %p348 = scmp.le.s32.totalorder 1, %s15
    %p349 = scmp.lt.s32.totalorder %s15, 3
    %p350 = pnand %p348, %p349
    %p351 = pneg %p350
    // Predicated region
    $region53: #{multiple_cnn_forward.1} parent=5 // pred_check
      _
    $region54: #{multiple_cnn_forward.1} parent=5 // pred_check_branch
      %353 = sbr.rel (%p350) target = $region56
    $region55: #{multiple_cnn_forward.1} parent=5 // pred_region
      %s354 = ssub.s32 %s15, 1
      %p355 = pneg %p36
      %p356 = pneg %p33
      %p357 = scmp.lt.s32.totalorder %s20, 1
      %s358 = scalar_select %p357, %s20, 1
      %s359 = smul.addr %s358, 32
      %s360 = smul.addr %s359, 4
      %s361 = scalar_lea.vmem %s1, %s360
      %p362 = pneg %p62
      %p363 = pneg %p59
      %p364 = scmp.lt.s32.totalorder %s20, 1
      %s365 = scalar_select %p364, %s20, 1
      %s366 = scalar_lea.vmem %s2, %s365
      %p367 = pneg %p88
      %p368 = pneg %p85
      %p369 = scmp.lt.s32.totalorder %s20, 1
      %s370 = scalar_select %p369, %s20, 1
      %s371 = smul.addr %s370, 64
      %s372 = smul.addr %s371, 4
      %s373 = scalar_lea.vmem %s3, %s372
      %p374 = pneg %p114
      %p375 = pneg %p111
      %p376 = scmp.lt.s32.totalorder %s20, 1
      %s377 = scalar_select %p376, %s20, 1
      %s378 = scalar_lea.vmem %s4, %s377
      %p379 = pneg %p140
      %p380 = pneg %p137
      %p381 = scmp.lt.s32.totalorder %s20, 1
      %s382 = scalar_select %p381, %s20, 1
      %s383 = smul.addr %s382, 72
      %s384 = smul.addr %s383, 4
      %s385 = scalar_lea.vmem %s5, %s384
      %p386 = pneg %p166
      %p387 = pneg %p163
      %p388 = scmp.lt.s32.totalorder %s20, 1
      %s389 = scalar_select %p388, %s20, 1
      %s390 = scalar_lea.vmem %s6, %s389
      %p391 = pneg %p192
      %p392 = pneg %p189
      %p393 = scmp.lt.s32.totalorder %s20, 1
      %s394 = scalar_select %p393, %s20, 1
      %s395 = smul.addr %s394, 128
      %s396 = smul.addr %s395, 4
      %s397 = scalar_lea.vmem %s7, %s396
      %p398 = pneg %p218
      %p399 = pneg %p215
      %p400 = scmp.lt.s32.totalorder %s20, 1
      %s401 = scalar_select %p400, %s20, 1
      %s402 = scalar_lea.vmem %s8, %s401
      %p403 = pneg %p244
      %p404 = pneg %p241
      %p405 = pneg %p270
      %p406 = pneg %p267
      %p407 = scmp.lt.s32.totalorder %s20, 1
      %s408 = scalar_select %p407, %s20, 1
      %s409 = smul.addr %s408, 2
      %s410 = scalar_lea.vmem %s9, %s409
      %p411 = scmp.lt.s32.totalorder %s20, 1
      %s412 = scalar_select %p411, %s20, 1
      %s413 = smul.addr %s412, 32
      %s414 = smul.addr %s413, 4
      %s415 = scalar_lea.vmem %s1, %s414
      %p416 = scmp.lt.s32.totalorder %s20, 1
      %s417 = scalar_select %p416, %s20, 1
      %s418 = scalar_lea.vmem %s2, %s417
      %p419 = scmp.lt.s32.totalorder %s20, 1
      %s420 = scalar_select %p419, %s20, 1
      %s421 = smul.addr %s420, 64
      %s422 = smul.addr %s421, 4
      %s423 = scalar_lea.vmem %s3, %s422
      %p424 = scmp.lt.s32.totalorder %s20, 1
      %s425 = scalar_select %p424, %s20, 1
      %s426 = scalar_lea.vmem %s4, %s425
      %p427 = scmp.lt.s32.totalorder %s20, 1
      %s428 = scalar_select %p427, %s20, 1
      %s429 = smul.addr %s428, 72
      %s430 = smul.addr %s429, 4
      %s431 = scalar_lea.vmem %s5, %s430
      %p432 = scmp.lt.s32.totalorder %s20, 1
      %s433 = scalar_select %p432, %s20, 1
      %s434 = scalar_lea.vmem %s6, %s433
      %p435 = scmp.lt.s32.totalorder %s20, 1
      %s436 = scalar_select %p435, %s20, 1
      %s437 = smul.addr %s436, 128
      %s438 = smul.addr %s437, 4
      %s439 = scalar_lea.vmem %s7, %s438
      %p440 = scmp.lt.s32.totalorder %s20, 1
      %s441 = scalar_select %p440, %s20, 1
      %s442 = scalar_lea.vmem %s8, %s441
      %p443 = scmp.lt.s32.totalorder %s20, 1
      %s444 = scalar_select %p443, %s20, 1
      %s445 = smul.addr %s444, 2
      %s446 = scalar_lea.vmem %s9, %s445
      %v448 = vld [vmem:[%s0] sm:$0xff]
      %v449 = vld [vmem:[%s0 + $0x8] sm:$0xff]
      %v450 = vld [vmem:[%s0 + $0x10] sm:$0xff]
      %v451 = vld [vmem:[%s0 + $0x18] sm:$0xff]
      %v452 = vld [vmem:[%s0 + $0x20] sm:$0xff]
      %v453 = vld [vmem:[%s0 + $0x28] sm:$0xff]
      %v454 = vld [vmem:[%s0 + $0x30] sm:$0xff]
      %v455 = vld [vmem:[%s0 + $0x38] sm:$0xff]
      %v456 = vld [vmem:[%s0 + $0x40] sm:$0xff]
      %v457 = vld [vmem:[%s0 + $0x48] sm:$0xff]
      %v458 = vld [vmem:[%s0 + $0x50] sm:$0xff]
      %v459 = vld [vmem:[%s0 + $0x58] sm:$0xff]
      %v460 = vld [vmem:[%s0 + $0x60] sm:$0xff]
      %v461 = vld [vmem:[%s0 + $0x68] sm:$0xff]
      %v462 = vld [vmem:[%s0 + $0x70] sm:$0xff]
      %v463 = vld [vmem:[%s0 + $0x78] sm:$0xff]
      %v464 = vld [vmem:[%s0 + $0x80] sm:$0xff]
      %v465 = vld [vmem:[%s0 + $0x88] sm:$0xff]
      %v466 = vld [vmem:[%s0 + $0x90] sm:$0xff]
      %v467 = vld [vmem:[%s0 + $0x98] sm:$0xff]
      %v468 = vld [vmem:[%s0 + $0xa0] sm:$0xff]
      %v469 = vld [vmem:[%s0 + $0xa8] sm:$0xff]
      %v470 = vld [vmem:[%s0 + $0xb0] sm:$0xff]
      %v471 = vld [vmem:[%s0 + $0xb8] sm:$0xff]
      %v472 = vld [vmem:[%s0 + $0xc0] sm:$0xff]
      %v473 = vld [vmem:[%s0 + $0xc8] sm:$0xff]
      %v474 = vld [vmem:[%s0 + $0xd0] sm:$0xff]
      %v475 = vld [vmem:[%s0 + $0xd8] sm:$0xff]
      %v476 = vld [vmem:[%s0 + $0xe0] sm:$0xff]
      %v477 = vld [vmem:[%s0 + $0xe8] sm:$0xff]
      %v478 = vld [vmem:[%s0 + $0xf0] sm:$0xff]
      %v479 = vld [vmem:[%s0 + $0xf8] sm:$0xff]
      %v480 = vld [vmem:[%s0 + $0x100] sm:$0xff]
      %v481 = vld [vmem:[%s0 + $0x108] sm:$0xff]
      %v482 = vld [vmem:[%s0 + $0x110] sm:$0xff]
      %v483 = vld [vmem:[%s0 + $0x118] sm:$0xff]
      %v484 = vld [vmem:[%s0 + $0x120] sm:$0xff]
      %v485 = vld [vmem:[%s0 + $0x128] sm:$0xff]
      %v486 = vld [vmem:[%s0 + $0x130] sm:$0xff]
      %v487 = vld [vmem:[%s0 + $0x138] sm:$0xff]
      %v488 = vld [vmem:[%s0 + $0x140] sm:$0xff]
      %v489 = vld [vmem:[%s0 + $0x148] sm:$0xff]
      %v490 = vld [vmem:[%s0 + $0x150] sm:$0xff]
      %v491 = vld [vmem:[%s0 + $0x158] sm:$0xff]
      %v492 = vld [vmem:[%s0 + $0x160] sm:$0xff]
      %v493 = vld [vmem:[%s0 + $0x168] sm:$0xff]
      %v494 = vld [vmem:[%s0 + $0x170] sm:$0xff]
      %v495 = vld [vmem:[%s0 + $0x178] sm:$0xff]
      %v496 = vld [vmem:[%s0 + $0x180] sm:$0xff]
      %v497 = vld [vmem:[%s0 + $0x188] sm:$0xff]
      %v498 = vld [vmem:[%s0 + $0x190] sm:$0xff]
      %v499 = vld [vmem:[%s0 + $0x198] sm:$0xff]
      %v500 = vld [vmem:[%s0 + $0x1a0] sm:$0xff]
      %v501 = vld [vmem:[%s0 + $0x1a8] sm:$0xff]
      %v502 = vld [vmem:[%s0 + $0x1b0] sm:$0xff]
      %v503 = vld [vmem:[%s0 + $0x1b8] sm:$0xff]
      %v504 = vld [vmem:[%s0 + $0x1c0] sm:$0xff]
      %v505 = vld [vmem:[%s0 + $0x1c8] sm:$0xff]
      %v506 = vld [vmem:[%s0 + $0x1d0] sm:$0xff]
      %v507 = vld [vmem:[%s0 + $0x1d8] sm:$0xff]
      %v508 = vld [vmem:[%s0 + $0x1e0] sm:$0xff]
      %v509 = vld [vmem:[%s0 + $0x1e8] sm:$0xff]
      %v510 = vld [vmem:[%s0 + $0x1f0] sm:$0xff]
      %v511 = vld [vmem:[%s0 + $0x1f8] sm:$0xff]
      %v512 = vld [vmem:[%s415] sm:$0xf]
      %v513 = vld [vmem:[%s415 + $0x4] sm:$0xf]
      %v514 = vld [vmem:[%s415 + $0x8] sm:$0xf]
      %v515 = vld [vmem:[%s415 + $0xc] sm:$0xf]
      %v516 = vld [vmem:[%s415 + $0x10] sm:$0xf]
      %v517 = vld [vmem:[%s415 + $0x14] sm:$0xf]
      %v518 = vld [vmem:[%s415 + $0x18] sm:$0xf]
      %v519 = vld [vmem:[%s415 + $0x1c] sm:$0xf]
      %v520 = vld [vmem:[%s415 + $0x20] sm:$0xf]
      %v521 = vld [vmem:[%s415 + $0x24] sm:$0xf]
      %v522 = vld [vmem:[%s415 + $0x28] sm:$0xf]
      %v523 = vld [vmem:[%s415 + $0x2c] sm:$0xf]
      %v524 = vld [vmem:[%s415 + $0x30] sm:$0xf]
      %v525 = vld [vmem:[%s415 + $0x34] sm:$0xf]
      %v526 = vld [vmem:[%s415 + $0x38] sm:$0xf]
      %v527 = vld [vmem:[%s415 + $0x3c] sm:$0xf]
      %v528 = vld [vmem:[%s415 + $0x40] sm:$0xf]
      %v529 = vld [vmem:[%s415 + $0x44] sm:$0xf]
      %v530 = vld [vmem:[%s415 + $0x48] sm:$0xf]
      %v531 = vld [vmem:[%s415 + $0x4c] sm:$0xf]
      %v532 = vld [vmem:[%s415 + $0x50] sm:$0xf]
      %v533 = vld [vmem:[%s415 + $0x54] sm:$0xf]
      %v534 = vld [vmem:[%s415 + $0x58] sm:$0xf]
      %v535 = vld [vmem:[%s415 + $0x5c] sm:$0xf]
      %v536 = vld [vmem:[%s415 + $0x60] sm:$0xf]
      %v537 = vld [vmem:[%s415 + $0x64] sm:$0xf]
      %v538 = vld [vmem:[%s415 + $0x68] sm:$0xf]
      %v539 = vld [vmem:[%s415 + $0x6c] sm:$0xf]
      %v540 = vld [vmem:[%s415 + $0x70] sm:$0xf]
      %v541 = vld [vmem:[%s415 + $0x74] sm:$0xf]
      %v542 = vld [vmem:[%s415 + $0x78] sm:$0xf]
      %v543 = vld [vmem:[%s415 + $0x7c] sm:$0xf]
      %v544 = vld [vmem:[%s418] sm:$0x1]
      %v546 = vlaneseq
      %v547 = vshrl.u32 %v546, 7
      %v548 = vsub.s32 0, %v547
      %v549 = vrot.slane %v544, %v548
      %v615 = vunpack.c.l.b16 %v448
      %v616 = vunpack.c.h.b16 %v448
      %v617 = vunpack.c.l.b16 %v449
      %v618 = vunpack.c.h.b16 %v449
      %v619 = vunpack.c.l.b16 %v450
      %v620 = vunpack.c.h.b16 %v450
      %v621 = vunpack.c.l.b16 %v451
      %v622 = vunpack.c.h.b16 %v451
      %v623 = vunpack.c.l.b16 %v452
      %v624 = vunpack.c.h.b16 %v452
      %v625 = vunpack.c.l.b16 %v453
      %v626 = vunpack.c.h.b16 %v453
      %v627 = vunpack.c.l.b16 %v454
      %v628 = vunpack.c.h.b16 %v454
      %v629 = vunpack.c.l.b16 %v455
      %v630 = vunpack.c.h.b16 %v455
      %v631 = vunpack.c.l.b16 %v456
      %v632 = vunpack.c.h.b16 %v456
      %v633 = vunpack.c.l.b16 %v457
      %v634 = vunpack.c.h.b16 %v457
      %v635 = vunpack.c.l.b16 %v458
      %v636 = vunpack.c.h.b16 %v458
      %v637 = vunpack.c.l.b16 %v459
      %v638 = vunpack.c.h.b16 %v459
      %v639 = vunpack.c.l.b16 %v460
      %v640 = vunpack.c.h.b16 %v460
      %v641 = vunpack.c.l.b16 %v461
      %v642 = vunpack.c.h.b16 %v461
      %v643 = vunpack.c.l.b16 %v462
      %v644 = vunpack.c.h.b16 %v462
      %v645 = vunpack.c.l.b16 %v463
      %v646 = vunpack.c.h.b16 %v463
      %v647 = vunpack.c.l.b16 %v464
      %v648 = vunpack.c.h.b16 %v464
      %v649 = vunpack.c.l.b16 %v465
      %v650 = vunpack.c.h.b16 %v465
      %v651 = vunpack.c.l.b16 %v466
      %v652 = vunpack.c.h.b16 %v466
      %v653 = vunpack.c.l.b16 %v467
      %v654 = vunpack.c.h.b16 %v467
      %v655 = vunpack.c.l.b16 %v468
      %v656 = vunpack.c.h.b16 %v468
      %v657 = vunpack.c.l.b16 %v469
      %v658 = vunpack.c.h.b16 %v469
      %v659 = vunpack.c.l.b16 %v470
      %v660 = vunpack.c.h.b16 %v470
      %v661 = vunpack.c.l.b16 %v471
      %v662 = vunpack.c.h.b16 %v471
      %v663 = vunpack.c.l.b16 %v472
      %v664 = vunpack.c.h.b16 %v472
      %v665 = vunpack.c.l.b16 %v473
      %v666 = vunpack.c.h.b16 %v473
      %v667 = vunpack.c.l.b16 %v474
      %v668 = vunpack.c.h.b16 %v474
      %v669 = vunpack.c.l.b16 %v475
      %v670 = vunpack.c.h.b16 %v475
      %v671 = vunpack.c.l.b16 %v476
      %v672 = vunpack.c.h.b16 %v476
      %v673 = vunpack.c.l.b16 %v477
      %v674 = vunpack.c.h.b16 %v477
      %v675 = vunpack.c.l.b16 %v478
      %v676 = vunpack.c.h.b16 %v478
      %v677 = vunpack.c.l.b16 %v479
      %v678 = vunpack.c.h.b16 %v479
      %v679 = vunpack.c.l.b16 %v480
      %v680 = vunpack.c.h.b16 %v480
      %v681 = vunpack.c.l.b16 %v481
      %v682 = vunpack.c.h.b16 %v481
      %v683 = vunpack.c.l.b16 %v482
      %v684 = vunpack.c.h.b16 %v482
      %v685 = vunpack.c.l.b16 %v483
      %v686 = vunpack.c.h.b16 %v483
      %v687 = vunpack.c.l.b16 %v484
      %v688 = vunpack.c.h.b16 %v484
      %v689 = vunpack.c.l.b16 %v485
      %v690 = vunpack.c.h.b16 %v485
      %v691 = vunpack.c.l.b16 %v486
      %v692 = vunpack.c.h.b16 %v486
      %v693 = vunpack.c.l.b16 %v487
      %v694 = vunpack.c.h.b16 %v487
      %v695 = vunpack.c.l.b16 %v488
      %v696 = vunpack.c.h.b16 %v488
      %v697 = vunpack.c.l.b16 %v489
      %v698 = vunpack.c.h.b16 %v489
      %v699 = vunpack.c.l.b16 %v490
      %v700 = vunpack.c.h.b16 %v490
      %v701 = vunpack.c.l.b16 %v491
      %v702 = vunpack.c.h.b16 %v491
      %v703 = vunpack.c.l.b16 %v492
      %v704 = vunpack.c.h.b16 %v492
      %v705 = vunpack.c.l.b16 %v493
      %v706 = vunpack.c.h.b16 %v493
      %v707 = vunpack.c.l.b16 %v494
      %v708 = vunpack.c.h.b16 %v494
      %v709 = vunpack.c.l.b16 %v495
      %v710 = vunpack.c.h.b16 %v495
      %v711 = vunpack.c.l.b16 %v496
      %v712 = vunpack.c.h.b16 %v496
      %v713 = vunpack.c.l.b16 %v497
      %v714 = vunpack.c.h.b16 %v497
      %v715 = vunpack.c.l.b16 %v498
      %v716 = vunpack.c.h.b16 %v498
      %v717 = vunpack.c.l.b16 %v499
      %v718 = vunpack.c.h.b16 %v499
      %v719 = vunpack.c.l.b16 %v500
      %v720 = vunpack.c.h.b16 %v500
      %v721 = vunpack.c.l.b16 %v501
      %v722 = vunpack.c.h.b16 %v501
      %v723 = vunpack.c.l.b16 %v502
      %v724 = vunpack.c.h.b16 %v502
      %v725 = vunpack.c.l.b16 %v503
      %v726 = vunpack.c.h.b16 %v503
      %v727 = vunpack.c.l.b16 %v504
      %v728 = vunpack.c.h.b16 %v504
      %v729 = vunpack.c.l.b16 %v505
      %v730 = vunpack.c.h.b16 %v505
      %v731 = vunpack.c.l.b16 %v506
      %v732 = vunpack.c.h.b16 %v506
      %v733 = vunpack.c.l.b16 %v507
      %v734 = vunpack.c.h.b16 %v507
      %v735 = vunpack.c.l.b16 %v508
      %v736 = vunpack.c.h.b16 %v508
      %v737 = vunpack.c.l.b16 %v509
      %v738 = vunpack.c.h.b16 %v509
      %v739 = vunpack.c.l.b16 %v510
      %v740 = vunpack.c.h.b16 %v510
      %v741 = vunpack.c.l.b16 %v511
      %v742 = vunpack.c.h.b16 %v511
      %v743 = vpack.c.b16 %v617, %v615
      %v744 = vpack.c.b16 %v618, %v616
      %v745 = vpack.c.b16 %v621, %v619
      %v746 = vpack.c.b16 %v622, %v620
      %v747 = vpack.c.b16 %v625, %v623
      %v748 = vpack.c.b16 %v626, %v624
      %v749 = vpack.c.b16 %v629, %v627
      %v750 = vpack.c.b16 %v630, %v628
      %v751 = vpack.c.b16 %v633, %v631
      %v752 = vpack.c.b16 %v634, %v632
      %v753 = vpack.c.b16 %v637, %v635
      %v754 = vpack.c.b16 %v638, %v636
      %v755 = vpack.c.b16 %v641, %v639
      %v756 = vpack.c.b16 %v642, %v640
      %v757 = vpack.c.b16 %v645, %v643
      %v758 = vpack.c.b16 %v646, %v644
      %v759 = vpack.c.b16 %v649, %v647
      %v760 = vpack.c.b16 %v650, %v648
      %v761 = vpack.c.b16 %v653, %v651
      %v762 = vpack.c.b16 %v654, %v652
      %v763 = vpack.c.b16 %v657, %v655
      %v764 = vpack.c.b16 %v658, %v656
      %v765 = vpack.c.b16 %v661, %v659
      %v766 = vpack.c.b16 %v662, %v660
      %v767 = vpack.c.b16 %v665, %v663
      %v768 = vpack.c.b16 %v666, %v664
      %v769 = vpack.c.b16 %v669, %v667
      %v770 = vpack.c.b16 %v670, %v668
      %v771 = vpack.c.b16 %v673, %v671
      %v772 = vpack.c.b16 %v674, %v672
      %v773 = vpack.c.b16 %v677, %v675
      %v774 = vpack.c.b16 %v678, %v676
      %v775 = vpack.c.b16 %v681, %v679
      %v776 = vpack.c.b16 %v682, %v680
      %v777 = vpack.c.b16 %v685, %v683
      %v778 = vpack.c.b16 %v686, %v684
      %v779 = vpack.c.b16 %v689, %v687
      %v780 = vpack.c.b16 %v690, %v688
      %v781 = vpack.c.b16 %v693, %v691
      %v782 = vpack.c.b16 %v694, %v692
      %v783 = vpack.c.b16 %v697, %v695
      %v784 = vpack.c.b16 %v698, %v696
      %v785 = vpack.c.b16 %v701, %v699
      %v786 = vpack.c.b16 %v702, %v700
      %v787 = vpack.c.b16 %v705, %v703
      %v788 = vpack.c.b16 %v706, %v704
      %v789 = vpack.c.b16 %v709, %v707
      %v790 = vpack.c.b16 %v710, %v708
      %v791 = vpack.c.b16 %v713, %v711
      %v792 = vpack.c.b16 %v714, %v712
      %v793 = vpack.c.b16 %v717, %v715
      %v794 = vpack.c.b16 %v718, %v716
      %v795 = vpack.c.b16 %v721, %v719
      %v796 = vpack.c.b16 %v722, %v720
      %v797 = vpack.c.b16 %v725, %v723
      %v798 = vpack.c.b16 %v726, %v724
      %v799 = vpack.c.b16 %v729, %v727
      %v800 = vpack.c.b16 %v730, %v728
      %v801 = vpack.c.b16 %v733, %v731
      %v802 = vpack.c.b16 %v734, %v732
      %v803 = vpack.c.b16 %v737, %v735
      %v804 = vpack.c.b16 %v738, %v736
      %v805 = vpack.c.b16 %v741, %v739
      %v806 = vpack.c.b16 %v742, %v740
      %v903 = vunpack.c.l.b16 %v512
      %v904 = vunpack.c.l.b16 %v513
      %v905 = vunpack.c.l.b16 %v514
      %v906 = vunpack.c.l.b16 %v515
      %v907 = vunpack.c.l.b16 %v516
      %v908 = vunpack.c.l.b16 %v517
      %v909 = vunpack.c.l.b16 %v518
      %v910 = vunpack.c.l.b16 %v519
      %v911 = vunpack.c.l.b16 %v520
      %v912 = vunpack.c.l.b16 %v521
      %v913 = vunpack.c.l.b16 %v522
      %v914 = vunpack.c.l.b16 %v523
      %v915 = vunpack.c.l.b16 %v524
      %v916 = vunpack.c.l.b16 %v525
      %v917 = vunpack.c.l.b16 %v526
      %v918 = vunpack.c.l.b16 %v527
      %v919 = vunpack.c.l.b16 %v528
      %v920 = vunpack.c.l.b16 %v529
      %v921 = vunpack.c.l.b16 %v530
      %v922 = vunpack.c.l.b16 %v531
      %v923 = vunpack.c.l.b16 %v532
      %v924 = vunpack.c.l.b16 %v533
      %v925 = vunpack.c.l.b16 %v534
      %v926 = vunpack.c.l.b16 %v535
      %v927 = vunpack.c.l.b16 %v536
      %v928 = vunpack.c.l.b16 %v537
      %v929 = vunpack.c.l.b16 %v538
      %v930 = vunpack.c.l.b16 %v539
      %v931 = vunpack.c.l.b16 %v540
      %v932 = vunpack.c.l.b16 %v541
      %v933 = vunpack.c.l.b16 %v542
      %v934 = vunpack.c.l.b16 %v543
      %v935 = vpack.c.b16 %v904, %v903
      %v936 = vpack.c.b16 %v906, %v905
      %v937 = vpack.c.b16 %v908, %v907
      %v938 = vpack.c.b16 %v910, %v909
      %v939 = vpack.c.b16 %v912, %v911
      %v940 = vpack.c.b16 %v914, %v913
      %v941 = vpack.c.b16 %v916, %v915
      %v942 = vpack.c.b16 %v918, %v917
      %v943 = vpack.c.b16 %v920, %v919
      %v944 = vpack.c.b16 %v922, %v921
      %v945 = vpack.c.b16 %v924, %v923
      %v946 = vpack.c.b16 %v926, %v925
      %v947 = vpack.c.b16 %v928, %v927
      %v948 = vpack.c.b16 %v930, %v929
      %v949 = vpack.c.b16 %v932, %v931
      %v950 = vpack.c.b16 %v934, %v933
      %967 = vmatprep.subr.bf16.mxu0 0
      %968 = vmatpush1.bf16.msra.mxu0 %v935
      %969 = vmatprep.subr.bf16.mxu0 0
      %970 = vmatpush1.bf16.msra.mxu0 %v936
      %971 = vmatprep.subr.bf16.mxu0 0
      %972 = vmatpush1.bf16.msra.mxu0 %v937
      %973 = vmatprep.subr.bf16.mxu0 0
      %974 = vmatpush1.bf16.msra.mxu0 %v938
      %975 = vmatprep.subr.bf16.mxu0 0
      %976 = vmatpush1.bf16.msra.mxu0 %v939
      %977 = vmatprep.subr.bf16.mxu0 0
      %978 = vmatpush1.bf16.msra.mxu0 %v940
      %979 = vmatprep.subr.bf16.mxu0 0
      %980 = vmatpush1.bf16.msra.mxu0 %v941
      %981 = vmatprep.subr.bf16.mxu0 0
      %982 = vmatpush1.bf16.msra.mxu0 %v942
      %983 = vmatprep.subr.bf16.mxu0 0
      %984 = vmatpush1.bf16.msra.mxu0 %v943
      %985 = vmatprep.subr.bf16.mxu0 0
      %986 = vmatpush1.bf16.msra.mxu0 %v944
      %987 = vmatprep.subr.bf16.mxu0 0
      %988 = vmatpush1.bf16.msra.mxu0 %v945
      %989 = vmatprep.subr.bf16.mxu0 0
      %990 = vmatpush1.bf16.msra.mxu0 %v946
      %991 = vmatprep.subr.bf16.mxu0 0
      %992 = vmatpush1.bf16.msra.mxu0 %v947
      %993 = vmatprep.subr.bf16.mxu0 0
      %994 = vmatpush1.bf16.msra.mxu0 %v948
      %995 = vmatprep.subr.bf16.mxu0 0
      %996 = vmatpush1.bf16.msra.mxu0 %v949
      %997 = vmatprep.subr.bf16.mxu0 0
      %998 = vmatpush1.bf16.msra.mxu0 %v950
      %999 = vmatprep.mubr.bf16.mxu0 %v744
      %1000 = vmatmul.mubr.bf16.gmra.mrb[0].mxu0 %v743
      %v1001 = vpop.f32.mrb[0].mxu0
      %v1002 = vadd.f32 %v549, %v1001
      %v1003 = vpop.f32.mrb[0].mxu0
      %v1004 = vpop.f32.mrb[0].mxu0
      %v1005 = vadd.f32 %v549, %v1004
      %v1006 = vpop.f32.mrb[0].mxu0
      %1007 = vmatprep.mubr.bf16.mxu0 %v746
      %1008 = vmatmul.mubr.bf16.gmra.mrb[0].mxu0 %v745
      %v1009 = vpop.f32.mrb[0].mxu0
      %v1010 = vadd.f32 %v549, %v1009
      %v1011 = vpop.f32.mrb[0].mxu0
      %v1012 = vpop.f32.mrb[0].mxu0
      %v1013 = vadd.f32 %v549, %v1012
      %v1014 = vpop.f32.mrb[0].mxu0
      %1015 = vmatprep.mubr.bf16.mxu0 %v748
      %1016 = vmatmul.mubr.bf16.gmra.mrb[0].mxu0 %v747
      %v1017 = vpop.f32.mrb[0].mxu0
      %v1018 = vadd.f32 %v549, %v1017
      %v1019 = vpop.f32.mrb[0].mxu0
      %v1020 = vpop.f32.mrb[0].mxu0
      %v1021 = vadd.f32 %v549, %v1020
      %v1022 = vpop.f32.mrb[0].mxu0
      %1023 = vmatprep.mubr.bf16.mxu0 %v750
      %1024 = vmatmul.mubr.bf16.gmra.mrb[0].mxu0 %v749
      %v1025 = vpop.f32.mrb[0].mxu0
      %v1026 = vadd.f32 %v549, %v1025
      %v1027 = vpop.f32.mrb[0].mxu0
      %v1028 = vpop.f32.mrb[0].mxu0
      %v1029 = vpop.f32.mrb[0].mxu0
      %1030 = vmatprep.mubr.bf16.mxu0 %v752
      %1031 = vmatmul.mubr.bf16.gmra.mrb[0].mxu0 %v751
      %v1032 = vpop.f32.mrb[0].mxu0
      %v1033 = vadd.f32 %v549, %v1032
      %v1034 = vpop.f32.mrb[0].mxu0
      %v1035 = vpop.f32.mrb[0].mxu0
      %v1036 = vadd.f32 %v549, %v1035
      %v1037 = vpop.f32.mrb[0].mxu0
      %1038 = vmatprep.mubr.bf16.mxu0 %v754
      %1039 = vmatmul.mubr.bf16.gmra.mrb[0].mxu0 %v753
      %v1040 = vpop.f32.mrb[0].mxu0
      %v1041 = vadd.f32 %v549, %v1040
      %v1042 = vpop.f32.mrb[0].mxu0
      %v1043 = vpop.f32.mrb[0].mxu0
      %v1044 = vadd.f32 %v549, %v1043
      %v1045 = vpop.f32.mrb[0].mxu0
      %1046 = vmatprep.mubr.bf16.mxu0 %v756
      %1047 = vmatmul.mubr.bf16.gmra.mrb[0].mxu0 %v755
      %v1048 = vpop.f32.mrb[0].mxu0
      %v1049 = vadd.f32 %v549, %v1048
      %v1050 = vpop.f32.mrb[0].mxu0
      %v1051 = vpop.f32.mrb[0].mxu0
      %v1052 = vadd.f32 %v549, %v1051
      %v1053 = vpop.f32.mrb[0].mxu0
      %1054 = vmatprep.mubr.bf16.mxu0 %v758
      %1055 = vmatmul.mubr.bf16.gmra.mrb[0].mxu0 %v757
      %v1056 = vpop.f32.mrb[0].mxu0
      %v1057 = vadd.f32 %v549, %v1056
      %v1058 = vpop.f32.mrb[0].mxu0
      %v1059 = vpop.f32.mrb[0].mxu0
      %v1060 = vpop.f32.mrb[0].mxu0
      %1061 = vmatprep.mubr.bf16.mxu0 %v760
      %1062 = vmatmul.mubr.bf16.gmra.mrb[0].mxu0 %v759
      %v1063 = vpop.f32.mrb[0].mxu0
      %v1064 = vadd.f32 %v549, %v1063
      %v1065 = vpop.f32.mrb[0].mxu0
      %v1066 = vpop.f32.mrb[0].mxu0
      %v1067 = vadd.f32 %v549, %v1066
      %v1068 = vpop.f32.mrb[0].mxu0
      %1069 = vmatprep.mubr.bf16.mxu0 %v762
      %1070 = vmatmul.mubr.bf16.gmra.mrb[0].mxu0 %v761
      %v1071 = vpop.f32.mrb[0].mxu0
      %v1072 = vadd.f32 %v549, %v1071
      %v1073 = vpop.f32.mrb[0].mxu0
      %v1074 = vpop.f32.mrb[0].mxu0
      %v1075 = vadd.f32 %v549, %v1074
      %v1076 = vpop.f32.mrb[0].mxu0
      %1077 = vmatprep.mubr.bf16.mxu0 %v764
      %1078 = vmatmul.mubr.bf16.gmra.mrb[0].mxu0 %v763
      %v1079 = vpop.f32.mrb[0].mxu0
      %v1080 = vadd.f32 %v549, %v1079
      %v1081 = vpop.f32.mrb[0].mxu0
      %v1082 = vpop.f32.mrb[0].mxu0
      %v1083 = vadd.f32 %v549, %v1082
      %v1084 = vpop.f32.mrb[0].mxu0
      %1085 = vmatprep.mubr.bf16.mxu0 %v766
      %1086 = vmatmul.mubr.bf16.gmra.mrb[0].mxu0 %v765
      %v1087 = vpop.f32.mrb[0].mxu0
      %v1088 = vadd.f32 %v549, %v1087
      %v1089 = vpop.f32.mrb[0].mxu0
      %v1090 = vpop.f32.mrb[0].mxu0
      %v1091 = vpop.f32.mrb[0].mxu0
      %1092 = vmatprep.mubr.bf16.mxu0 %v768
      %1093 = vmatmul.mubr.bf16.gmra.mrb[0].mxu0 %v767
      %v1094 = vpop.f32.mrb[0].mxu0
      %v1095 = vadd.f32 %v549, %v1094
      %v1096 = vpop.f32.mrb[0].mxu0
      %v1097 = vpop.f32.mrb[0].mxu0
      %v1098 = vadd.f32 %v549, %v1097
      %v1099 = vpop.f32.mrb[0].mxu0
      %1100 = vmatprep.mubr.bf16.mxu0 %v770
      %1101 = vmatmul.mubr.bf16.gmra.mrb[0].mxu0 %v769
      %v1102 = vpop.f32.mrb[0].mxu0
      %v1103 = vadd.f32 %v549, %v1102
      %v1104 = vpop.f32.mrb[0].mxu0
      %v1105 = vpop.f32.mrb[0].mxu0
      %v1106 = vadd.f32 %v549, %v1105
      %v1107 = vpop.f32.mrb[0].mxu0
      %1108 = vmatprep.mubr.bf16.mxu0 %v772
      %1109 = vmatmul.mubr.bf16.gmra.mrb[0].mxu0 %v771
      %v1110 = vpop.f32.mrb[0].mxu0
      %v1111 = vadd.f32 %v549, %v1110
      %v1112 = vpop.f32.mrb[0].mxu0
      %v1113 = vpop.f32.mrb[0].mxu0
      %v1114 = vadd.f32 %v549, %v1113
      %v1115 = vpop.f32.mrb[0].mxu0
      %1116 = vmatprep.mubr.bf16.mxu0 %v774
      %1117 = vmatmul.mubr.bf16.gmra.mrb[0].mxu0 %v773
      %v1118 = vpop.f32.mrb[0].mxu0
      %v1119 = vadd.f32 %v549, %v1118
      %v1120 = vpop.f32.mrb[0].mxu0
      %v1121 = vpop.f32.mrb[0].mxu0
      %v1122 = vpop.f32.mrb[0].mxu0
      %1123 = vmatprep.mubr.bf16.mxu0 %v776
      %1124 = vmatmul.mubr.bf16.gmra.mrb[0].mxu0 %v775
      %v1125 = vpop.f32.mrb[0].mxu0
      %v1126 = vadd.f32 %v549, %v1125
      %v1127 = vpop.f32.mrb[0].mxu0
      %v1128 = vpop.f32.mrb[0].mxu0
      %v1129 = vadd.f32 %v549, %v1128
      %v1130 = vpop.f32.mrb[0].mxu0
      %1131 = vmatprep.mubr.bf16.mxu0 %v778
      %1132 = vmatmul.mubr.bf16.gmra.mrb[0].mxu0 %v777
      %v1133 = vpop.f32.mrb[0].mxu0
      %v1134 = vadd.f32 %v549, %v1133
      %v1135 = vpop.f32.mrb[0].mxu0
      %v1136 = vpop.f32.mrb[0].mxu0
      %v1137 = vadd.f32 %v549, %v1136
      %v1138 = vpop.f32.mrb[0].mxu0
      %1139 = vmatprep.mubr.bf16.mxu0 %v780
      %1140 = vmatmul.mubr.bf16.gmra.mrb[0].mxu0 %v779
      %v1141 = vpop.f32.mrb[0].mxu0
      %v1142 = vadd.f32 %v549, %v1141
      %v1143 = vpop.f32.mrb[0].mxu0
      %v1144 = vpop.f32.mrb[0].mxu0
      %v1145 = vadd.f32 %v549, %v1144
      %v1146 = vpop.f32.mrb[0].mxu0
      %1147 = vmatprep.mubr.bf16.mxu0 %v782
      %1148 = vmatmul.mubr.bf16.gmra.mrb[0].mxu0 %v781
      %v1149 = vpop.f32.mrb[0].mxu0
      %v1150 = vadd.f32 %v549, %v1149
      %v1151 = vpop.f32.mrb[0].mxu0
      %v1152 = vpop.f32.mrb[0].mxu0
      %v1153 = vpop.f32.mrb[0].mxu0
      %1154 = vmatprep.mubr.bf16.mxu0 %v784
      %1155 = vmatmul.mubr.bf16.gmra.mrb[0].mxu0 %v783
      %v1156 = vpop.f32.mrb[0].mxu0
      %v1157 = vadd.f32 %v549, %v1156
      %v1158 = vpop.f32.mrb[0].mxu0
      %v1159 = vpop.f32.mrb[0].mxu0
      %v1160 = vadd.f32 %v549, %v1159
      %v1161 = vpop.f32.mrb[0].mxu0
      %1162 = vmatprep.mubr.bf16.mxu0 %v786
      %1163 = vmatmul.mubr.bf16.gmra.mrb[0].mxu0 %v785
      %v1164 = vpop.f32.mrb[0].mxu0
      %v1165 = vadd.f32 %v549, %v1164
      %v1166 = vpop.f32.mrb[0].mxu0
      %v1167 = vpop.f32.mrb[0].mxu0
      %v1168 = vadd.f32 %v549, %v1167
      %v1169 = vpop.f32.mrb[0].mxu0
      %1170 = vmatprep.mubr.bf16.mxu0 %v788
      %1171 = vmatmul.mubr.bf16.gmra.mrb[0].mxu0 %v787
      %v1172 = vpop.f32.mrb[0].mxu0
      %v1173 = vadd.f32 %v549, %v1172
      %v1174 = vpop.f32.mrb[0].mxu0
      %v1175 = vpop.f32.mrb[0].mxu0
      %v1176 = vadd.f32 %v549, %v1175
      %v1177 = vpop.f32.mrb[0].mxu0
      %1178 = vmatprep.mubr.bf16.mxu0 %v790
      %1179 = vmatmul.mubr.bf16.gmra.mrb[0].mxu0 %v789
      %v1180 = vpop.f32.mrb[0].mxu0
      %v1181 = vadd.f32 %v549, %v1180
      %v1182 = vpop.f32.mrb[0].mxu0
      %v1183 = vpop.f32.mrb[0].mxu0
      %v1184 = vpop.f32.mrb[0].mxu0
      %1185 = vmatprep.mubr.bf16.mxu0 %v792
      %1186 = vmatmul.mubr.bf16.gmra.mrb[0].mxu0 %v791
      %v1187 = vpop.f32.mrb[0].mxu0
      %v1188 = vadd.f32 %v549, %v1187
      %v1189 = vpop.f32.mrb[0].mxu0
      %v1190 = vpop.f32.mrb[0].mxu0
      %v1191 = vadd.f32 %v549, %v1190
      %v1192 = vpop.f32.mrb[0].mxu0
      %1193 = vmatprep.mubr.bf16.mxu0 %v794
      %1194 = vmatmul.mubr.bf16.gmra.mrb[0].mxu0 %v793
      %v1195 = vpop.f32.mrb[0].mxu0
      %v1196 = vadd.f32 %v549, %v1195
      %v1197 = vpop.f32.mrb[0].mxu0
      %v1198 = vpop.f32.mrb[0].mxu0
      %v1199 = vadd.f32 %v549, %v1198
      %v1200 = vpop.f32.mrb[0].mxu0
      %1201 = vmatprep.mubr.bf16.mxu0 %v796
      %1202 = vmatmul.mubr.bf16.gmra.mrb[0].mxu0 %v795
      %v1203 = vpop.f32.mrb[0].mxu0
      %v1204 = vadd.f32 %v549, %v1203
      %v1205 = vpop.f32.mrb[0].mxu0
      %v1206 = vpop.f32.mrb[0].mxu0
      %v1207 = vadd.f32 %v549, %v1206
      %v1208 = vpop.f32.mrb[0].mxu0
      %1209 = vmatprep.mubr.bf16.mxu0 %v798
      %1210 = vmatmul.mubr.bf16.gmra.mrb[0].mxu0 %v797
      %v1211 = vpop.f32.mrb[0].mxu0
      %v1212 = vadd.f32 %v549, %v1211
      %v1213 = vpop.f32.mrb[0].mxu0
      %v1214 = vpop.f32.mrb[0].mxu0
      %v1215 = vpop.f32.mrb[0].mxu0
      %1216 = vmatprep.mubr.bf16.mxu0 %v800
      %1217 = vmatmul.mubr.bf16.gmra.mrb[0].mxu0 %v799
      %v1218 = vpop.f32.mrb[0].mxu0
      %v1219 = vadd.f32 %v549, %v1218
      %v1220 = vpop.f32.mrb[0].mxu0
      %v1221 = vpop.f32.mrb[0].mxu0
      %v1222 = vadd.f32 %v549, %v1221
      %v1223 = vpop.f32.mrb[0].mxu0
      %1224 = vmatprep.mubr.bf16.mxu0 %v802
      %1225 = vmatmul.mubr.bf16.gmra.mrb[0].mxu0 %v801
      %v1226 = vpop.f32.mrb[0].mxu0
      %v1227 = vadd.f32 %v549, %v1226
      %v1228 = vpop.f32.mrb[0].mxu0
      %v1229 = vpop.f32.mrb[0].mxu0
      %v1230 = vadd.f32 %v549, %v1229
      %v1231 = vpop.f32.mrb[0].mxu0
      %1232 = vmatprep.mubr.bf16.mxu0 %v804
      %1233 = vmatmul.mubr.bf16.gmra.mrb[0].mxu0 %v803
      %v1234 = vpop.f32.mrb[0].mxu0
      %v1235 = vadd.f32 %v549, %v1234
      %v1236 = vpop.f32.mrb[0].mxu0
      %v1237 = vpop.f32.mrb[0].mxu0
      %v1238 = vadd.f32 %v549, %v1237
      %v1239 = vpop.f32.mrb[0].mxu0
      %1240 = vmatprep.mubr.bf16.mxu0 %v806
      %1241 = vmatmul.mubr.bf16.gmra.mrb[0].mxu0 %v805
      %v1242 = vpop.f32.mrb[0].mxu0
      %v1243 = vadd.f32 %v549, %v1242
      %v1244 = vpop.f32.mrb[0].mxu0
      %v1245 = vpop.f32.mrb[0].mxu0
      %v1246 = vpop.f32.mrb[0].mxu0
      %1247 = vdwg.mxu0
      %v1248 = vmax.f32 %v1002, 0.0
      %v1249 = vmax.f32 %v1005, 0.0
      %v1250 = vmax.f32 %v1010, 0.0
      %v1251 = vmax.f32 %v1013, 0.0
      %v1252 = vmax.f32 %v1018, 0.0
      %v1253 = vmax.f32 %v1021, 0.0
      %v1254 = vmax.f32 %v1026, 0.0
      %v1255 = vmax.f32 %v1033, 0.0
      %v1256 = vmax.f32 %v1036, 0.0
      %v1257 = vmax.f32 %v1041, 0.0
      %v1258 = vmax.f32 %v1044, 0.0
      %v1259 = vmax.f32 %v1049, 0.0
      %v1260 = vmax.f32 %v1052, 0.0
      %v1261 = vmax.f32 %v1057, 0.0
      %v1262 = vmax.f32 %v1064, 0.0
      %v1263 = vmax.f32 %v1067, 0.0
      %v1264 = vmax.f32 %v1072, 0.0
      %v1265 = vmax.f32 %v1075, 0.0
      %v1266 = vmax.f32 %v1080, 0.0
      %v1267 = vmax.f32 %v1083, 0.0
      %v1268 = vmax.f32 %v1088, 0.0
      %v1269 = vmax.f32 %v1095, 0.0
      %v1270 = vmax.f32 %v1098, 0.0
      %v1271 = vmax.f32 %v1103, 0.0
      %v1272 = vmax.f32 %v1106, 0.0
      %v1273 = vmax.f32 %v1111, 0.0
      %v1274 = vmax.f32 %v1114, 0.0
      %v1275 = vmax.f32 %v1119, 0.0
      %v1276 = vmax.f32 %v1126, 0.0
      %v1277 = vmax.f32 %v1129, 0.0
      %v1278 = vmax.f32 %v1134, 0.0
      %v1279 = vmax.f32 %v1137, 0.0
      %v1280 = vmax.f32 %v1142, 0.0
      %v1281 = vmax.f32 %v1145, 0.0
      %v1282 = vmax.f32 %v1150, 0.0
      %v1283 = vmax.f32 %v1157, 0.0
      %v1284 = vmax.f32 %v1160, 0.0
      %v1285 = vmax.f32 %v1165, 0.0
      %v1286 = vmax.f32 %v1168, 0.0
      %v1287 = vmax.f32 %v1173, 0.0
      %v1288 = vmax.f32 %v1176, 0.0
      %v1289 = vmax.f32 %v1181, 0.0
      %v1290 = vmax.f32 %v1188, 0.0
      %v1291 = vmax.f32 %v1191, 0.0
      %v1292 = vmax.f32 %v1196, 0.0
      %v1293 = vmax.f32 %v1199, 0.0
      %v1294 = vmax.f32 %v1204, 0.0
      %v1295 = vmax.f32 %v1207, 0.0
      %v1296 = vmax.f32 %v1212, 0.0
      %v1297 = vmax.f32 %v1219, 0.0
      %v1298 = vmax.f32 %v1222, 0.0
      %v1299 = vmax.f32 %v1227, 0.0
      %v1300 = vmax.f32 %v1230, 0.0
      %v1301 = vmax.f32 %v1235, 0.0
      %v1302 = vmax.f32 %v1238, 0.0
      %v1303 = vmax.f32 %v1243, 0.0
      %1316 = vrot.lane.b32.xlu0 %v1262, 32
      %v1317 = vpop.permute.xlu0 %1316
      %1318 = vrot.lane.b32.xlu0 %v1263, 32
      %v1319 = vpop.permute.xlu0 %1318
      %1320 = vrot.lane.b32.xlu0 %v1264, 32
      %v1321 = vpop.permute.xlu0 %1320
      %1322 = vrot.lane.b32.xlu0 %v1265, 32
      %v1323 = vpop.permute.xlu0 %1322
      %1324 = vrot.lane.b32.xlu0 %v1266, 32
      %v1325 = vpop.permute.xlu0 %1324
      %1326 = vrot.lane.b32.xlu0 %v1267, 32
      %v1327 = vpop.permute.xlu0 %1326
      %1328 = vrot.lane.b32.xlu0 %v1269, 32
      %v1329 = vpop.permute.xlu0 %1328
      %1330 = vrot.lane.b32.xlu0 %v1270, 32
      %v1331 = vpop.permute.xlu0 %1330
      %1332 = vrot.lane.b32.xlu0 %v1271, 32
      %v1333 = vpop.permute.xlu0 %1332
      %1334 = vrot.lane.b32.xlu0 %v1272, 32
      %v1335 = vpop.permute.xlu0 %1334
      %1336 = vrot.lane.b32.xlu0 %v1273, 32
      %v1337 = vpop.permute.xlu0 %1336
      %1338 = vrot.lane.b32.xlu0 %v1274, 32
      %v1339 = vpop.permute.xlu0 %1338
      %v1364 = vrot.slane %v1248, 1
      %v1365 = vrot.slane %v1249, 1
      %v1366 = vrot.slane %v1250, 1
      %v1367 = vrot.slane %v1251, 1
      %v1368 = vrot.slane %v1252, 1
      %v1369 = vrot.slane %v1253, 1
      %v1370 = vrot.slane %v1255, 1
      %v1371 = vrot.slane %v1256, 1
      %v1372 = vrot.slane %v1257, 1
      %v1373 = vrot.slane %v1258, 1
      %v1374 = vrot.slane %v1259, 1
      %v1375 = vrot.slane %v1260, 1
      %1376 = vrot.lane.b32.xlu0 %v1364, 64
      %v1377 = vpop.permute.xlu0 %1376
      %1378 = vrot.lane.b32.xlu0 %v1365, 64
      %v1379 = vpop.permute.xlu0 %1378
      %1380 = vrot.lane.b32.xlu0 %v1366, 64
      %v1381 = vpop.permute.xlu0 %1380
      %1382 = vrot.lane.b32.xlu0 %v1367, 64
      %v1383 = vpop.permute.xlu0 %1382
      %1384 = vrot.lane.b32.xlu0 %v1368, 64
      %v1385 = vpop.permute.xlu0 %1384
      %1386 = vrot.lane.b32.xlu0 %v1369, 64
      %v1387 = vpop.permute.xlu0 %1386
      %1388 = vrot.lane.b32.xlu0 %v1370, 64
      %v1389 = vpop.permute.xlu0 %1388
      %1390 = vrot.lane.b32.xlu0 %v1371, 64
      %v1391 = vpop.permute.xlu0 %1390
      %1392 = vrot.lane.b32.xlu0 %v1372, 64
      %v1393 = vpop.permute.xlu0 %1392
      %1394 = vrot.lane.b32.xlu0 %v1373, 64
      %v1395 = vpop.permute.xlu0 %1394
      %1396 = vrot.lane.b32.xlu0 %v1374, 64
      %v1397 = vpop.permute.xlu0 %1396
      %1398 = vrot.lane.b32.xlu0 %v1375, 64
      %v1399 = vpop.permute.xlu0 %1398
      %v1412 = vrot.slane %v1262, 1
      %v1413 = vrot.slane %v1263, 1
      %v1414 = vrot.slane %v1264, 1
      %v1415 = vrot.slane %v1265, 1
      %v1416 = vrot.slane %v1266, 1
      %v1417 = vrot.slane %v1267, 1
      %v1418 = vrot.slane %v1269, 1
      %v1419 = vrot.slane %v1270, 1
      %v1420 = vrot.slane %v1271, 1
      %v1421 = vrot.slane %v1272, 1
      %v1422 = vrot.slane %v1273, 1
      %v1423 = vrot.slane %v1274, 1
      %1424 = vrot.lane.b32.xlu0 %v1412, 96
      %v1425 = vpop.permute.xlu0 %1424
      %1426 = vrot.lane.b32.xlu0 %v1413, 96
      %v1427 = vpop.permute.xlu0 %1426
      %1428 = vrot.lane.b32.xlu0 %v1414, 96
      %v1429 = vpop.permute.xlu0 %1428
      %1430 = vrot.lane.b32.xlu0 %v1415, 96
      %v1431 = vpop.permute.xlu0 %1430
      %1432 = vrot.lane.b32.xlu0 %v1416, 96
      %v1433 = vpop.permute.xlu0 %1432
      %1434 = vrot.lane.b32.xlu0 %v1417, 96
      %v1435 = vpop.permute.xlu0 %1434
      %1436 = vrot.lane.b32.xlu0 %v1418, 96
      %v1437 = vpop.permute.xlu0 %1436
      %1438 = vrot.lane.b32.xlu0 %v1419, 96
      %v1439 = vpop.permute.xlu0 %1438
      %1440 = vrot.lane.b32.xlu0 %v1420, 96
      %v1441 = vpop.permute.xlu0 %1440
      %1442 = vrot.lane.b32.xlu0 %v1421, 96
      %v1443 = vpop.permute.xlu0 %1442
      %1444 = vrot.lane.b32.xlu0 %v1422, 96
      %v1445 = vpop.permute.xlu0 %1444
      %1446 = vrot.lane.b32.xlu0 %v1423, 96
      %v1447 = vpop.permute.xlu0 %1446
      %1472 = vrot.lane.b32.xlu0 %v1290, 32
      %v1473 = vpop.permute.xlu0 %1472
      %1474 = vrot.lane.b32.xlu0 %v1291, 32
      %v1475 = vpop.permute.xlu0 %1474
      %1476 = vrot.lane.b32.xlu0 %v1292, 32
      %v1477 = vpop.permute.xlu0 %1476
      %1478 = vrot.lane.b32.xlu0 %v1293, 32
      %v1479 = vpop.permute.xlu0 %1478
      %1480 = vrot.lane.b32.xlu0 %v1294, 32
      %v1481 = vpop.permute.xlu0 %1480
      %1482 = vrot.lane.b32.xlu0 %v1295, 32
      %v1483 = vpop.permute.xlu0 %1482
      %1484 = vrot.lane.b32.xlu0 %v1297, 32
      %v1485 = vpop.permute.xlu0 %1484
      %1486 = vrot.lane.b32.xlu0 %v1298, 32
      %v1487 = vpop.permute.xlu0 %1486
      %1488 = vrot.lane.b32.xlu0 %v1299, 32
      %v1489 = vpop.permute.xlu0 %1488
      %1490 = vrot.lane.b32.xlu0 %v1300, 32
      %v1491 = vpop.permute.xlu0 %1490
      %1492 = vrot.lane.b32.xlu0 %v1301, 32
      %v1493 = vpop.permute.xlu0 %1492
      %1494 = vrot.lane.b32.xlu0 %v1302, 32
      %v1495 = vpop.permute.xlu0 %1494
      %v1520 = vrot.slane %v1276, 1
      %v1521 = vrot.slane %v1277, 1
      %v1522 = vrot.slane %v1278, 1
      %v1523 = vrot.slane %v1279, 1
      %v1524 = vrot.slane %v1280, 1
      %v1525 = vrot.slane %v1281, 1
      %v1526 = vrot.slane %v1283, 1
      %v1527 = vrot.slane %v1284, 1
      %v1528 = vrot.slane %v1285, 1
      %v1529 = vrot.slane %v1286, 1
      %v1530 = vrot.slane %v1287, 1
      %v1531 = vrot.slane %v1288, 1
      %1532 = vrot.lane.b32.xlu0 %v1520, 64
      %v1533 = vpop.permute.xlu0 %1532
      %1534 = vrot.lane.b32.xlu0 %v1521, 64
      %v1535 = vpop.permute.xlu0 %1534
      %1536 = vrot.lane.b32.xlu0 %v1522, 64
      %v1537 = vpop.permute.xlu0 %1536
      %1538 = vrot.lane.b32.xlu0 %v1523, 64
      %v1539 = vpop.permute.xlu0 %1538
      %1540 = vrot.lane.b32.xlu0 %v1524, 64
      %v1541 = vpop.permute.xlu0 %1540
      %1542 = vrot.lane.b32.xlu0 %v1525, 64
      %v1543 = vpop.permute.xlu0 %1542
      %1544 = vrot.lane.b32.xlu0 %v1526, 64
      %v1545 = vpop.permute.xlu0 %1544
      %1546 = vrot.lane.b32.xlu0 %v1527, 64
      %v1547 = vpop.permute.xlu0 %1546
      %1548 = vrot.lane.b32.xlu0 %v1528, 64
      %v1549 = vpop.permute.xlu0 %1548
      %1550 = vrot.lane.b32.xlu0 %v1529, 64
      %v1551 = vpop.permute.xlu0 %1550
      %1552 = vrot.lane.b32.xlu0 %v1530, 64
      %v1553 = vpop.permute.xlu0 %1552
      %1554 = vrot.lane.b32.xlu0 %v1531, 64
      %v1555 = vpop.permute.xlu0 %1554
      %v1568 = vrot.slane %v1290, 1
      %v1569 = vrot.slane %v1291, 1
      %v1570 = vrot.slane %v1292, 1
      %v1571 = vrot.slane %v1293, 1
      %v1572 = vrot.slane %v1294, 1
      %v1573 = vrot.slane %v1295, 1
      %v1574 = vrot.slane %v1297, 1
      %v1575 = vrot.slane %v1298, 1
      %v1576 = vrot.slane %v1299, 1
      %v1577 = vrot.slane %v1300, 1
      %v1578 = vrot.slane %v1301, 1
      %v1579 = vrot.slane %v1302, 1
      %1580 = vrot.lane.b32.xlu0 %v1568, 96
      %v1581 = vpop.permute.xlu0 %1580
      %1582 = vrot.lane.b32.xlu0 %v1569, 96
      %v1583 = vpop.permute.xlu0 %1582
      %1584 = vrot.lane.b32.xlu0 %v1570, 96
      %v1585 = vpop.permute.xlu0 %1584
      %1586 = vrot.lane.b32.xlu0 %v1571, 96
      %v1587 = vpop.permute.xlu0 %1586
      %1588 = vrot.lane.b32.xlu0 %v1572, 96
      %v1589 = vpop.permute.xlu0 %1588
      %1590 = vrot.lane.b32.xlu0 %v1573, 96
      %v1591 = vpop.permute.xlu0 %1590
      %1592 = vrot.lane.b32.xlu0 %v1574, 96
      %v1593 = vpop.permute.xlu0 %1592
      %1594 = vrot.lane.b32.xlu0 %v1575, 96
      %v1595 = vpop.permute.xlu0 %1594
      %1596 = vrot.lane.b32.xlu0 %v1576, 96
      %v1597 = vpop.permute.xlu0 %1596
      %1598 = vrot.lane.b32.xlu0 %v1577, 96
      %v1599 = vpop.permute.xlu0 %1598
      %1600 = vrot.lane.b32.xlu0 %v1578, 96
      %v1601 = vpop.permute.xlu0 %1600
      %1602 = vrot.lane.b32.xlu0 %v1579, 96
      %v1603 = vpop.permute.xlu0 %1602
      %1618 = vrot.lane.b32.xlu0 %v1268, 32
      %v1619 = vpop.permute.xlu0 %1618
      %1620 = vrot.lane.b32.xlu0 %v1275, 32
      %v1621 = vpop.permute.xlu0 %1620
      %v1626 = vrot.slane %v1254, 1
      %v1627 = vrot.slane %v1261, 1
      %1628 = vrot.lane.b32.xlu0 %v1626, 64
      %v1629 = vpop.permute.xlu0 %1628
      %1630 = vrot.lane.b32.xlu0 %v1627, 64
      %v1631 = vpop.permute.xlu0 %1630
      %v1634 = vrot.slane %v1268, 1
      %v1635 = vrot.slane %v1275, 1
      %1636 = vrot.lane.b32.xlu0 %v1634, 96
      %v1637 = vpop.permute.xlu0 %1636
      %1638 = vrot.lane.b32.xlu0 %v1635, 96
      %v1639 = vpop.permute.xlu0 %1638
      %1644 = vrot.lane.b32.xlu0 %v1296, 32
      %v1645 = vpop.permute.xlu0 %1644
      %1646 = vrot.lane.b32.xlu0 %v1303, 32
      %v1647 = vpop.permute.xlu0 %1646
      %v1652 = vrot.slane %v1282, 1
      %v1653 = vrot.slane %v1289, 1
      %1654 = vrot.lane.b32.xlu0 %v1652, 64
      %v1655 = vpop.permute.xlu0 %1654
      %1656 = vrot.lane.b32.xlu0 %v1653, 64
      %v1657 = vpop.permute.xlu0 %1656
      %v1660 = vrot.slane %v1296, 1
      %v1661 = vrot.slane %v1303, 1
      %1662 = vrot.lane.b32.xlu0 %v1660, 96
      %v1663 = vpop.permute.xlu0 %1662
      %1664 = vrot.lane.b32.xlu0 %v1661, 96
      %v1665 = vpop.permute.xlu0 %1664
      %vm1668 = vcmask 261120
      %v1669 = vsel %vm1668, %v1248, %v1317
      %v1670 = vsel %vm1668, %v1249, %v1319
      %v1671 = vsel %vm1668, %v1250, %v1321
      %v1672 = vsel %vm1668, %v1251, %v1323
      %v1673 = vsel %vm1668, %v1252, %v1325
      %v1674 = vsel %vm1668, %v1253, %v1327
      %v1675 = vsel %vm1668, %v1255, %v1329
      %v1676 = vsel %vm1668, %v1256, %v1331
      %v1677 = vsel %vm1668, %v1257, %v1333
      %v1678 = vsel %vm1668, %v1258, %v1335
      %v1679 = vsel %vm1668, %v1259, %v1337
      %v1680 = vsel %vm1668, %v1260, %v1339
      %vm1681 = vcmask 523264
      %v1682 = vsel %vm1681, %v1669, %v1377
      %v1683 = vsel %vm1681, %v1670, %v1379
      %v1684 = vsel %vm1681, %v1671, %v1381
      %v1685 = vsel %vm1681, %v1672, %v1383
      %v1686 = vsel %vm1681, %v1673, %v1385
      %v1687 = vsel %vm1681, %v1674, %v1387
      %v1688 = vsel %vm1681, %v1675, %v1389
      %v1689 = vsel %vm1681, %v1676, %v1391
      %v1690 = vsel %vm1681, %v1677, %v1393
      %v1691 = vsel %vm1681, %v1678, %v1395
      %v1692 = vsel %vm1681, %v1679, %v1397
      %v1693 = vsel %vm1681, %v1680, %v1399
      %vm1694 = vcmask 785408
      %v1695 = vsel %vm1694, %v1682, %v1425
      %v1696 = vsel %vm1694, %v1683, %v1427
      %v1697 = vsel %vm1694, %v1684, %v1429
      %v1698 = vsel %vm1694, %v1685, %v1431
      %v1699 = vsel %vm1694, %v1686, %v1433
      %v1700 = vsel %vm1694, %v1687, %v1435
      %v1701 = vsel %vm1694, %v1688, %v1437
      %v1702 = vsel %vm1694, %v1689, %v1439
      %v1703 = vsel %vm1694, %v1690, %v1441
      %v1704 = vsel %vm1694, %v1691, %v1443
      %v1705 = vsel %vm1694, %v1692, %v1445
      %v1706 = vsel %vm1694, %v1693, %v1447
      %v1707 = vsel %vm1668, %v1276, %v1473
      %v1708 = vsel %vm1668, %v1277, %v1475
      %v1709 = vsel %vm1668, %v1278, %v1477
      %v1710 = vsel %vm1668, %v1279, %v1479
      %v1711 = vsel %vm1668, %v1280, %v1481
      %v1712 = vsel %vm1668, %v1281, %v1483
      %v1713 = vsel %vm1668, %v1283, %v1485
      %v1714 = vsel %vm1668, %v1284, %v1487
      %v1715 = vsel %vm1668, %v1285, %v1489
      %v1716 = vsel %vm1668, %v1286, %v1491
      %v1717 = vsel %vm1668, %v1287, %v1493
      %v1718 = vsel %vm1668, %v1288, %v1495
      %v1719 = vsel %vm1681, %v1707, %v1533
      %v1720 = vsel %vm1681, %v1708, %v1535
      %v1721 = vsel %vm1681, %v1709, %v1537
      %v1722 = vsel %vm1681, %v1710, %v1539
      %v1723 = vsel %vm1681, %v1711, %v1541
      %v1724 = vsel %vm1681, %v1712, %v1543
      %v1725 = vsel %vm1681, %v1713, %v1545
      %v1726 = vsel %vm1681, %v1714, %v1547
      %v1727 = vsel %vm1681, %v1715, %v1549
      %v1728 = vsel %vm1681, %v1716, %v1551
      %v1729 = vsel %vm1681, %v1717, %v1553
      %v1730 = vsel %vm1681, %v1718, %v1555
      %v1731 = vsel %vm1694, %v1719, %v1581
      %v1732 = vsel %vm1694, %v1720, %v1583
      %v1733 = vsel %vm1694, %v1721, %v1585
      %v1734 = vsel %vm1694, %v1722, %v1587
      %v1735 = vsel %vm1694, %v1723, %v1589
      %v1736 = vsel %vm1694, %v1724, %v1591
      %v1737 = vsel %vm1694, %v1725, %v1593
      %v1738 = vsel %vm1694, %v1726, %v1595
      %v1739 = vsel %vm1694, %v1727, %v1597
      %v1740 = vsel %vm1694, %v1728, %v1599
      %v1741 = vsel %vm1694, %v1729, %v1601
      %v1742 = vsel %vm1694, %v1730, %v1603
      %v1743 = vsel %vm1668, %v1254, %v1619
      %v1744 = vsel %vm1668, %v1261, %v1621
      %v1745 = vsel %vm1681, %v1743, %v1629
      %v1746 = vsel %vm1681, %v1744, %v1631
      %v1747 = vsel %vm1694, %v1745, %v1637
      %v1748 = vsel %vm1694, %v1746, %v1639
      %v1749 = vsel %vm1668, %v1282, %v1645
      %v1750 = vsel %vm1668, %v1289, %v1647
      %v1751 = vsel %vm1681, %v1749, %v1655
      %v1752 = vsel %vm1681, %v1750, %v1657
      %v1753 = vsel %vm1694, %v1751, %v1663
      %v1754 = vsel %vm1694, %v1752, %v1665
      %v1783 = vcombine.low %v1695, %v1731
      %v1784 = vcombine.high %v1695, %v1731
      %v1785 = vcombine.low %v1696, %v1732
      %v1786 = vcombine.high %v1696, %v1732
      %v1788 = vunpack.c.l.s4 1983009808
      %v1789 = vunpack.c.0.s8 %v1788
      %v1790 = vlaneseq
      %v1791 = vshrl.u32 %v1790, 7
      %v1792 = vsub.s32 %v1789, %v1791
      %v1793 = vrot.slane %v1783, %v1792
      %v1795 = vunpack.c.l.s4 1983009808
      %v1796 = vunpack.c.0.s8 %v1795
      %v1797 = vlaneseq
      %v1798 = vshrl.u32 %v1797, 7
      %v1799 = vsub.s32 %v1796, %v1798
      %v1800 = vrot.slane %v1784, %v1799
      %v1802 = vunpack.c.l.s4 1983009808
      %v1803 = vunpack.c.0.s8 %v1802
      %v1804 = vlaneseq
      %v1805 = vshrl.u32 %v1804, 7
      %v1806 = vsub.s32 %v1803, %v1805
      %v1807 = vrot.slane %v1785, %v1806
      %v1809 = vunpack.c.l.s4 1983009808
      %v1810 = vunpack.c.0.s8 %v1809
      %v1811 = vlaneseq
      %v1812 = vshrl.u32 %v1811, 7
      %v1813 = vsub.s32 %v1810, %v1812
      %v1814 = vrot.slane %v1786, %v1813
      %v1815 = vcombine.low %v1793, %v1807
      %v1816 = vcombine.high %v1793, %v1807
      %v1817 = vcombine.low %v1800, %v1814
      %v1818 = vcombine.low %v1697, %v1733
      %v1819 = vcombine.high %v1697, %v1733
      %v1821 = vunpack.c.l.s4 1983009808
      %v1822 = vunpack.c.0.s8 %v1821
      %v1823 = vlaneseq
      %v1824 = vshrl.u32 %v1823, 7
      %v1825 = vsub.s32 %v1822, %v1824
      %v1826 = vrot.slane %v1818, %v1825
      %v1828 = vunpack.c.l.s4 1983009808
      %v1829 = vunpack.c.0.s8 %v1828
      %v1830 = vlaneseq
      %v1831 = vshrl.u32 %v1830, 7
      %v1832 = vsub.s32 %v1829, %v1831
      %v1833 = vrot.slane %v1819, %v1832
      %v1834 = vcombine.low %v1807, %v1826
      %v1835 = vcombine.high %v1807, %v1826
      %v1836 = vcombine.low %v1814, %v1833
      %v1837 = vcombine.low %v1698, %v1734
      %v1838 = vcombine.high %v1698, %v1734
      %v1840 = vunpack.c.l.s4 1983009808
      %v1841 = vunpack.c.0.s8 %v1840
      %v1842 = vlaneseq
      %v1843 = vshrl.u32 %v1842, 7
      %v1844 = vsub.s32 %v1841, %v1843
      %v1845 = vrot.slane %v1837, %v1844
      %v1847 = vunpack.c.l.s4 1983009808
      %v1848 = vunpack.c.0.s8 %v1847
      %v1849 = vlaneseq
      %v1850 = vshrl.u32 %v1849, 7
      %v1851 = vsub.s32 %v1848, %v1850
      %v1852 = vrot.slane %v1838, %v1851
      %v1853 = vcombine.low %v1826, %v1845
      %v1854 = vcombine.high %v1826, %v1845
      %v1855 = vcombine.low %v1833, %v1852
      %v1856 = vcombine.low %v1699, %v1735
      %v1857 = vcombine.high %v1699, %v1735
      %v1859 = vunpack.c.l.s4 1983009808
      %v1860 = vunpack.c.0.s8 %v1859
      %v1861 = vlaneseq
      %v1862 = vshrl.u32 %v1861, 7
      %v1863 = vsub.s32 %v1860, %v1862
      %v1864 = vrot.slane %v1856, %v1863
      %v1866 = vunpack.c.l.s4 1983009808
      %v1867 = vunpack.c.0.s8 %v1866
      %v1868 = vlaneseq
      %v1869 = vshrl.u32 %v1868, 7
      %v1870 = vsub.s32 %v1867, %v1869
      %v1871 = vrot.slane %v1857, %v1870
      %v1872 = vcombine.low %v1845, %v1864
      %v1873 = vcombine.high %v1845, %v1864
      %v1874 = vcombine.low %v1852, %v1871
      %v1875 = vcombine.low %v1700, %v1736
      %v1876 = vcombine.high %v1700, %v1736
      %v1878 = vunpack.c.l.s4 1983009808
      %v1879 = vunpack.c.0.s8 %v1878
      %v1880 = vlaneseq
      %v1881 = vshrl.u32 %v1880, 7
      %v1882 = vsub.s32 %v1879, %v1881
      %v1883 = vrot.slane %v1875, %v1882
      %v1885 = vunpack.c.l.s4 1983009808
      %v1886 = vunpack.c.0.s8 %v1885
      %v1887 = vlaneseq
      %v1888 = vshrl.u32 %v1887, 7
      %v1889 = vsub.s32 %v1886, %v1888
      %v1890 = vrot.slane %v1876, %v1889
      %v1891 = vcombine.low %v1864, %v1883
      %v1892 = vcombine.high %v1864, %v1883
      %v1893 = vcombine.low %v1871, %v1890
      %v1894 = vcombine.low %v1747, %v1753
      %v1895 = vcombine.high %v1747, %v1753
      %v1897 = vunpack.c.l.s4 1983009808
      %v1898 = vunpack.c.0.s8 %v1897
      %v1899 = vlaneseq
      %v1900 = vshrl.u32 %v1899, 7
      %v1901 = vsub.s32 %v1898, %v1900
      %v1902 = vrot.slane %v1894, %v1901
      %v1904 = vunpack.c.l.s4 1983009808
      %v1905 = vunpack.c.0.s8 %v1904
      %v1906 = vlaneseq
      %v1907 = vshrl.u32 %v1906, 7
      %v1908 = vsub.s32 %v1905, %v1907
      %v1909 = vrot.slane %v1895, %v1908
      %v1910 = vcombine.low %v1883, %v1902
      %v1911 = vcombine.high %v1883, %v1902
      %v1912 = vcombine.low %v1890, %v1909
      %v1913 = vcombine.low %v1701, %v1737
      %v1914 = vcombine.high %v1701, %v1737
      %v1915 = vcombine.low %v1702, %v1738
      %v1916 = vcombine.high %v1702, %v1738
      %v1918 = vunpack.c.l.s4 1983009808
      %v1919 = vunpack.c.0.s8 %v1918
      %v1920 = vlaneseq
      %v1921 = vshrl.u32 %v1920, 7
      %v1922 = vsub.s32 %v1919, %v1921
      %v1923 = vrot.slane %v1913, %v1922
      %v1925 = vunpack.c.l.s4 1983009808
      %v1926 = vunpack.c.0.s8 %v1925
      %v1927 = vlaneseq
      %v1928 = vshrl.u32 %v1927, 7
      %v1929 = vsub.s32 %v1926, %v1928
      %v1930 = vrot.slane %v1914, %v1929
      %v1932 = vunpack.c.l.s4 1983009808
      %v1933 = vunpack.c.0.s8 %v1932
      %v1934 = vlaneseq
      %v1935 = vshrl.u32 %v1934, 7
      %v1936 = vsub.s32 %v1933, %v1935
      %v1937 = vrot.slane %v1915, %v1936
      %v1939 = vunpack.c.l.s4 1983009808
      %v1940 = vunpack.c.0.s8 %v1939
      %v1941 = vlaneseq
      %v1942 = vshrl.u32 %v1941, 7
      %v1943 = vsub.s32 %v1940, %v1942
      %v1944 = vrot.slane %v1916, %v1943
      %v1945 = vcombine.low %v1923, %v1937
      %v1946 = vcombine.high %v1923, %v1937
      %v1947 = vcombine.low %v1930, %v1944
      %v1948 = vcombine.low %v1703, %v1739
      %v1949 = vcombine.high %v1703, %v1739
      %v1951 = vunpack.c.l.s4 1983009808
      %v1952 = vunpack.c.0.s8 %v1951
      %v1953 = vlaneseq
      %v1954 = vshrl.u32 %v1953, 7
      %v1955 = vsub.s32 %v1952, %v1954
      %v1956 = vrot.slane %v1948, %v1955
      %v1958 = vunpack.c.l.s4 1983009808
      %v1959 = vunpack.c.0.s8 %v1958
      %v1960 = vlaneseq
      %v1961 = vshrl.u32 %v1960, 7
      %v1962 = vsub.s32 %v1959, %v1961
      %v1963 = vrot.slane %v1949, %v1962
      %v1964 = vcombine.low %v1937, %v1956
      %v1965 = vcombine.high %v1937, %v1956
      %v1966 = vcombine.low %v1944, %v1963
      %v1967 = vcombine.low %v1704, %v1740
      %v1968 = vcombine.high %v1704, %v1740
      %v1970 = vunpack.c.l.s4 1983009808
      %v1971 = vunpack.c.0.s8 %v1970
      %v1972 = vlaneseq
      %v1973 = vshrl.u32 %v1972, 7
      %v1974 = vsub.s32 %v1971, %v1973
      %v1975 = vrot.slane %v1967, %v1974
      %v1977 = vunpack.c.l.s4 1983009808
      %v1978 = vunpack.c.0.s8 %v1977
      %v1979 = vlaneseq
      %v1980 = vshrl.u32 %v1979, 7
      %v1981 = vsub.s32 %v1978, %v1980
      %v1982 = vrot.slane %v1968, %v1981
      %v1983 = vcombine.low %v1956, %v1975
      %v1984 = vcombine.high %v1956, %v1975
      %v1985 = vcombine.low %v1963, %v1982
      %v1986 = vcombine.low %v1705, %v1741
      %v1987 = vcombine.high %v1705, %v1741
      %v1989 = vunpack.c.l.s4 1983009808
      %v1990 = vunpack.c.0.s8 %v1989
      %v1991 = vlaneseq
      %v1992 = vshrl.u32 %v1991, 7
      %v1993 = vsub.s32 %v1990, %v1992
      %v1994 = vrot.slane %v1986, %v1993
      %v1996 = vunpack.c.l.s4 1983009808
      %v1997 = vunpack.c.0.s8 %v1996
      %v1998 = vlaneseq
      %v1999 = vshrl.u32 %v1998, 7
      %v2000 = vsub.s32 %v1997, %v1999
      %v2001 = vrot.slane %v1987, %v2000
      %v2002 = vcombine.low %v1975, %v1994
      %v2003 = vcombine.high %v1975, %v1994
      %v2004 = vcombine.low %v1982, %v2001
      %v2005 = vcombine.low %v1706, %v1742
      %v2006 = vcombine.high %v1706, %v1742
      %v2008 = vunpack.c.l.s4 1983009808
      %v2009 = vunpack.c.0.s8 %v2008
      %v2010 = vlaneseq
      %v2011 = vshrl.u32 %v2010, 7
      %v2012 = vsub.s32 %v2009, %v2011
      %v2013 = vrot.slane %v2005, %v2012
      %v2015 = vunpack.c.l.s4 1983009808
      %v2016 = vunpack.c.0.s8 %v2015
      %v2017 = vlaneseq
      %v2018 = vshrl.u32 %v2017, 7
      %v2019 = vsub.s32 %v2016, %v2018
      %v2020 = vrot.slane %v2006, %v2019
      %v2021 = vcombine.low %v1994, %v2013
      %v2022 = vcombine.high %v1994, %v2013
      %v2023 = vcombine.low %v2001, %v2020
      %v2024 = vcombine.low %v1748, %v1754
      %v2025 = vcombine.high %v1748, %v1754
      %v2027 = vunpack.c.l.s4 1983009808
      %v2028 = vunpack.c.0.s8 %v2027
      %v2029 = vlaneseq
      %v2030 = vshrl.u32 %v2029, 7
      %v2031 = vsub.s32 %v2028, %v2030
      %v2032 = vrot.slane %v2024, %v2031
      %v2034 = vunpack.c.l.s4 1983009808
      %v2035 = vunpack.c.0.s8 %v2034
      %v2036 = vlaneseq
      %v2037 = vshrl.u32 %v2036, 7
      %v2038 = vsub.s32 %v2035, %v2037
      %v2039 = vrot.slane %v2025, %v2038
      %v2040 = vcombine.low %v2013, %v2032
      %v2041 = vcombine.high %v2013, %v2032
      %v2042 = vcombine.low %v2020, %v2039
      %v2043 = vcombine.low %v1815, %v1816
      %v2044 = vcombine.high %v1815, %v1816
      %v2045 = vcombine.low %v1817, %v1834
      %v2046 = vcombine.high %v1817, %v1834
      %v2048 = vunpack.c.l.s4 1983009808
      %v2049 = vunpack.c.0.s8 %v2048
      %v2050 = vlaneseq
      %v2051 = vshrl.u32 %v2050, 7
      %v2052 = vsub.s32 %v2049, %v2051
      %v2053 = vrot.slane %v2043, %v2052
      %v2055 = vunpack.c.l.s4 1983009808
      %v2056 = vunpack.c.0.s8 %v2055
      %v2057 = vlaneseq
      %v2058 = vshrl.u32 %v2057, 7
      %v2059 = vsub.s32 %v2056, %v2058
      %v2060 = vrot.slane %v2044, %v2059
      %v2062 = vunpack.c.l.s4 1983009808
      %v2063 = vunpack.c.0.s8 %v2062
      %v2064 = vlaneseq
      %v2065 = vshrl.u32 %v2064, 7
      %v2066 = vsub.s32 %v2063, %v2065
      %v2067 = vrot.slane %v2045, %v2066
      %v2069 = vunpack.c.l.s4 1983009808
      %v2070 = vunpack.c.0.s8 %v2069
      %v2071 = vlaneseq
      %v2072 = vshrl.u32 %v2071, 7
      %v2073 = vsub.s32 %v2070, %v2072
      %v2074 = vrot.slane %v2046, %v2073
      %v2075 = vcombine.low %v2053, %v2067
      %v2076 = vcombine.high %v2053, %v2067
      %v2077 = vcombine.low %v2060, %v2074
      %v2078 = vcombine.high %v2060, %v2074
      %v2079 = vcombine.low %v1835, %v1836
      %v2080 = vcombine.high %v1835, %v1836
      %v2081 = vcombine.low %v1853, %v1854
      %v2082 = vcombine.high %v1853, %v1854
      %v2084 = vunpack.c.l.s4 1983009808
      %v2085 = vunpack.c.0.s8 %v2084
      %v2086 = vlaneseq
      %v2087 = vshrl.u32 %v2086, 7
      %v2088 = vsub.s32 %v2085, %v2087
      %v2089 = vrot.slane %v2079, %v2088
      %v2091 = vunpack.c.l.s4 1983009808
      %v2092 = vunpack.c.0.s8 %v2091
      %v2093 = vlaneseq
      %v2094 = vshrl.u32 %v2093, 7
      %v2095 = vsub.s32 %v2092, %v2094
      %v2096 = vrot.slane %v2080, %v2095
      %v2098 = vunpack.c.l.s4 1983009808
      %v2099 = vunpack.c.0.s8 %v2098
      %v2100 = vlaneseq
      %v2101 = vshrl.u32 %v2100, 7
      %v2102 = vsub.s32 %v2099, %v2101
      %v2103 = vrot.slane %v2081, %v2102
      %v2105 = vunpack.c.l.s4 1983009808
      %v2106 = vunpack.c.0.s8 %v2105
      %v2107 = vlaneseq
      %v2108 = vshrl.u32 %v2107, 7
      %v2109 = vsub.s32 %v2106, %v2108
      %v2110 = vrot.slane %v2082, %v2109
      %v2111 = vcombine.low %v2089, %v2103
      %v2112 = vcombine.high %v2089, %v2103
      %v2113 = vcombine.low %v2096, %v2110
      %v2114 = vcombine.high %v2096, %v2110
      %v2115 = vcombine.low %v1855, %v1872
      %v2116 = vcombine.high %v1855, %v1872
      %v2117 = vcombine.low %v1873, %v1874
      %v2118 = vcombine.high %v1873, %v1874
      %v2120 = vunpack.c.l.s4 1983009808
      %v2121 = vunpack.c.0.s8 %v2120
      %v2122 = vlaneseq
      %v2123 = vshrl.u32 %v2122, 7
      %v2124 = vsub.s32 %v2121, %v2123
      %v2125 = vrot.slane %v2115, %v2124
      %v2127 = vunpack.c.l.s4 1983009808
      %v2128 = vunpack.c.0.s8 %v2127
      %v2129 = vlaneseq
      %v2130 = vshrl.u32 %v2129, 7
      %v2131 = vsub.s32 %v2128, %v2130
      %v2132 = vrot.slane %v2116, %v2131
      %v2134 = vunpack.c.l.s4 1983009808
      %v2135 = vunpack.c.0.s8 %v2134
      %v2136 = vlaneseq
      %v2137 = vshrl.u32 %v2136, 7
      %v2138 = vsub.s32 %v2135, %v2137
      %v2139 = vrot.slane %v2117, %v2138
      %v2141 = vunpack.c.l.s4 1983009808
      %v2142 = vunpack.c.0.s8 %v2141
      %v2143 = vlaneseq
      %v2144 = vshrl.u32 %v2143, 7
      %v2145 = vsub.s32 %v2142, %v2144
      %v2146 = vrot.slane %v2118, %v2145
      %v2147 = vcombine.low %v2125, %v2139
      %v2148 = vcombine.high %v2125, %v2139
      %v2149 = vcombine.low %v2132, %v2146
      %v2150 = vcombine.high %v2132, %v2146
      %v2151 = vcombine.low %v1891, %v1892
      %v2152 = vcombine.high %v1891, %v1892
      %v2153 = vcombine.low %v1893, %v1910
      %v2154 = vcombine.high %v1893, %v1910
      %v2156 = vunpack.c.l.s4 1983009808
      %v2157 = vunpack.c.0.s8 %v2156
      %v2158 = vlaneseq
      %v2159 = vshrl.u32 %v2158, 7
      %v2160 = vsub.s32 %v2157, %v2159
      %v2161 = vrot.slane %v2151, %v2160
      %v2163 = vunpack.c.l.s4 1983009808
      %v2164 = vunpack.c.0.s8 %v2163
      %v2165 = vlaneseq
      %v2166 = vshrl.u32 %v2165, 7
      %v2167 = vsub.s32 %v2164, %v2166
      %v2168 = vrot.slane %v2152, %v2167
      %v2170 = vunpack.c.l.s4 1983009808
      %v2171 = vunpack.c.0.s8 %v2170
      %v2172 = vlaneseq
      %v2173 = vshrl.u32 %v2172, 7
      %v2174 = vsub.s32 %v2171, %v2173
      %v2175 = vrot.slane %v2153, %v2174
      %v2177 = vunpack.c.l.s4 1983009808
      %v2178 = vunpack.c.0.s8 %v2177
      %v2179 = vlaneseq
      %v2180 = vshrl.u32 %v2179, 7
      %v2181 = vsub.s32 %v2178, %v2180
      %v2182 = vrot.slane %v2154, %v2181
      %v2183 = vcombine.low %v2161, %v2175
      %v2184 = vcombine.high %v2161, %v2175
      %v2185 = vcombine.low %v2168, %v2182
      %v2186 = vcombine.high %v2168, %v2182
      %v2187 = vcombine.low %v1911, %v1912
      %v2188 = vcombine.high %v1911, %v1912
      %v2189 = vcombine.low %v1945, %v1946
      %v2190 = vcombine.high %v1945, %v1946
      %v2192 = vunpack.c.l.s4 1983009808
      %v2193 = vunpack.c.0.s8 %v2192
      %v2194 = vlaneseq
      %v2195 = vshrl.u32 %v2194, 7
      %v2196 = vsub.s32 %v2193, %v2195
      %v2197 = vrot.slane %v2187, %v2196
      %v2199 = vunpack.c.l.s4 1983009808
      %v2200 = vunpack.c.0.s8 %v2199
      %v2201 = vlaneseq
      %v2202 = vshrl.u32 %v2201, 7
      %v2203 = vsub.s32 %v2200, %v2202
      %v2204 = vrot.slane %v2188, %v2203
      %v2206 = vunpack.c.l.s4 1983009808
      %v2207 = vunpack.c.0.s8 %v2206
      %v2208 = vlaneseq
      %v2209 = vshrl.u32 %v2208, 7
      %v2210 = vsub.s32 %v2207, %v2209
      %v2211 = vrot.slane %v2189, %v2210
      %v2213 = vunpack.c.l.s4 1983009808
      %v2214 = vunpack.c.0.s8 %v2213
      %v2215 = vlaneseq
      %v2216 = vshrl.u32 %v2215, 7
      %v2217 = vsub.s32 %v2214, %v2216
      %v2218 = vrot.slane %v2190, %v2217
      %v2219 = vcombine.low %v2197, %v2211
      %v2220 = vcombine.high %v2197, %v2211
      %v2221 = vcombine.low %v2204, %v2218
      %v2222 = vcombine.high %v2204, %v2218
      %v2223 = vcombine.low %v1947, %v1964
      %v2224 = vcombine.high %v1947, %v1964
      %v2225 = vcombine.low %v1965, %v1966
      %v2226 = vcombine.high %v1965, %v1966
      %v2228 = vunpack.c.l.s4 1983009808
      %v2229 = vunpack.c.0.s8 %v2228
      %v2230 = vlaneseq
      %v2231 = vshrl.u32 %v2230, 7
      %v2232 = vsub.s32 %v2229, %v2231
      %v2233 = vrot.slane %v2223, %v2232
      %v2235 = vunpack.c.l.s4 1983009808
      %v2236 = vunpack.c.0.s8 %v2235
      %v2237 = vlaneseq
      %v2238 = vshrl.u32 %v2237, 7
      %v2239 = vsub.s32 %v2236, %v2238
      %v2240 = vrot.slane %v2224, %v2239
      %v2242 = vunpack.c.l.s4 1983009808
      %v2243 = vunpack.c.0.s8 %v2242
      %v2244 = vlaneseq
      %v2245 = vshrl.u32 %v2244, 7
      %v2246 = vsub.s32 %v2243, %v2245
      %v2247 = vrot.slane %v2225, %v2246
      %v2249 = vunpack.c.l.s4 1983009808
      %v2250 = vunpack.c.0.s8 %v2249
      %v2251 = vlaneseq
      %v2252 = vshrl.u32 %v2251, 7
      %v2253 = vsub.s32 %v2250, %v2252
      %v2254 = vrot.slane %v2226, %v2253
      %v2255 = vcombine.low %v2233, %v2247
      %v2256 = vcombine.high %v2233, %v2247
      %v2257 = vcombine.low %v2240, %v2254
      %v2258 = vcombine.high %v2240, %v2254
      %v2259 = vcombine.low %v1983, %v1984
      %v2260 = vcombine.high %v1983, %v1984
      %v2261 = vcombine.low %v1985, %v2002
      %v2262 = vcombine.high %v1985, %v2002
      %v2264 = vunpack.c.l.s4 1983009808
      %v2265 = vunpack.c.0.s8 %v2264
      %v2266 = vlaneseq
      %v2267 = vshrl.u32 %v2266, 7
      %v2268 = vsub.s32 %v2265, %v2267
      %v2269 = vrot.slane %v2259, %v2268
      %v2271 = vunpack.c.l.s4 1983009808
      %v2272 = vunpack.c.0.s8 %v2271
      %v2273 = vlaneseq
      %v2274 = vshrl.u32 %v2273, 7
      %v2275 = vsub.s32 %v2272, %v2274
      %v2276 = vrot.slane %v2260, %v2275
      %v2278 = vunpack.c.l.s4 1983009808
      %v2279 = vunpack.c.0.s8 %v2278
      %v2280 = vlaneseq
      %v2281 = vshrl.u32 %v2280, 7
      %v2282 = vsub.s32 %v2279, %v2281
      %v2283 = vrot.slane %v2261, %v2282
      %v2285 = vunpack.c.l.s4 1983009808
      %v2286 = vunpack.c.0.s8 %v2285
      %v2287 = vlaneseq
      %v2288 = vshrl.u32 %v2287, 7
      %v2289 = vsub.s32 %v2286, %v2288
      %v2290 = vrot.slane %v2262, %v2289
      %v2291 = vcombine.low %v2269, %v2283
      %v2292 = vcombine.high %v2269, %v2283
      %v2293 = vcombine.low %v2276, %v2290
      %v2294 = vcombine.high %v2276, %v2290
      %v2295 = vcombine.low %v2003, %v2004
      %v2296 = vcombine.high %v2003, %v2004
      %v2297 = vcombine.low %v2021, %v2022
      %v2298 = vcombine.high %v2021, %v2022
      %v2300 = vunpack.c.l.s4 1983009808
      %v2301 = vunpack.c.0.s8 %v2300
      %v2302 = vlaneseq
      %v2303 = vshrl.u32 %v2302, 7
      %v2304 = vsub.s32 %v2301, %v2303
      %v2305 = vrot.slane %v2295, %v2304
      %v2307 = vunpack.c.l.s4 1983009808
      %v2308 = vunpack.c.0.s8 %v2307
      %v2309 = vlaneseq
      %v2310 = vshrl.u32 %v2309, 7
      %v2311 = vsub.s32 %v2308, %v2310
      %v2312 = vrot.slane %v2296, %v2311
      %v2314 = vunpack.c.l.s4 1983009808
      %v2315 = vunpack.c.0.s8 %v2314
      %v2316 = vlaneseq
      %v2317 = vshrl.u32 %v2316, 7
      %v2318 = vsub.s32 %v2315, %v2317
      %v2319 = vrot.slane %v2297, %v2318
      %v2321 = vunpack.c.l.s4 1983009808
      %v2322 = vunpack.c.0.s8 %v2321
      %v2323 = vlaneseq
      %v2324 = vshrl.u32 %v2323, 7
      %v2325 = vsub.s32 %v2322, %v2324
      %v2326 = vrot.slane %v2298, %v2325
      %v2327 = vcombine.low %v2305, %v2319
      %v2328 = vcombine.high %v2305, %v2319
      %v2329 = vcombine.low %v2312, %v2326
      %v2330 = vcombine.high %v2312, %v2326
      %v2331 = vcombine.low %v2023, %v2040
      %v2332 = vcombine.high %v2023, %v2040
      %v2333 = vcombine.low %v2041, %v2042
      %v2334 = vcombine.high %v2041, %v2042
      %v2336 = vunpack.c.l.s4 1983009808
      %v2337 = vunpack.c.0.s8 %v2336
      %v2338 = vlaneseq
      %v2339 = vshrl.u32 %v2338, 7
      %v2340 = vsub.s32 %v2337, %v2339
      %v2341 = vrot.slane %v2331, %v2340
      %v2343 = vunpack.c.l.s4 1983009808
      %v2344 = vunpack.c.0.s8 %v2343
      %v2345 = vlaneseq
      %v2346 = vshrl.u32 %v2345, 7
      %v2347 = vsub.s32 %v2344, %v2346
      %v2348 = vrot.slane %v2332, %v2347
      %v2350 = vunpack.c.l.s4 1983009808
      %v2351 = vunpack.c.0.s8 %v2350
      %v2352 = vlaneseq
      %v2353 = vshrl.u32 %v2352, 7
      %v2354 = vsub.s32 %v2351, %v2353
      %v2355 = vrot.slane %v2333, %v2354
      %v2357 = vunpack.c.l.s4 1983009808
      %v2358 = vunpack.c.0.s8 %v2357
      %v2359 = vlaneseq
      %v2360 = vshrl.u32 %v2359, 7
      %v2361 = vsub.s32 %v2358, %v2360
      %v2362 = vrot.slane %v2334, %v2361
      %v2363 = vcombine.low %v2341, %v2355
      %v2364 = vcombine.high %v2341, %v2355
      %v2365 = vcombine.low %v2348, %v2362
      %v2366 = vcombine.high %v2348, %v2362
      %v2403 = vpack.c.bf16 %v2111, %v2075
      %v2404 = vpack.c.bf16 %v2112, %v2076
      %v2405 = vpack.c.bf16 %v2113, %v2077
      %v2406 = vpack.c.bf16 %v2114, %v2078
      %v2407 = vpack.c.bf16 %v2183, %v2147
      %v2408 = vpack.c.bf16 %v2184, %v2148
      %v2409 = vpack.c.bf16 %v2185, %v2149
      %v2410 = vpack.c.bf16 %v2186, %v2150
      %v2411 = vpack.c.bf16 %v2255, %v2219
      %v2412 = vpack.c.bf16 %v2256, %v2220
      %v2413 = vpack.c.bf16 %v2257, %v2221
      %v2414 = vpack.c.bf16 %v2258, %v2222
      %v2415 = vpack.c.bf16 %v2327, %v2291
      %v2416 = vpack.c.bf16 %v2328, %v2292
      %v2417 = vpack.c.bf16 %v2329, %v2293
      %v2418 = vpack.c.bf16 %v2330, %v2294
      %v2419 = vpack.c.bf16 %v2363, %v2363
      %v2420 = vpack.c.bf16 %v2364, %v2364
      %v2421 = vpack.c.bf16 %v2365, %v2365
      %v2422 = vpack.c.bf16 %v2366, %v2366
      %v2423 = vld [vmem:[%s423] sm:$0xf]
      %v2424 = vld [vmem:[%s423 + $0x4] sm:$0xf]
      %v2425 = vld [vmem:[%s423 + $0x8] sm:$0xf]
      %v2426 = vld [vmem:[%s423 + $0xc] sm:$0xf]
      %v2427 = vld [vmem:[%s423 + $0x10] sm:$0xf]
      %v2428 = vld [vmem:[%s423 + $0x14] sm:$0xf]
      %v2429 = vld [vmem:[%s423 + $0x18] sm:$0xf]
      %v2430 = vld [vmem:[%s423 + $0x1c] sm:$0xf]
      %v2431 = vld [vmem:[%s423 + $0x20] sm:$0xf]
      %v2432 = vld [vmem:[%s423 + $0x24] sm:$0xf]
      %v2433 = vld [vmem:[%s423 + $0x28] sm:$0xf]
      %v2434 = vld [vmem:[%s423 + $0x2c] sm:$0xf]
      %v2435 = vld [vmem:[%s423 + $0x30] sm:$0xf]
      %v2436 = vld [vmem:[%s423 + $0x34] sm:$0xf]
      %v2437 = vld [vmem:[%s423 + $0x38] sm:$0xf]
      %v2438 = vld [vmem:[%s423 + $0x3c] sm:$0xf]
      %v2439 = vld [vmem:[%s423 + $0x40] sm:$0xf]
      %v2440 = vld [vmem:[%s423 + $0x44] sm:$0xf]
      %v2441 = vld [vmem:[%s423 + $0x48] sm:$0xf]
      %v2442 = vld [vmem:[%s423 + $0x4c] sm:$0xf]
      %v2443 = vld [vmem:[%s423 + $0x50] sm:$0xf]
      %v2444 = vld [vmem:[%s423 + $0x54] sm:$0xf]
      %v2445 = vld [vmem:[%s423 + $0x58] sm:$0xf]
      %v2446 = vld [vmem:[%s423 + $0x5c] sm:$0xf]
      %v2447 = vld [vmem:[%s423 + $0x60] sm:$0xf]
      %v2448 = vld [vmem:[%s423 + $0x64] sm:$0xf]
      %v2449 = vld [vmem:[%s423 + $0x68] sm:$0xf]
      %v2450 = vld [vmem:[%s423 + $0x6c] sm:$0xf]
      %v2451 = vld [vmem:[%s423 + $0x70] sm:$0xf]
      %v2452 = vld [vmem:[%s423 + $0x74] sm:$0xf]
      %v2453 = vld [vmem:[%s423 + $0x78] sm:$0xf]
      %v2454 = vld [vmem:[%s423 + $0x7c] sm:$0xf]
      %v2455 = vld [vmem:[%s423 + $0x80] sm:$0xf]
      %v2456 = vld [vmem:[%s423 + $0x84] sm:$0xf]
      %v2457 = vld [vmem:[%s423 + $0x88] sm:$0xf]
      %v2458 = vld [vmem:[%s423 + $0x8c] sm:$0xf]
      %v2459 = vld [vmem:[%s423 + $0x90] sm:$0xf]
      %v2460 = vld [vmem:[%s423 + $0x94] sm:$0xf]
      %v2461 = vld [vmem:[%s423 + $0x98] sm:$0xf]
      %v2462 = vld [vmem:[%s423 + $0x9c] sm:$0xf]
      %v2463 = vld [vmem:[%s423 + $0xa0] sm:$0xf]
      %v2464 = vld [vmem:[%s423 + $0xa4] sm:$0xf]
      %v2465 = vld [vmem:[%s423 + $0xa8] sm:$0xf]
      %v2466 = vld [vmem:[%s423 + $0xac] sm:$0xf]
      %v2467 = vld [vmem:[%s423 + $0xb0] sm:$0xf]
      %v2468 = vld [vmem:[%s423 + $0xb4] sm:$0xf]
      %v2469 = vld [vmem:[%s423 + $0xb8] sm:$0xf]
      %v2470 = vld [vmem:[%s423 + $0xbc] sm:$0xf]
      %v2471 = vld [vmem:[%s423 + $0xc0] sm:$0xf]
      %v2472 = vld [vmem:[%s423 + $0xc4] sm:$0xf]
      %v2473 = vld [vmem:[%s423 + $0xc8] sm:$0xf]
      %v2474 = vld [vmem:[%s423 + $0xcc] sm:$0xf]
      %v2475 = vld [vmem:[%s423 + $0xd0] sm:$0xf]
      %v2476 = vld [vmem:[%s423 + $0xd4] sm:$0xf]
      %v2477 = vld [vmem:[%s423 + $0xd8] sm:$0xf]
      %v2478 = vld [vmem:[%s423 + $0xdc] sm:$0xf]
      %v2479 = vld [vmem:[%s423 + $0xe0] sm:$0xf]
      %v2480 = vld [vmem:[%s423 + $0xe4] sm:$0xf]
      %v2481 = vld [vmem:[%s423 + $0xe8] sm:$0xf]
      %v2482 = vld [vmem:[%s423 + $0xec] sm:$0xf]
      %v2483 = vld [vmem:[%s423 + $0xf0] sm:$0xf]
      %v2484 = vld [vmem:[%s423 + $0xf4] sm:$0xf]
      %v2485 = vld [vmem:[%s423 + $0xf8] sm:$0xf]
      %v2486 = vld [vmem:[%s423 + $0xfc] sm:$0xf]
      %v2487 = vld [vmem:[%s426] sm:$0x1]
      %v2489 = vlaneseq
      %v2490 = vshrl.u32 %v2489, 7
      %v2491 = vsub.s32 0, %v2490
      %v2492 = vrot.slane %v2487, %v2491
      %v2558 = vunpack.c.l.b16 %v2423
      %v2559 = vunpack.c.l.b16 %v2424
      %v2560 = vunpack.c.l.b16 %v2425
      %v2561 = vunpack.c.l.b16 %v2426
      %v2562 = vunpack.c.l.b16 %v2427
      %v2563 = vunpack.c.l.b16 %v2428
      %v2564 = vunpack.c.l.b16 %v2429
      %v2565 = vunpack.c.l.b16 %v2430
      %v2566 = vunpack.c.l.b16 %v2431
      %v2567 = vunpack.c.l.b16 %v2432
      %v2568 = vunpack.c.l.b16 %v2433
      %v2569 = vunpack.c.l.b16 %v2434
      %v2570 = vunpack.c.l.b16 %v2435
      %v2571 = vunpack.c.l.b16 %v2436
      %v2572 = vunpack.c.l.b16 %v2437
      %v2573 = vunpack.c.l.b16 %v2438
      %v2574 = vunpack.c.l.b16 %v2439
      %v2575 = vunpack.c.l.b16 %v2440
      %v2576 = vunpack.c.l.b16 %v2441
      %v2577 = vunpack.c.l.b16 %v2442
      %v2578 = vunpack.c.l.b16 %v2443
      %v2579 = vunpack.c.l.b16 %v2444
      %v2580 = vunpack.c.l.b16 %v2445
      %v2581 = vunpack.c.l.b16 %v2446
      %v2582 = vunpack.c.l.b16 %v2447
      %v2583 = vunpack.c.l.b16 %v2448
      %v2584 = vunpack.c.l.b16 %v2449
      %v2585 = vunpack.c.l.b16 %v2450
      %v2586 = vunpack.c.l.b16 %v2451
      %v2587 = vunpack.c.l.b16 %v2452
      %v2588 = vunpack.c.l.b16 %v2453
      %v2589 = vunpack.c.l.b16 %v2454
      %v2590 = vunpack.c.l.b16 %v2455
      %v2591 = vunpack.c.l.b16 %v2456
      %v2592 = vunpack.c.l.b16 %v2457
      %v2593 = vunpack.c.l.b16 %v2458
      %v2594 = vunpack.c.l.b16 %v2459
      %v2595 = vunpack.c.l.b16 %v2460
      %v2596 = vunpack.c.l.b16 %v2461
      %v2597 = vunpack.c.l.b16 %v2462
      %v2598 = vunpack.c.l.b16 %v2463
      %v2599 = vunpack.c.l.b16 %v2464
      %v2600 = vunpack.c.l.b16 %v2465
      %v2601 = vunpack.c.l.b16 %v2466
      %v2602 = vunpack.c.l.b16 %v2467
      %v2603 = vunpack.c.l.b16 %v2468
      %v2604 = vunpack.c.l.b16 %v2469
      %v2605 = vunpack.c.l.b16 %v2470
      %v2606 = vunpack.c.l.b16 %v2471
      %v2607 = vunpack.c.l.b16 %v2472
      %v2608 = vunpack.c.l.b16 %v2473
      %v2609 = vunpack.c.l.b16 %v2474
      %v2610 = vunpack.c.l.b16 %v2475
      %v2611 = vunpack.c.l.b16 %v2476
      %v2612 = vunpack.c.l.b16 %v2477
      %v2613 = vunpack.c.l.b16 %v2478
      %v2614 = vunpack.c.l.b16 %v2479
      %v2615 = vunpack.c.l.b16 %v2480
      %v2616 = vunpack.c.l.b16 %v2481
      %v2617 = vunpack.c.l.b16 %v2482
      %v2618 = vunpack.c.l.b16 %v2483
      %v2619 = vunpack.c.l.b16 %v2484
      %v2620 = vunpack.c.l.b16 %v2485
      %v2621 = vunpack.c.l.b16 %v2486
      %v2622 = vpack.c.b16 %v2559, %v2558
      %v2623 = vpack.c.b16 %v2561, %v2560
      %v2624 = vpack.c.b16 %v2563, %v2562
      %v2625 = vpack.c.b16 %v2565, %v2564
      %v2626 = vpack.c.b16 %v2567, %v2566
      %v2627 = vpack.c.b16 %v2569, %v2568
      %v2628 = vpack.c.b16 %v2571, %v2570
      %v2629 = vpack.c.b16 %v2573, %v2572
      %v2630 = vpack.c.b16 %v2575, %v2574
      %v2631 = vpack.c.b16 %v2577, %v2576
      %v2632 = vpack.c.b16 %v2579, %v2578
      %v2633 = vpack.c.b16 %v2581, %v2580
      %v2634 = vpack.c.b16 %v2583, %v2582
      %v2635 = vpack.c.b16 %v2585, %v2584
      %v2636 = vpack.c.b16 %v2587, %v2586
      %v2637 = vpack.c.b16 %v2589, %v2588
      %v2638 = vpack.c.b16 %v2591, %v2590
      %v2639 = vpack.c.b16 %v2593, %v2592
      %v2640 = vpack.c.b16 %v2595, %v2594
      %v2641 = vpack.c.b16 %v2597, %v2596
      %v2642 = vpack.c.b16 %v2599, %v2598
      %v2643 = vpack.c.b16 %v2601, %v2600
      %v2644 = vpack.c.b16 %v2603, %v2602
      %v2645 = vpack.c.b16 %v2605, %v2604
      %v2646 = vpack.c.b16 %v2607, %v2606
      %v2647 = vpack.c.b16 %v2609, %v2608
      %v2648 = vpack.c.b16 %v2611, %v2610
      %v2649 = vpack.c.b16 %v2613, %v2612
      %v2650 = vpack.c.b16 %v2615, %v2614
      %v2651 = vpack.c.b16 %v2617, %v2616
      %v2652 = vpack.c.b16 %v2619, %v2618
      %v2653 = vpack.c.b16 %v2621, %v2620
      %2686 = vmatprep.subr.bf16.mxu0 0
      %2687 = vmatpush1.bf16.msra.mxu0 %v2622
      %2688 = vmatprep.subr.bf16.mxu0 0
      %2689 = vmatpush1.bf16.msra.mxu0 %v2623
      %2690 = vmatprep.subr.bf16.mxu0 0
      %2691 = vmatpush1.bf16.msra.mxu0 %v2624
      %2692 = vmatprep.subr.bf16.mxu0 0
      %2693 = vmatpush1.bf16.msra.mxu0 %v2625
      %2694 = vmatprep.subr.bf16.mxu0 0
      %2695 = vmatpush1.bf16.msra.mxu0 %v2626
      %2696 = vmatprep.subr.bf16.mxu0 0
      %2697 = vmatpush1.bf16.msra.mxu0 %v2627
      %2698 = vmatprep.subr.bf16.mxu0 0
      %2699 = vmatpush1.bf16.msra.mxu0 %v2628
      %2700 = vmatprep.subr.bf16.mxu0 0
      %2701 = vmatpush1.bf16.msra.mxu0 %v2629
      %2702 = vmatprep.subr.bf16.mxu0 0
      %2703 = vmatpush1.bf16.msra.mxu0 %v2630
      %2704 = vmatprep.subr.bf16.mxu0 0
      %2705 = vmatpush1.bf16.msra.mxu0 %v2631
      %2706 = vmatprep.subr.bf16.mxu0 0
      %2707 = vmatpush1.bf16.msra.mxu0 %v2632
      %2708 = vmatprep.subr.bf16.mxu0 0
      %2709 = vmatpush1.bf16.msra.mxu0 %v2633
      %2710 = vmatprep.subr.bf16.mxu0 0
      %2711 = vmatpush1.bf16.msra.mxu0 %v2634
      %2712 = vmatprep.subr.bf16.mxu0 0
      %2713 = vmatpush1.bf16.msra.mxu0 %v2635
      %2714 = vmatprep.subr.bf16.mxu0 0
      %2715 = vmatpush1.bf16.msra.mxu0 %v2636
      %2716 = vmatprep.subr.bf16.mxu0 0
      %2717 = vmatpush1.bf16.msra.mxu0 %v2637
      %2718 = vmatprep.mubr.bf16.mxu0 %v2404
      %2719 = vmatmul.mubr.bf16.gmra.mrb[0].mxu0 %v2403
      %v2720 = vpop.f32.mrb[0].mxu0
      %v2721 = vadd.f32 %v2492, %v2720
      %v2722 = vpop.f32.mrb[0].mxu0
      %v2723 = vpop.f32.mrb[0].mxu0
      %v2724 = vadd.f32 %v2492, %v2723
      %v2725 = vpop.f32.mrb[0].mxu0
      %2726 = vmatprep.mubr.bf16.mxu0 %v2408
      %2727 = vmatmul.mubr.bf16.gmra.mrb[0].mxu0 %v2407
      %v2728 = vpop.f32.mrb[0].mxu0
      %v2729 = vadd.f32 %v2492, %v2728
      %v2730 = vpop.f32.mrb[0].mxu0
      %v2731 = vpop.f32.mrb[0].mxu0
      %v2732 = vadd.f32 %v2492, %v2731
      %v2733 = vpop.f32.mrb[0].mxu0
      %2734 = vmatprep.mubr.bf16.mxu0 %v2412
      %2735 = vmatmul.mubr.bf16.gmra.mrb[0].mxu0 %v2411
      %v2736 = vpop.f32.mrb[0].mxu0
      %v2737 = vadd.f32 %v2492, %v2736
      %v2738 = vpop.f32.mrb[0].mxu0
      %v2739 = vpop.f32.mrb[0].mxu0
      %v2740 = vadd.f32 %v2492, %v2739
      %v2741 = vpop.f32.mrb[0].mxu0
      %2742 = vmatprep.mubr.bf16.mxu0 %v2416
      %2743 = vmatmul.mubr.bf16.gmra.mrb[0].mxu0 %v2415
      %v2744 = vpop.f32.mrb[0].mxu0
      %v2745 = vadd.f32 %v2492, %v2744
      %v2746 = vpop.f32.mrb[0].mxu0
      %v2747 = vpop.f32.mrb[0].mxu0
      %v2748 = vadd.f32 %v2492, %v2747
      %v2749 = vpop.f32.mrb[0].mxu0
      %2750 = vmatprep.mubr.bf16.mxu0 %v2420
      %2751 = vmatmul.mubr.bf16.gmra.mrb[0].mxu0 %v2419
      %v2752 = vpop.f32.mrb[0].mxu0
      %v2753 = vadd.f32 %v2492, %v2752
      %v2754 = vpop.f32.mrb[0].mxu0
      %v2755 = vpop.f32.mrb[0].mxu0
      %v2756 = vpop.f32.mrb[0].mxu0
      %2757 = vdwg.mxu0
      %2758 = vmatprep.subr.bf16.mxu0 0
      %2759 = vmatpush1.bf16.msra.mxu0 %v2638
      %2760 = vmatprep.subr.bf16.mxu0 0
      %2761 = vmatpush1.bf16.msra.mxu0 %v2639
      %2762 = vmatprep.subr.bf16.mxu0 0
      %2763 = vmatpush1.bf16.msra.mxu0 %v2640
      %2764 = vmatprep.subr.bf16.mxu0 0
      %2765 = vmatpush1.bf16.msra.mxu0 %v2641
      %2766 = vmatprep.subr.bf16.mxu0 0
      %2767 = vmatpush1.bf16.msra.mxu0 %v2642
      %2768 = vmatprep.subr.bf16.mxu0 0
      %2769 = vmatpush1.bf16.msra.mxu0 %v2643
      %2770 = vmatprep.subr.bf16.mxu0 0
      %2771 = vmatpush1.bf16.msra.mxu0 %v2644
      %2772 = vmatprep.subr.bf16.mxu0 0
      %2773 = vmatpush1.bf16.msra.mxu0 %v2645
      %2774 = vmatprep.subr.bf16.mxu0 0
      %2775 = vmatpush1.bf16.msra.mxu0 %v2646
      %2776 = vmatprep.subr.bf16.mxu0 0
      %2777 = vmatpush1.bf16.msra.mxu0 %v2647
      %2778 = vmatprep.subr.bf16.mxu0 0
      %2779 = vmatpush1.bf16.msra.mxu0 %v2648
      %2780 = vmatprep.subr.bf16.mxu0 0
      %2781 = vmatpush1.bf16.msra.mxu0 %v2649
      %2782 = vmatprep.subr.bf16.mxu0 0
      %2783 = vmatpush1.bf16.msra.mxu0 %v2650
      %2784 = vmatprep.subr.bf16.mxu0 0
      %2785 = vmatpush1.bf16.msra.mxu0 %v2651
      %2786 = vmatprep.subr.bf16.mxu0 0
      %2787 = vmatpush1.bf16.msra.mxu0 %v2652
      %2788 = vmatprep.subr.bf16.mxu0 0
      %2789 = vmatpush1.bf16.msra.mxu0 %v2653
      %2790 = vmatprep.mubr.bf16.mxu0 %v2406
      %2791 = vmatmul.mubr.bf16.gmra.mrb[0].mxu0 %v2405
      %v2792 = vpop.f32.mrb[0].mxu0
      %v2793 = vadd.f32 %v2721, %v2792
      %v2794 = vpop.f32.mrb[0].mxu0
      %v2795 = vpop.f32.mrb[0].mxu0
      %v2796 = vadd.f32 %v2724, %v2795
      %v2797 = vpop.f32.mrb[0].mxu0
      %2798 = vmatprep.mubr.bf16.mxu0 %v2410
      %2799 = vmatmul.mubr.bf16.gmra.mrb[0].mxu0 %v2409
      %v2800 = vpop.f32.mrb[0].mxu0
      %v2801 = vadd.f32 %v2729, %v2800
      %v2802 = vpop.f32.mrb[0].mxu0
      %v2803 = vpop.f32.mrb[0].mxu0
      %v2804 = vadd.f32 %v2732, %v2803
      %v2805 = vpop.f32.mrb[0].mxu0
      %2806 = vmatprep.mubr.bf16.mxu0 %v2414
      %2807 = vmatmul.mubr.bf16.gmra.mrb[0].mxu0 %v2413
      %v2808 = vpop.f32.mrb[0].mxu0
      %v2809 = vadd.f32 %v2737, %v2808
      %v2810 = vpop.f32.mrb[0].mxu0
      %v2811 = vpop.f32.mrb[0].mxu0
      %v2812 = vadd.f32 %v2740, %v2811
      %v2813 = vpop.f32.mrb[0].mxu0
      %2814 = vmatprep.mubr.bf16.mxu0 %v2418
      %2815 = vmatmul.mubr.bf16.gmra.mrb[0].mxu0 %v2417
      %v2816 = vpop.f32.mrb[0].mxu0
      %v2817 = vadd.f32 %v2745, %v2816
      %v2818 = vpop.f32.mrb[0].mxu0
      %v2819 = vpop.f32.mrb[0].mxu0
      %v2820 = vadd.f32 %v2748, %v2819
      %v2821 = vpop.f32.mrb[0].mxu0
      %2822 = vmatprep.mubr.bf16.mxu0 %v2422
      %2823 = vmatmul.mubr.bf16.gmra.mrb[0].mxu0 %v2421
      %v2824 = vpop.f32.mrb[0].mxu0
      %v2825 = vadd.f32 %v2753, %v2824
      %v2826 = vpop.f32.mrb[0].mxu0
      %v2827 = vpop.f32.mrb[0].mxu0
      %v2828 = vpop.f32.mrb[0].mxu0
      %2829 = vdwg.mxu0
      %v2830 = vmax.f32 %v2793, 0.0
      %v2831 = vmax.f32 %v2796, 0.0
      %v2832 = vmax.f32 %v2801, 0.0
      %v2833 = vmax.f32 %v2804, 0.0
      %v2834 = vmax.f32 %v2809, 0.0
      %v2835 = vmax.f32 %v2812, 0.0
      %v2836 = vmax.f32 %v2817, 0.0
      %v2837 = vmax.f32 %v2820, 0.0
      %v2838 = vmax.f32 %v2825, 0.0
      %v2848 = vcombine.high %v2830, %v2830
      %v2850 = vunpack.c.l.s4 1983009808
      %v2851 = vunpack.c.0.s8 %v2850
      %v2852 = vlaneseq
      %v2853 = vshrl.u32 %v2852, 7
      %v2854 = vsub.s32 %v2851, %v2853
      %v2855 = vrot.slane %v2830, %v2854
      %v2857 = vunpack.c.l.s4 1983009808
      %v2858 = vunpack.c.0.s8 %v2857
      %v2859 = vlaneseq
      %v2860 = vshrl.u32 %v2859, 7
      %v2861 = vsub.s32 %v2858, %v2860
      %v2862 = vrot.slane %v2848, %v2861
      %v2863 = vcombine.high %v2855, %v2855
      %v2864 = vcombine.high %v2862, %v2862
      %v2865 = vcombine.high %v2831, %v2831
      %v2867 = vunpack.c.l.s4 1983009808
      %v2868 = vunpack.c.0.s8 %v2867
      %v2869 = vlaneseq
      %v2870 = vshrl.u32 %v2869, 7
      %v2871 = vsub.s32 %v2868, %v2870
      %v2872 = vrot.slane %v2831, %v2871
      %v2874 = vunpack.c.l.s4 1983009808
      %v2875 = vunpack.c.0.s8 %v2874
      %v2876 = vlaneseq
      %v2877 = vshrl.u32 %v2876, 7
      %v2878 = vsub.s32 %v2875, %v2877
      %v2879 = vrot.slane %v2865, %v2878
      %v2880 = vcombine.high %v2872, %v2872
      %v2881 = vcombine.high %v2879, %v2879
      %v2882 = vcombine.high %v2832, %v2832
      %v2884 = vunpack.c.l.s4 1983009808
      %v2885 = vunpack.c.0.s8 %v2884
      %v2886 = vlaneseq
      %v2887 = vshrl.u32 %v2886, 7
      %v2888 = vsub.s32 %v2885, %v2887
      %v2889 = vrot.slane %v2832, %v2888
      %v2891 = vunpack.c.l.s4 1983009808
      %v2892 = vunpack.c.0.s8 %v2891
      %v2893 = vlaneseq
      %v2894 = vshrl.u32 %v2893, 7
      %v2895 = vsub.s32 %v2892, %v2894
      %v2896 = vrot.slane %v2882, %v2895
      %v2897 = vcombine.high %v2889, %v2889
      %v2898 = vcombine.high %v2896, %v2896
      %v2899 = vcombine.high %v2833, %v2833
      %v2901 = vunpack.c.l.s4 1983009808
      %v2902 = vunpack.c.0.s8 %v2901
      %v2903 = vlaneseq
      %v2904 = vshrl.u32 %v2903, 7
      %v2905 = vsub.s32 %v2902, %v2904
      %v2906 = vrot.slane %v2833, %v2905
      %v2908 = vunpack.c.l.s4 1983009808
      %v2909 = vunpack.c.0.s8 %v2908
      %v2910 = vlaneseq
      %v2911 = vshrl.u32 %v2910, 7
      %v2912 = vsub.s32 %v2909, %v2911
      %v2913 = vrot.slane %v2899, %v2912
      %v2914 = vcombine.high %v2906, %v2906
      %v2915 = vcombine.high %v2913, %v2913
      %v2916 = vcombine.high %v2834, %v2834
      %v2918 = vunpack.c.l.s4 1983009808
      %v2919 = vunpack.c.0.s8 %v2918
      %v2920 = vlaneseq
      %v2921 = vshrl.u32 %v2920, 7
      %v2922 = vsub.s32 %v2919, %v2921
      %v2923 = vrot.slane %v2834, %v2922
      %v2925 = vunpack.c.l.s4 1983009808
      %v2926 = vunpack.c.0.s8 %v2925
      %v2927 = vlaneseq
      %v2928 = vshrl.u32 %v2927, 7
      %v2929 = vsub.s32 %v2926, %v2928
      %v2930 = vrot.slane %v2916, %v2929
      %v2931 = vcombine.high %v2923, %v2923
      %v2932 = vcombine.high %v2930, %v2930
      %v2933 = vcombine.high %v2835, %v2835
      %v2935 = vunpack.c.l.s4 1983009808
      %v2936 = vunpack.c.0.s8 %v2935
      %v2937 = vlaneseq
      %v2938 = vshrl.u32 %v2937, 7
      %v2939 = vsub.s32 %v2936, %v2938
      %v2940 = vrot.slane %v2835, %v2939
      %v2942 = vunpack.c.l.s4 1983009808
      %v2943 = vunpack.c.0.s8 %v2942
      %v2944 = vlaneseq
      %v2945 = vshrl.u32 %v2944, 7
      %v2946 = vsub.s32 %v2943, %v2945
      %v2947 = vrot.slane %v2933, %v2946
      %v2948 = vcombine.high %v2940, %v2940
      %v2949 = vcombine.high %v2947, %v2947
      %v2950 = vcombine.high %v2836, %v2836
      %v2952 = vunpack.c.l.s4 1983009808
      %v2953 = vunpack.c.0.s8 %v2952
      %v2954 = vlaneseq
      %v2955 = vshrl.u32 %v2954, 7
      %v2956 = vsub.s32 %v2953, %v2955
      %v2957 = vrot.slane %v2836, %v2956
      %v2959 = vunpack.c.l.s4 1983009808
      %v2960 = vunpack.c.0.s8 %v2959
      %v2961 = vlaneseq
      %v2962 = vshrl.u32 %v2961, 7
      %v2963 = vsub.s32 %v2960, %v2962
      %v2964 = vrot.slane %v2950, %v2963
      %v2965 = vcombine.high %v2957, %v2957
      %v2966 = vcombine.high %v2964, %v2964
      %v2967 = vcombine.high %v2837, %v2837
      %v2969 = vunpack.c.l.s4 1983009808
      %v2970 = vunpack.c.0.s8 %v2969
      %v2971 = vlaneseq
      %v2972 = vshrl.u32 %v2971, 7
      %v2973 = vsub.s32 %v2970, %v2972
      %v2974 = vrot.slane %v2837, %v2973
      %v2976 = vunpack.c.l.s4 1983009808
      %v2977 = vunpack.c.0.s8 %v2976
      %v2978 = vlaneseq
      %v2979 = vshrl.u32 %v2978, 7
      %v2980 = vsub.s32 %v2977, %v2979
      %v2981 = vrot.slane %v2967, %v2980
      %v2982 = vcombine.high %v2974, %v2974
      %v2983 = vcombine.high %v2981, %v2981
      %v2984 = vcombine.high %v2838, %v2838
      %v2986 = vunpack.c.l.s4 1983009808
      %v2987 = vunpack.c.0.s8 %v2986
      %v2988 = vlaneseq
      %v2989 = vshrl.u32 %v2988, 7
      %v2990 = vsub.s32 %v2987, %v2989
      %v2991 = vrot.slane %v2838, %v2990
      %v2993 = vunpack.c.l.s4 1983009808
      %v2994 = vunpack.c.0.s8 %v2993
      %v2995 = vlaneseq
      %v2996 = vshrl.u32 %v2995, 7
      %v2997 = vsub.s32 %v2994, %v2996
      %v2998 = vrot.slane %v2984, %v2997
      %v2999 = vcombine.high %v2991, %v2991
      %v3000 = vcombine.high %v2998, %v2998
      %v3001 = vcombine.low %v2855, %v2863
      %v3003 = vunpack.c.l.s4 1983009808
      %v3004 = vunpack.c.0.s8 %v3003
      %v3005 = vlaneseq
      %v3006 = vshrl.u32 %v3005, 7
      %v3007 = vsub.s32 %v3004, %v3006
      %v3008 = vrot.slane %v3001, %v3007
      %v3009 = vcombine.low %v2864, %v2872
      %v3011 = vunpack.c.l.s4 1983009808
      %v3012 = vunpack.c.0.s8 %v3011
      %v3013 = vlaneseq
      %v3014 = vshrl.u32 %v3013, 7
      %v3015 = vsub.s32 %v3012, %v3014
      %v3016 = vrot.slane %v3009, %v3015
      %v3017 = vcombine.low %v2879, %v2881
      %v3019 = vunpack.c.l.s4 1983009808
      %v3020 = vunpack.c.0.s8 %v3019
      %v3021 = vlaneseq
      %v3022 = vshrl.u32 %v3021, 7
      %v3023 = vsub.s32 %v3020, %v3022
      %v3024 = vrot.slane %v3017, %v3023
      %v3025 = vcombine.low %v2897, %v2896
      %v3027 = vunpack.c.l.s4 1983009808
      %v3028 = vunpack.c.0.s8 %v3027
      %v3029 = vlaneseq
      %v3030 = vshrl.u32 %v3029, 7
      %v3031 = vsub.s32 %v3028, %v3030
      %v3032 = vrot.slane %v3025, %v3031
      %v3033 = vcombine.low %v2930, %v2932
      %v3035 = vunpack.c.l.s4 1983009808
      %v3036 = vunpack.c.0.s8 %v3035
      %v3037 = vlaneseq
      %v3038 = vshrl.u32 %v3037, 7
      %v3039 = vsub.s32 %v3036, %v3038
      %v3040 = vrot.slane %v3033, %v3039
      %v3041 = vcombine.low %v2948, %v2947
      %v3043 = vunpack.c.l.s4 1983009808
      %v3044 = vunpack.c.0.s8 %v3043
      %v3045 = vlaneseq
      %v3046 = vshrl.u32 %v3045, 7
      %v3047 = vsub.s32 %v3044, %v3046
      %v3048 = vrot.slane %v3041, %v3047
      %v3049 = vcombine.low %v2957, %v2965
      %v3051 = vunpack.c.l.s4 1983009808
      %v3052 = vunpack.c.0.s8 %v3051
      %v3053 = vlaneseq
      %v3054 = vshrl.u32 %v3053, 7
      %v3055 = vsub.s32 %v3052, %v3054
      %v3056 = vrot.slane %v3049, %v3055
      %v3057 = vcombine.low %v2966, %v2974
      %v3059 = vunpack.c.l.s4 1983009808
      %v3060 = vunpack.c.0.s8 %v3059
      %v3061 = vlaneseq
      %v3062 = vshrl.u32 %v3061, 7
      %v3063 = vsub.s32 %v3060, %v3062
      %v3064 = vrot.slane %v3057, %v3063
      %v3074 = vunpack.c.l.s4 1983009808
      %v3075 = vunpack.c.0.s8 %v3074
      %v3076 = vlaneseq
      %v3077 = vshrl.u32 %v3076, 7
      %v3078 = vsub.s32 %v3075, %v3077
      %v3079 = vrot.slane %v2862, %v3078
      %v3080 = vcombine.low %v3008, %v3079
      %v3082 = vunpack.c.l.s4 1983009808
      %v3083 = vunpack.c.0.s8 %v3082
      %v3084 = vlaneseq
      %v3085 = vshrl.u32 %v3084, 7
      %v3086 = vsub.s32 %v3083, %v3085
      %v3087 = vrot.slane %v2880, %v3086
      %v3088 = vcombine.low %v3016, %v3087
      %v3090 = vunpack.c.l.s4 1983009808
      %v3091 = vunpack.c.0.s8 %v3090
      %v3092 = vlaneseq
      %v3093 = vshrl.u32 %v3092, 7
      %v3094 = vsub.s32 %v3091, %v3093
      %v3095 = vrot.slane %v2889, %v3094
      %v3096 = vcombine.low %v3024, %v3095
      %v3098 = vunpack.c.l.s4 1983009808
      %v3099 = vunpack.c.0.s8 %v3098
      %v3100 = vlaneseq
      %v3101 = vshrl.u32 %v3100, 7
      %v3102 = vsub.s32 %v3099, %v3101
      %v3103 = vrot.slane %v2898, %v3102
      %v3104 = vcombine.low %v3032, %v3103
      %v3106 = vunpack.c.l.s4 1983009808
      %v3107 = vunpack.c.0.s8 %v3106
      %v3108 = vlaneseq
      %v3109 = vshrl.u32 %v3108, 7
      %v3110 = vsub.s32 %v3107, %v3109
      %v3111 = vrot.slane %v2940, %v3110
      %v3112 = vcombine.low %v3040, %v3111
      %v3114 = vunpack.c.l.s4 1983009808
      %v3115 = vunpack.c.0.s8 %v3114
      %v3116 = vlaneseq
      %v3117 = vshrl.u32 %v3116, 7
      %v3118 = vsub.s32 %v3115, %v3117
      %v3119 = vrot.slane %v2949, %v3118
      %v3120 = vcombine.low %v3048, %v3119
      %v3122 = vunpack.c.l.s4 1983009808
      %v3123 = vunpack.c.0.s8 %v3122
      %v3124 = vlaneseq
      %v3125 = vshrl.u32 %v3124, 7
      %v3126 = vsub.s32 %v3123, %v3125
      %v3127 = vrot.slane %v2964, %v3126
      %v3128 = vcombine.low %v3056, %v3127
      %v3130 = vunpack.c.l.s4 1983009808
      %v3131 = vunpack.c.0.s8 %v3130
      %v3132 = vlaneseq
      %v3133 = vshrl.u32 %v3132, 7
      %v3134 = vsub.s32 %v3131, %v3133
      %v3135 = vrot.slane %v2982, %v3134
      %v3136 = vcombine.low %v3064, %v3135
      %v3137 = vrot.slane %v3080, 1
      %v3138 = vrot.slane %v3088, 1
      %v3139 = vrot.slane %v3096, 1
      %v3140 = vrot.slane %v3104, 1
      %v3141 = vrot.slane %v3112, 1
      %v3142 = vrot.slane %v3120, 1
      %v3143 = vrot.slane %v3128, 1
      %v3144 = vrot.slane %v3136, 1
      %3145 = vrot.lane.b32.xlu0 %v3137, 64
      %v3146 = vpop.permute.xlu0 %3145
      %3147 = vrot.lane.b32.xlu0 %v3138, 64
      %v3148 = vpop.permute.xlu0 %3147
      %3149 = vrot.lane.b32.xlu0 %v3139, 64
      %v3150 = vpop.permute.xlu0 %3149
      %3151 = vrot.lane.b32.xlu0 %v3140, 64
      %v3152 = vpop.permute.xlu0 %3151
      %3153 = vrot.lane.b32.xlu0 %v3141, 64
      %v3154 = vpop.permute.xlu0 %3153
      %3155 = vrot.lane.b32.xlu0 %v3142, 64
      %v3156 = vpop.permute.xlu0 %3155
      %3157 = vrot.lane.b32.xlu0 %v3143, 64
      %v3158 = vpop.permute.xlu0 %3157
      %3159 = vrot.lane.b32.xlu0 %v3144, 64
      %v3160 = vpop.permute.xlu0 %3159
      %v3169 = vcombine.low %v2863, %v2862
      %v3171 = vunpack.c.l.s4 1983009808
      %v3172 = vunpack.c.0.s8 %v3171
      %v3173 = vlaneseq
      %v3174 = vshrl.u32 %v3173, 7
      %v3175 = vsub.s32 %v3172, %v3174
      %v3176 = vrot.slane %v3169, %v3175
      %v3177 = vcombine.low %v2872, %v2880
      %v3179 = vunpack.c.l.s4 1983009808
      %v3180 = vunpack.c.0.s8 %v3179
      %v3181 = vlaneseq
      %v3182 = vshrl.u32 %v3181, 7
      %v3183 = vsub.s32 %v3180, %v3182
      %v3184 = vrot.slane %v3177, %v3183
      %v3185 = vcombine.low %v2881, %v2889
      %v3187 = vunpack.c.l.s4 1983009808
      %v3188 = vunpack.c.0.s8 %v3187
      %v3189 = vlaneseq
      %v3190 = vshrl.u32 %v3189, 7
      %v3191 = vsub.s32 %v3188, %v3190
      %v3192 = vrot.slane %v3185, %v3191
      %v3193 = vcombine.low %v2896, %v2898
      %v3195 = vunpack.c.l.s4 1983009808
      %v3196 = vunpack.c.0.s8 %v3195
      %v3197 = vlaneseq
      %v3198 = vshrl.u32 %v3197, 7
      %v3199 = vsub.s32 %v3196, %v3198
      %v3200 = vrot.slane %v3193, %v3199
      %v3201 = vcombine.low %v2932, %v2940
      %v3203 = vunpack.c.l.s4 1983009808
      %v3204 = vunpack.c.0.s8 %v3203
      %v3205 = vlaneseq
      %v3206 = vshrl.u32 %v3205, 7
      %v3207 = vsub.s32 %v3204, %v3206
      %v3208 = vrot.slane %v3201, %v3207
      %v3209 = vcombine.low %v2947, %v2949
      %v3211 = vunpack.c.l.s4 1983009808
      %v3212 = vunpack.c.0.s8 %v3211
      %v3213 = vlaneseq
      %v3214 = vshrl.u32 %v3213, 7
      %v3215 = vsub.s32 %v3212, %v3214
      %v3216 = vrot.slane %v3209, %v3215
      %v3217 = vcombine.low %v2965, %v2964
      %v3219 = vunpack.c.l.s4 1983009808
      %v3220 = vunpack.c.0.s8 %v3219
      %v3221 = vlaneseq
      %v3222 = vshrl.u32 %v3221, 7
      %v3223 = vsub.s32 %v3220, %v3222
      %v3224 = vrot.slane %v3217, %v3223
      %v3225 = vcombine.low %v2974, %v2982
      %v3227 = vunpack.c.l.s4 1983009808
      %v3228 = vunpack.c.0.s8 %v3227
      %v3229 = vlaneseq
      %v3230 = vshrl.u32 %v3229, 7
      %v3231 = vsub.s32 %v3228, %v3230
      %v3232 = vrot.slane %v3225, %v3231
      %v3241 = vcombine.low %v2906, %v2914
      %v3243 = vunpack.c.l.s4 1983009808
      %v3244 = vunpack.c.0.s8 %v3243
      %v3245 = vlaneseq
      %v3246 = vshrl.u32 %v3245, 7
      %v3247 = vsub.s32 %v3244, %v3246
      %v3248 = vrot.slane %v3241, %v3247
      %v3249 = vcombine.low %v2981, %v2983
      %v3251 = vunpack.c.l.s4 1983009808
      %v3252 = vunpack.c.0.s8 %v3251
      %v3253 = vlaneseq
      %v3254 = vshrl.u32 %v3253, 7
      %v3255 = vsub.s32 %v3252, %v3254
      %v3256 = vrot.slane %v3249, %v3255
      %3257 = vrot.lane.b32.xlu0 %v3016, 64
      %v3258 = vpop.permute.xlu0 %3257
      %3259 = vrot.lane.b32.xlu0 %v3024, 64
      %v3260 = vpop.permute.xlu0 %3259
      %3261 = vrot.lane.b32.xlu0 %v3032, 64
      %v3262 = vpop.permute.xlu0 %3261
      %3263 = vrot.lane.b32.xlu0 %v3248, 64
      %v3264 = vpop.permute.xlu0 %3263
      %3265 = vrot.lane.b32.xlu0 %v3048, 64
      %v3266 = vpop.permute.xlu0 %3265
      %3267 = vrot.lane.b32.xlu0 %v3056, 64
      %v3268 = vpop.permute.xlu0 %3267
      %3269 = vrot.lane.b32.xlu0 %v3064, 64
      %v3270 = vpop.permute.xlu0 %3269
      %3271 = vrot.lane.b32.xlu0 %v3256, 64
      %v3272 = vpop.permute.xlu0 %3271
      %v3282 = vunpack.c.l.s4 1983009808
      %v3283 = vunpack.c.0.s8 %v3282
      %v3284 = vlaneseq
      %v3285 = vshrl.u32 %v3284, 7
      %v3286 = vsub.s32 %v3283, %v3285
      %v3287 = vrot.slane %v2913, %v3286
      %v3288 = vcombine.low %v3248, %v3287
      %v3290 = vunpack.c.l.s4 1983009808
      %v3291 = vunpack.c.0.s8 %v3290
      %v3292 = vlaneseq
      %v3293 = vshrl.u32 %v3292, 7
      %v3294 = vsub.s32 %v3291, %v3293
      %v3295 = vrot.slane %v2991, %v3294
      %v3296 = vcombine.low %v3256, %v3295
      %v3297 = vrot.slane %v3288, 1
      %v3298 = vrot.slane %v3296, 1
      %v3307 = vcombine.low %v2914, %v2913
      %v3309 = vunpack.c.l.s4 1983009808
      %v3310 = vunpack.c.0.s8 %v3309
      %v3311 = vlaneseq
      %v3312 = vshrl.u32 %v3311, 7
      %v3313 = vsub.s32 %v3310, %v3312
      %v3314 = vrot.slane %v3307, %v3313
      %v3315 = vcombine.low %v2983, %v2991
      %v3317 = vunpack.c.l.s4 1983009808
      %v3318 = vunpack.c.0.s8 %v3317
      %v3319 = vlaneseq
      %v3320 = vshrl.u32 %v3319, 7
      %v3321 = vsub.s32 %v3318, %v3320
      %v3322 = vrot.slane %v3315, %v3321
      %3323 = vrot.lane.b32.xlu0 %v3184, 64
      %v3324 = vpop.permute.xlu0 %3323
      %3325 = vrot.lane.b32.xlu0 %v3192, 64
      %v3326 = vpop.permute.xlu0 %3325
      %3327 = vrot.lane.b32.xlu0 %v3200, 64
      %v3328 = vpop.permute.xlu0 %3327
      %3329 = vrot.lane.b32.xlu0 %v3314, 64
      %v3330 = vpop.permute.xlu0 %3329
      %3331 = vrot.lane.b32.xlu0 %v3216, 64
      %v3332 = vpop.permute.xlu0 %3331
      %3333 = vrot.lane.b32.xlu0 %v3224, 64
      %v3334 = vpop.permute.xlu0 %3333
      %3335 = vrot.lane.b32.xlu0 %v3232, 64
      %v3336 = vpop.permute.xlu0 %3335
      %3337 = vrot.lane.b32.xlu0 %v3322, 64
      %v3338 = vpop.permute.xlu0 %3337
      %v3347 = vcombine.low %v2915, %v2923
      %v3349 = vunpack.c.l.s4 1983009808
      %v3350 = vunpack.c.0.s8 %v3349
      %v3351 = vlaneseq
      %v3352 = vshrl.u32 %v3351, 7
      %v3353 = vsub.s32 %v3350, %v3352
      %v3354 = vrot.slane %v3347, %v3353
      %v3355 = vcombine.low %v2999, %v2998
      %v3357 = vunpack.c.l.s4 1983009808
      %v3358 = vunpack.c.0.s8 %v3357
      %v3359 = vlaneseq
      %v3360 = vshrl.u32 %v3359, 7
      %v3361 = vsub.s32 %v3358, %v3360
      %v3362 = vrot.slane %v3355, %v3361
      %v3368 = vunpack.c.l.s4 1983009808
      %v3369 = vunpack.c.0.s8 %v3368
      %v3370 = vlaneseq
      %v3371 = vshrl.u32 %v3370, 7
      %v3372 = vsub.s32 %v3369, %v3371
      %v3373 = vrot.slane %v2931, %v3372
      %v3374 = vcombine.low %v3354, %v3373
      %v3376 = vunpack.c.l.s4 1983009808
      %v3377 = vunpack.c.0.s8 %v3376
      %v3378 = vlaneseq
      %v3379 = vshrl.u32 %v3378, 7
      %v3380 = vsub.s32 %v3377, %v3379
      %v3381 = vrot.slane %v3000, %v3380
      %v3382 = vcombine.low %v3362, %v3381
      %v3383 = vrot.slane %v3374, 1
      %v3384 = vrot.slane %v3382, 1
      %3385 = vrot.lane.b32.xlu0 %v3297, 64
      %v3386 = vpop.permute.xlu0 %3385
      %3387 = vrot.lane.b32.xlu0 %v3383, 64
      %v3388 = vpop.permute.xlu0 %3387
      %3389 = vrot.lane.b32.xlu0 %v3298, 64
      %v3390 = vpop.permute.xlu0 %3389
      %3391 = vrot.lane.b32.xlu0 %v3384, 64
      %v3392 = vpop.permute.xlu0 %3391
      %v3397 = vcombine.low %v2923, %v2931
      %v3399 = vunpack.c.l.s4 1983009808
      %v3400 = vunpack.c.0.s8 %v3399
      %v3401 = vlaneseq
      %v3402 = vshrl.u32 %v3401, 7
      %v3403 = vsub.s32 %v3400, %v3402
      %v3404 = vrot.slane %v3397, %v3403
      %v3405 = vcombine.low %v2998, %v3000
      %v3407 = vunpack.c.l.s4 1983009808
      %v3408 = vunpack.c.0.s8 %v3407
      %v3409 = vlaneseq
      %v3410 = vshrl.u32 %v3409, 7
      %v3411 = vsub.s32 %v3408, %v3410
      %v3412 = vrot.slane %v3405, %v3411
      %v3413 = vsel %vm1681, %v3008, %v3146
      %v3414 = vsel %vm1681, %v3016, %v3148
      %v3415 = vsel %vm1681, %v3024, %v3150
      %v3416 = vsel %vm1681, %v3032, %v3152
      %v3417 = vsel %vm1681, %v3040, %v3154
      %v3418 = vsel %vm1681, %v3048, %v3156
      %v3419 = vsel %vm1681, %v3056, %v3158
      %v3420 = vsel %vm1681, %v3064, %v3160
      %v3421 = vsel %vm1681, %v3176, %v3258
      %v3422 = vsel %vm1681, %v3184, %v3260
      %v3423 = vsel %vm1681, %v3192, %v3262
      %v3424 = vsel %vm1681, %v3200, %v3264
      %v3425 = vsel %vm1681, %v3208, %v3266
      %v3426 = vsel %vm1681, %v3216, %v3268
      %v3427 = vsel %vm1681, %v3224, %v3270
      %v3428 = vsel %vm1681, %v3232, %v3272
      %v3429 = vsel %vm1681, %v3138, %v3324
      %v3430 = vsel %vm1681, %v3139, %v3326
      %v3431 = vsel %vm1681, %v3140, %v3328
      %v3432 = vsel %vm1681, %v3297, %v3330
      %v3433 = vsel %vm1681, %v3142, %v3332
      %v3434 = vsel %vm1681, %v3143, %v3334
      %v3435 = vsel %vm1681, %v3144, %v3336
      %v3436 = vsel %vm1681, %v3298, %v3338
      %v3437 = vsel %vm1681, %v3248, %v3386
      %v3438 = vsel %vm1681, %v3354, %v3388
      %v3439 = vsel %vm1681, %v3256, %v3390
      %v3440 = vsel %vm1681, %v3362, %v3392
      %v3469 = vcombine.low %v3413, %v3421
      %v3470 = vcombine.low %v3429, %v3415
      %v3471 = vcombine.low %v3414, %v3422
      %v3472 = vcombine.low %v3430, %v3416
      %v3473 = vcombine.low %v3415, %v3423
      %v3474 = vcombine.low %v3431, %v3437
      %v3475 = vcombine.low %v3416, %v3424
      %v3476 = vcombine.low %v3432, %v3438
      %v3477 = vcombine.low %v3417, %v3425
      %v3478 = vcombine.low %v3433, %v3419
      %v3479 = vcombine.low %v3418, %v3426
      %v3480 = vcombine.low %v3434, %v3420
      %v3481 = vcombine.low %v3419, %v3427
      %v3482 = vcombine.low %v3435, %v3439
      %v3483 = vcombine.low %v3420, %v3428
      %v3484 = vcombine.low %v3436, %v3440
      %v3485 = vcombine.low %v3469, %v3471
      %v3486 = vcombine.high %v3469, %v3471
      %v3487 = vcombine.low %v3470, %v3472
      %v3488 = vcombine.high %v3470, %v3472
      %v3489 = vcombine.low %v3192, %v3200
      %v3490 = vcombine.low %v3473, %v3475
      %v3491 = vcombine.high %v3473, %v3475
      %v3492 = vcombine.low %v3474, %v3476
      %v3493 = vcombine.high %v3474, %v3476
      %v3494 = vcombine.low %v3314, %v3404
      %v3495 = vcombine.low %v3477, %v3479
      %v3496 = vcombine.high %v3477, %v3479
      %v3497 = vcombine.low %v3478, %v3480
      %v3498 = vcombine.high %v3478, %v3480
      %v3499 = vcombine.low %v3224, %v3232
      %v3500 = vcombine.low %v3481, %v3483
      %v3501 = vcombine.high %v3481, %v3483
      %v3502 = vcombine.low %v3482, %v3484
      %v3503 = vcombine.high %v3482, %v3484
      %v3504 = vcombine.low %v3322, %v3412
      %v3525 = vpack.c.bf16 %v3490, %v3485
      %v3526 = vpack.c.bf16 %v3491, %v3486
      %v3527 = vpack.c.bf16 %v3492, %v3487
      %v3528 = vpack.c.bf16 %v3493, %v3488
      %v3529 = vpack.c.bf16 %v3494, %v3489
      %v3530 = vpack.c.bf16 %v3500, %v3495
      %v3531 = vpack.c.bf16 %v3501, %v3496
      %v3532 = vpack.c.bf16 %v3502, %v3497
      %v3533 = vpack.c.bf16 %v3503, %v3498
      %v3534 = vpack.c.bf16 %v3504, %v3499
      %v3535 = vld [vmem:[%s431] sm:$0xf]
      %v3536 = vld [vmem:[%s431 + $0x4] sm:$0xf]
      %v3537 = vld [vmem:[%s431 + $0x8] sm:$0xf]
      %v3538 = vld [vmem:[%s431 + $0xc] sm:$0xf]
      %v3539 = vld [vmem:[%s431 + $0x10] sm:$0xf]
      %v3540 = vld [vmem:[%s431 + $0x14] sm:$0xf]
      %v3541 = vld [vmem:[%s431 + $0x18] sm:$0xf]
      %v3542 = vld [vmem:[%s431 + $0x1c] sm:$0xf]
      %v3543 = vld [vmem:[%s431 + $0x20] sm:$0xf]
      %v3544 = vld [vmem:[%s431 + $0x24] sm:$0xf]
      %v3545 = vld [vmem:[%s431 + $0x28] sm:$0xf]
      %v3546 = vld [vmem:[%s431 + $0x2c] sm:$0xf]
      %v3547 = vld [vmem:[%s431 + $0x30] sm:$0xf]
      %v3548 = vld [vmem:[%s431 + $0x34] sm:$0xf]
      %v3549 = vld [vmem:[%s431 + $0x38] sm:$0xf]
      %v3550 = vld [vmem:[%s431 + $0x3c] sm:$0xf]
      %v3551 = vld [vmem:[%s431 + $0x40] sm:$0xf]
      %v3552 = vld [vmem:[%s431 + $0x44] sm:$0xf]
      %v3553 = vld [vmem:[%s431 + $0x48] sm:$0xf]
      %v3554 = vld [vmem:[%s431 + $0x4c] sm:$0xf]
      %v3555 = vld [vmem:[%s431 + $0x50] sm:$0xf]
      %v3556 = vld [vmem:[%s431 + $0x54] sm:$0xf]
      %v3557 = vld [vmem:[%s431 + $0x58] sm:$0xf]
      %v3558 = vld [vmem:[%s431 + $0x5c] sm:$0xf]
      %v3559 = vld [vmem:[%s431 + $0x60] sm:$0xf]
      %v3560 = vld [vmem:[%s431 + $0x64] sm:$0xf]
      %v3561 = vld [vmem:[%s431 + $0x68] sm:$0xf]
      %v3562 = vld [vmem:[%s431 + $0x6c] sm:$0xf]
      %v3563 = vld [vmem:[%s431 + $0x70] sm:$0xf]
      %v3564 = vld [vmem:[%s431 + $0x74] sm:$0xf]
      %v3565 = vld [vmem:[%s431 + $0x78] sm:$0xf]
      %v3566 = vld [vmem:[%s431 + $0x7c] sm:$0xf]
      %v3567 = vld [vmem:[%s431 + $0x80] sm:$0xf]
      %v3568 = vld [vmem:[%s431 + $0x84] sm:$0xf]
      %v3569 = vld [vmem:[%s431 + $0x88] sm:$0xf]
      %v3570 = vld [vmem:[%s431 + $0x8c] sm:$0xf]
      %v3571 = vld [vmem:[%s431 + $0x90] sm:$0xf]
      %v3572 = vld [vmem:[%s431 + $0x94] sm:$0xf]
      %v3573 = vld [vmem:[%s431 + $0x98] sm:$0xf]
      %v3574 = vld [vmem:[%s431 + $0x9c] sm:$0xf]
      %v3575 = vld [vmem:[%s431 + $0xa0] sm:$0xf]
      %v3576 = vld [vmem:[%s431 + $0xa4] sm:$0xf]
      %v3577 = vld [vmem:[%s431 + $0xa8] sm:$0xf]
      %v3578 = vld [vmem:[%s431 + $0xac] sm:$0xf]
      %v3579 = vld [vmem:[%s431 + $0xb0] sm:$0xf]
      %v3580 = vld [vmem:[%s431 + $0xb4] sm:$0xf]
      %v3581 = vld [vmem:[%s431 + $0xb8] sm:$0xf]
      %v3582 = vld [vmem:[%s431 + $0xbc] sm:$0xf]
      %v3583 = vld [vmem:[%s431 + $0xc0] sm:$0xf]
      %v3584 = vld [vmem:[%s431 + $0xc4] sm:$0xf]
      %v3585 = vld [vmem:[%s431 + $0xc8] sm:$0xf]
      %v3586 = vld [vmem:[%s431 + $0xcc] sm:$0xf]
      %v3587 = vld [vmem:[%s431 + $0xd0] sm:$0xf]
      %v3588 = vld [vmem:[%s431 + $0xd4] sm:$0xf]
      %v3589 = vld [vmem:[%s431 + $0xd8] sm:$0xf]
      %v3590 = vld [vmem:[%s431 + $0xdc] sm:$0xf]
      %v3591 = vld [vmem:[%s431 + $0xe0] sm:$0xf]
      %v3592 = vld [vmem:[%s431 + $0xe4] sm:$0xf]
      %v3593 = vld [vmem:[%s431 + $0xe8] sm:$0xf]
      %v3594 = vld [vmem:[%s431 + $0xec] sm:$0xf]
      %v3595 = vld [vmem:[%s431 + $0xf0] sm:$0xf]
      %v3596 = vld [vmem:[%s431 + $0xf4] sm:$0xf]
      %v3597 = vld [vmem:[%s431 + $0xf8] sm:$0xf]
      %v3598 = vld [vmem:[%s431 + $0xfc] sm:$0xf]
      %v3599 = vld [vmem:[%s431 + $0x100] sm:$0xf]
      %v3600 = vld [vmem:[%s431 + $0x104] sm:$0xf]
      %v3601 = vld [vmem:[%s431 + $0x108] sm:$0xf]
      %v3602 = vld [vmem:[%s431 + $0x10c] sm:$0xf]
      %v3603 = vld [vmem:[%s431 + $0x110] sm:$0xf]
      %v3604 = vld [vmem:[%s431 + $0x114] sm:$0xf]
      %v3605 = vld [vmem:[%s431 + $0x118] sm:$0xf]
      %v3606 = vld [vmem:[%s431 + $0x11c] sm:$0xf]
      %v3607 = vld [vmem:[%s434] sm:$0x1]
      %v3609 = vlaneseq
      %v3610 = vshrl.u32 %v3609, 7
      %v3611 = vsub.s32 0, %v3610
      %v3612 = vrot.slane %v3607, %v3611
      %v3686 = vunpack.c.l.b16 %v3535
      %v3687 = vunpack.c.l.b16 %v3536
      %v3688 = vunpack.c.l.b16 %v3537
      %v3689 = vunpack.c.l.b16 %v3538
      %v3690 = vunpack.c.l.b16 %v3539
      %v3691 = vunpack.c.l.b16 %v3540
      %v3692 = vunpack.c.l.b16 %v3541
      %v3693 = vunpack.c.l.b16 %v3542
      %v3694 = vunpack.c.l.b16 %v3543
      %v3695 = vunpack.c.l.b16 %v3544
      %v3696 = vunpack.c.l.b16 %v3545
      %v3697 = vunpack.c.l.b16 %v3546
      %v3698 = vunpack.c.l.b16 %v3547
      %v3699 = vunpack.c.l.b16 %v3548
      %v3700 = vunpack.c.l.b16 %v3549
      %v3701 = vunpack.c.l.b16 %v3550
      %v3702 = vunpack.c.l.b16 %v3551
      %v3703 = vunpack.c.l.b16 %v3552
      %v3704 = vunpack.c.l.b16 %v3553
      %v3705 = vunpack.c.l.b16 %v3554
      %v3706 = vunpack.c.l.b16 %v3555
      %v3707 = vunpack.c.l.b16 %v3556
      %v3708 = vunpack.c.l.b16 %v3557
      %v3709 = vunpack.c.l.b16 %v3558
      %v3710 = vunpack.c.l.b16 %v3559
      %v3711 = vunpack.c.l.b16 %v3560
      %v3712 = vunpack.c.l.b16 %v3561
      %v3713 = vunpack.c.l.b16 %v3562
      %v3714 = vunpack.c.l.b16 %v3563
      %v3715 = vunpack.c.l.b16 %v3564
      %v3716 = vunpack.c.l.b16 %v3565
      %v3717 = vunpack.c.l.b16 %v3566
      %v3718 = vunpack.c.l.b16 %v3567
      %v3719 = vunpack.c.l.b16 %v3568
      %v3720 = vunpack.c.l.b16 %v3569
      %v3721 = vunpack.c.l.b16 %v3570
      %v3722 = vunpack.c.l.b16 %v3571
      %v3723 = vunpack.c.l.b16 %v3572
      %v3724 = vunpack.c.l.b16 %v3573
      %v3725 = vunpack.c.l.b16 %v3574
      %v3726 = vunpack.c.l.b16 %v3575
      %v3727 = vunpack.c.l.b16 %v3576
      %v3728 = vunpack.c.l.b16 %v3577
      %v3729 = vunpack.c.l.b16 %v3578
      %v3730 = vunpack.c.l.b16 %v3579
      %v3731 = vunpack.c.l.b16 %v3580
      %v3732 = vunpack.c.l.b16 %v3581
      %v3733 = vunpack.c.l.b16 %v3582
      %v3734 = vunpack.c.l.b16 %v3583
      %v3735 = vunpack.c.l.b16 %v3584
      %v3736 = vunpack.c.l.b16 %v3585
      %v3737 = vunpack.c.l.b16 %v3586
      %v3738 = vunpack.c.l.b16 %v3587
      %v3739 = vunpack.c.l.b16 %v3588
      %v3740 = vunpack.c.l.b16 %v3589
      %v3741 = vunpack.c.l.b16 %v3590
      %v3742 = vunpack.c.l.b16 %v3591
      %v3743 = vunpack.c.l.b16 %v3592
      %v3744 = vunpack.c.l.b16 %v3593
      %v3745 = vunpack.c.l.b16 %v3594
      %v3746 = vunpack.c.l.b16 %v3595
      %v3747 = vunpack.c.l.b16 %v3596
      %v3748 = vunpack.c.l.b16 %v3597
      %v3749 = vunpack.c.l.b16 %v3598
      %v3750 = vunpack.c.l.b16 %v3599
      %v3751 = vunpack.c.l.b16 %v3600
      %v3752 = vunpack.c.l.b16 %v3601
      %v3753 = vunpack.c.l.b16 %v3602
      %v3754 = vunpack.c.l.b16 %v3603
      %v3755 = vunpack.c.l.b16 %v3604
      %v3756 = vunpack.c.l.b16 %v3605
      %v3757 = vunpack.c.l.b16 %v3606
      %v3758 = vpack.c.b16 %v3687, %v3686
      %v3759 = vpack.c.b16 %v3689, %v3688
      %v3760 = vpack.c.b16 %v3691, %v3690
      %v3761 = vpack.c.b16 %v3693, %v3692
      %v3762 = vpack.c.b16 %v3695, %v3694
      %v3763 = vpack.c.b16 %v3697, %v3696
      %v3764 = vpack.c.b16 %v3699, %v3698
      %v3765 = vpack.c.b16 %v3701, %v3700
      %v3766 = vpack.c.b16 %v3703, %v3702
      %v3767 = vpack.c.b16 %v3705, %v3704
      %v3768 = vpack.c.b16 %v3707, %v3706
      %v3769 = vpack.c.b16 %v3709, %v3708
      %v3770 = vpack.c.b16 %v3711, %v3710
      %v3771 = vpack.c.b16 %v3713, %v3712
      %v3772 = vpack.c.b16 %v3715, %v3714
      %v3773 = vpack.c.b16 %v3717, %v3716
      %v3774 = vpack.c.b16 %v3719, %v3718
      %v3775 = vpack.c.b16 %v3721, %v3720
      %v3776 = vpack.c.b16 %v3723, %v3722
      %v3777 = vpack.c.b16 %v3725, %v3724
      %v3778 = vpack.c.b16 %v3727, %v3726
      %v3779 = vpack.c.b16 %v3729, %v3728
      %v3780 = vpack.c.b16 %v3731, %v3730
      %v3781 = vpack.c.b16 %v3733, %v3732
      %v3782 = vpack.c.b16 %v3735, %v3734
      %v3783 = vpack.c.b16 %v3737, %v3736
      %v3784 = vpack.c.b16 %v3739, %v3738
      %v3785 = vpack.c.b16 %v3741, %v3740
      %v3786 = vpack.c.b16 %v3743, %v3742
      %v3787 = vpack.c.b16 %v3745, %v3744
      %v3788 = vpack.c.b16 %v3747, %v3746
      %v3789 = vpack.c.b16 %v3749, %v3748
      %v3790 = vpack.c.b16 %v3751, %v3750
      %v3791 = vpack.c.b16 %v3753, %v3752
      %v3792 = vpack.c.b16 %v3755, %v3754
      %v3793 = vpack.c.b16 %v3757, %v3756
      %v3831 = vsel %vm1681, %v3529, 0
      %v3834 = vsel %vm1681, %v3534, 0
      %3836 = vmatprep.subr.bf16.mxu0 0
      %3837 = vmatpush1.bf16.msra.mxu0 %v3758
      %3838 = vmatprep.subr.bf16.mxu0 0
      %3839 = vmatpush1.bf16.msra.mxu0 %v3759
      %3840 = vmatprep.subr.bf16.mxu0 0
      %3841 = vmatpush1.bf16.msra.mxu0 %v3760
      %3842 = vmatprep.subr.bf16.mxu0 0
      %3843 = vmatpush1.bf16.msra.mxu0 %v3761
      %3844 = vmatprep.subr.bf16.mxu0 0
      %3845 = vmatpush1.bf16.msra.mxu0 %v3762
      %3846 = vmatprep.subr.bf16.mxu0 0
      %3847 = vmatpush1.bf16.msra.mxu0 %v3763
      %3848 = vmatprep.subr.bf16.mxu0 0
      %3849 = vmatpush1.bf16.msra.mxu0 %v3764
      %3850 = vmatprep.subr.bf16.mxu0 0
      %3851 = vmatpush1.bf16.msra.mxu0 %v3765
      %3852 = vmatprep.subr.bf16.mxu0 0
      %3853 = vmatpush1.bf16.msra.mxu0 %v3766
      %3854 = vmatprep.subr.bf16.mxu0 0
      %3855 = vmatpush1.bf16.msra.mxu0 %v3767
      %3856 = vmatprep.subr.bf16.mxu0 0
      %3857 = vmatpush1.bf16.msra.mxu0 %v3768
      %3858 = vmatprep.subr.bf16.mxu0 0
      %3859 = vmatpush1.bf16.msra.mxu0 %v3769
      %3860 = vmatprep.subr.bf16.mxu0 0
      %3861 = vmatpush1.bf16.msra.mxu0 %v3770
      %3862 = vmatprep.subr.bf16.mxu0 0
      %3863 = vmatpush1.bf16.msra.mxu0 %v3771
      %3864 = vmatprep.subr.bf16.mxu0 0
      %3865 = vmatpush1.bf16.msra.mxu0 %v3772
      %3866 = vmatprep.subr.bf16.mxu0 0
      %3867 = vmatpush1.bf16.msra.mxu0 %v3773
      %3868 = vmatprep.mubr.bf16.mxu0 %v3526
      %3869 = vmatmul.mubr.bf16.gmra.mrb[0].mxu0 %v3525
      %v3870 = vpop.f32.mrb[0].mxu0
      %v3871 = vadd.f32 %v3612, %v3870
      %v3872 = vpop.f32.mrb[0].mxu0
      %v3873 = vpop.f32.mrb[0].mxu0
      %v3874 = vadd.f32 %v3612, %v3873
      %v3875 = vpop.f32.mrb[0].mxu0
      %3876 = vmatprep.mubr.bf16.mxu0 %v3531
      %3877 = vmatmul.mubr.bf16.gmra.mrb[0].mxu0 %v3530
      %v3878 = vpop.f32.mrb[0].mxu0
      %v3879 = vadd.f32 %v3612, %v3878
      %v3880 = vpop.f32.mrb[0].mxu0
      %v3881 = vpop.f32.mrb[0].mxu0
      %v3882 = vadd.f32 %v3612, %v3881
      %v3883 = vpop.f32.mrb[0].mxu0
      %3884 = vdwg.mxu0
      %3885 = vmatprep.subr.bf16.mxu0 0
      %3886 = vmatpush1.bf16.msra.mxu0 %v3774
      %3887 = vmatprep.subr.bf16.mxu0 0
      %3888 = vmatpush1.bf16.msra.mxu0 %v3775
      %3889 = vmatprep.subr.bf16.mxu0 0
      %3890 = vmatpush1.bf16.msra.mxu0 %v3776
      %3891 = vmatprep.subr.bf16.mxu0 0
      %3892 = vmatpush1.bf16.msra.mxu0 %v3777
      %3893 = vmatprep.subr.bf16.mxu0 0
      %3894 = vmatpush1.bf16.msra.mxu0 %v3778
      %3895 = vmatprep.subr.bf16.mxu0 0
      %3896 = vmatpush1.bf16.msra.mxu0 %v3779
      %3897 = vmatprep.subr.bf16.mxu0 0
      %3898 = vmatpush1.bf16.msra.mxu0 %v3780
      %3899 = vmatprep.subr.bf16.mxu0 0
      %3900 = vmatpush1.bf16.msra.mxu0 %v3781
      %3901 = vmatprep.subr.bf16.mxu0 0
      %3902 = vmatpush1.bf16.msra.mxu0 %v3782
      %3903 = vmatprep.subr.bf16.mxu0 0
      %3904 = vmatpush1.bf16.msra.mxu0 %v3783
      %3905 = vmatprep.subr.bf16.mxu0 0
      %3906 = vmatpush1.bf16.msra.mxu0 %v3784
      %3907 = vmatprep.subr.bf16.mxu0 0
      %3908 = vmatpush1.bf16.msra.mxu0 %v3785
      %3909 = vmatprep.subr.bf16.mxu0 0
      %3910 = vmatpush1.bf16.msra.mxu0 %v3786
      %3911 = vmatprep.subr.bf16.mxu0 0
      %3912 = vmatpush1.bf16.msra.mxu0 %v3787
      %3913 = vmatprep.subr.bf16.mxu0 0
      %3914 = vmatpush1.bf16.msra.mxu0 %v3788
      %3915 = vmatprep.subr.bf16.mxu0 0
      %3916 = vmatpush1.bf16.msra.mxu0 %v3789
      %3917 = vmatprep.mubr.bf16.mxu0 %v3528
      %3918 = vmatmul.mubr.bf16.gmra.mrb[0].mxu0 %v3527
      %v3919 = vpop.f32.mrb[0].mxu0
      %v3920 = vadd.f32 %v3871, %v3919
      %v3921 = vpop.f32.mrb[0].mxu0
      %v3922 = vpop.f32.mrb[0].mxu0
      %v3923 = vadd.f32 %v3874, %v3922
      %v3924 = vpop.f32.mrb[0].mxu0
      %3925 = vmatprep.mubr.bf16.mxu0 %v3533
      %3926 = vmatmul.mubr.bf16.gmra.mrb[0].mxu0 %v3532
      %v3927 = vpop.f32.mrb[0].mxu0
      %v3928 = vadd.f32 %v3879, %v3927
      %v3929 = vpop.f32.mrb[0].mxu0
      %v3930 = vpop.f32.mrb[0].mxu0
      %v3931 = vadd.f32 %v3882, %v3930
      %v3932 = vpop.f32.mrb[0].mxu0
      %3933 = vdwg.mxu0
      %3934 = vmatprep.subr.bf16.mxu0 0
      %3935 = vmatpush1.bf16.msra.mxu0 %v3790
      %3936 = vmatprep.subr.bf16.mxu0 0
      %3937 = vmatpush1.bf16.msra.mxu0 %v3791
      %3938 = vmatprep.subr.bf16.mxu0 0
      %3939 = vmatpush1.bf16.msra.mxu0 %v3792
      %3940 = vmatprep.subr.bf16.mxu0 0
      %3941 = vmatpush1.bf16.msra.mxu0 %v3793
      %3942 = vmatprep.subr.bf16.mxu0 0
      %3943 = vmatpush1.bf16.msra.mxu0 0
      %3944 = vmatprep.subr.bf16.mxu0 0
      %3945 = vmatpush1.bf16.msra.mxu0 0
      %3946 = vmatprep.subr.bf16.mxu0 0
      %3947 = vmatpush1.bf16.msra.mxu0 0
      %3948 = vmatprep.subr.bf16.mxu0 0
      %3949 = vmatpush1.bf16.msra.mxu0 0
      %3950 = vmatprep.subr.bf16.mxu0 0
      %3951 = vmatpush1.bf16.msra.mxu0 0
      %3952 = vmatprep.subr.bf16.mxu0 0
      %3953 = vmatpush1.bf16.msra.mxu0 0
      %3954 = vmatprep.subr.bf16.mxu0 0
      %3955 = vmatpush1.bf16.msra.mxu0 0
      %3956 = vmatprep.subr.bf16.mxu0 0
      %3957 = vmatpush1.bf16.msra.mxu0 0
      %3958 = vmatprep.subr.bf16.mxu0 0
      %3959 = vmatpush1.bf16.msra.mxu0 0
      %3960 = vmatprep.subr.bf16.mxu0 0
      %3961 = vmatpush1.bf16.msra.mxu0 0
      %3962 = vmatprep.subr.bf16.mxu0 0
      %3963 = vmatpush1.bf16.msra.mxu0 0
      %3964 = vmatprep.subr.bf16.mxu0 0
      %3965 = vmatpush1.bf16.msra.mxu0 0
      %3966 = vmatprep.mubr.bf16.mxu0 0
      %3967 = vmatmul.mubr.bf16.gmra.mrb[0].mxu0 %v3831
      %v3968 = vpop.f32.mrb[0].mxu0
      %v3969 = vadd.f32 %v3920, %v3968
      %v3970 = vpop.f32.mrb[0].mxu0
      %v3971 = vpop.f32.mrb[0].mxu0
      %v3972 = vadd.f32 %v3923, %v3971
      %v3973 = vpop.f32.mrb[0].mxu0
      %3974 = vmatprep.mubr.bf16.mxu0 0
      %3975 = vmatmul.mubr.bf16.gmra.mrb[0].mxu0 %v3834
      %v3976 = vpop.f32.mrb[0].mxu0
      %v3977 = vadd.f32 %v3928, %v3976
      %v3978 = vpop.f32.mrb[0].mxu0
      %v3979 = vpop.f32.mrb[0].mxu0
      %v3980 = vadd.f32 %v3931, %v3979
      %v3981 = vpop.f32.mrb[0].mxu0
      %3982 = vdwg.mxu0
      %v3983 = vmax.f32 %v3969, 0.0
      %v3984 = vmax.f32 %v3972, 0.0
      %v3985 = vmax.f32 %v3977, 0.0
      %v3986 = vmax.f32 %v3980, 0.0
      %v3991 = vcombine.high %v3983, %v3983
      %v3992 = vcombine.high %v3984, %v3984
      %v3993 = vcombine.high %v3985, %v3985
      %v3994 = vcombine.high %v3986, %v3986
      %v3995 = vlaneseq
      %v3996 = vshrl.u32 %v3995, 7
      %v3997 = vsub.s32 0, %v3996
      %v3998 = vrot.slane %v3983, %v3997
      %v3999 = vlaneseq
      %v4000 = vshrl.u32 %v3999, 7
      %v4001 = vsub.s32 0, %v4000
      %v4002 = vrot.slane %v3985, %v4001
      %vm4003 = vcmask 1041409
      %v4004 = vsel %vm4003, %v4002, %v3998
      %v4006 = vlaneseq
      %v4007 = vshrl.u32 %v4006, 7
      %v4008 = vsub.s32 1, %v4007
      %v4009 = vrot.slane %v3983, %v4008
      %v4010 = vlaneseq
      %v4011 = vshrl.u32 %v4010, 7
      %v4012 = vsub.s32 1, %v4011
      %v4013 = vrot.slane %v3985, %v4012
      %v4014 = vsel %vm4003, %v4013, %v4009
      %4015 = vrot.lane.b32.xlu0 %v4014, 64
      %v4016 = vpop.permute.xlu0 %4015
      %v4018 = vlaneseq
      %v4019 = vshrl.u32 %v4018, 7
      %v4020 = vsub.s32 2, %v4019
      %v4021 = vrot.slane %v3983, %v4020
      %v4022 = vlaneseq
      %v4023 = vshrl.u32 %v4022, 7
      %v4024 = vsub.s32 2, %v4023
      %v4025 = vrot.slane %v3985, %v4024
      %v4026 = vsel %vm4003, %v4025, %v4021
      %v4028 = vlaneseq
      %v4029 = vshrl.u32 %v4028, 7
      %v4030 = vsub.s32 3, %v4029
      %v4031 = vrot.slane %v3983, %v4030
      %v4032 = vlaneseq
      %v4033 = vshrl.u32 %v4032, 7
      %v4034 = vsub.s32 3, %v4033
      %v4035 = vrot.slane %v3985, %v4034
      %v4036 = vsel %vm4003, %v4035, %v4031
      %4037 = vrot.lane.b32.xlu0 %v4036, 64
      %v4038 = vpop.permute.xlu0 %4037
      %v4040 = vlaneseq
      %v4041 = vshrl.u32 %v4040, 7
      %v4042 = vsub.s32 0, %v4041
      %v4043 = vrot.slane %v3991, %v4042
      %v4044 = vlaneseq
      %v4045 = vshrl.u32 %v4044, 7
      %v4046 = vsub.s32 0, %v4045
      %v4047 = vrot.slane %v3993, %v4046
      %v4048 = vsel %vm4003, %v4047, %v4043
      %v4050 = vlaneseq
      %v4051 = vshrl.u32 %v4050, 7
      %v4052 = vsub.s32 1, %v4051
      %v4053 = vrot.slane %v3991, %v4052
      %v4054 = vlaneseq
      %v4055 = vshrl.u32 %v4054, 7
      %v4056 = vsub.s32 1, %v4055
      %v4057 = vrot.slane %v3993, %v4056
      %v4058 = vsel %vm4003, %v4057, %v4053
      %4059 = vrot.lane.b32.xlu0 %v4058, 64
      %v4060 = vpop.permute.xlu0 %4059
      %v4062 = vlaneseq
      %v4063 = vshrl.u32 %v4062, 7
      %v4064 = vsub.s32 2, %v4063
      %v4065 = vrot.slane %v3991, %v4064
      %v4066 = vlaneseq
      %v4067 = vshrl.u32 %v4066, 7
      %v4068 = vsub.s32 2, %v4067
      %v4069 = vrot.slane %v3993, %v4068
      %v4070 = vsel %vm4003, %v4069, %v4065
      %v4072 = vlaneseq
      %v4073 = vshrl.u32 %v4072, 7
      %v4074 = vsub.s32 3, %v4073
      %v4075 = vrot.slane %v3991, %v4074
      %v4076 = vlaneseq
      %v4077 = vshrl.u32 %v4076, 7
      %v4078 = vsub.s32 3, %v4077
      %v4079 = vrot.slane %v3993, %v4078
      %v4080 = vsel %vm4003, %v4079, %v4075
      %4081 = vrot.lane.b32.xlu0 %v4080, 64
      %v4082 = vpop.permute.xlu0 %4081
      %v4084 = vlaneseq
      %v4085 = vshrl.u32 %v4084, 7
      %v4086 = vsub.s32 0, %v4085
      %v4087 = vrot.slane %v3984, %v4086
      %v4088 = vlaneseq
      %v4089 = vshrl.u32 %v4088, 7
      %v4090 = vsub.s32 0, %v4089
      %v4091 = vrot.slane %v3986, %v4090
      %v4092 = vsel %vm4003, %v4091, %v4087
      %v4094 = vlaneseq
      %v4095 = vshrl.u32 %v4094, 7
      %v4096 = vsub.s32 1, %v4095
      %v4097 = vrot.slane %v3984, %v4096
      %v4098 = vlaneseq
      %v4099 = vshrl.u32 %v4098, 7
      %v4100 = vsub.s32 1, %v4099
      %v4101 = vrot.slane %v3986, %v4100
      %v4102 = vsel %vm4003, %v4101, %v4097
      %4103 = vrot.lane.b32.xlu0 %v4102, 64
      %v4104 = vpop.permute.xlu0 %4103
      %v4106 = vlaneseq
      %v4107 = vshrl.u32 %v4106, 7
      %v4108 = vsub.s32 2, %v4107
      %v4109 = vrot.slane %v3984, %v4108
      %v4110 = vlaneseq
      %v4111 = vshrl.u32 %v4110, 7
      %v4112 = vsub.s32 2, %v4111
      %v4113 = vrot.slane %v3986, %v4112
      %v4114 = vsel %vm4003, %v4113, %v4109
      %v4116 = vlaneseq
      %v4117 = vshrl.u32 %v4116, 7
      %v4118 = vsub.s32 3, %v4117
      %v4119 = vrot.slane %v3984, %v4118
      %v4120 = vlaneseq
      %v4121 = vshrl.u32 %v4120, 7
      %v4122 = vsub.s32 3, %v4121
      %v4123 = vrot.slane %v3986, %v4122
      %v4124 = vsel %vm4003, %v4123, %v4119
      %4125 = vrot.lane.b32.xlu0 %v4124, 64
      %v4126 = vpop.permute.xlu0 %4125
      %v4128 = vlaneseq
      %v4129 = vshrl.u32 %v4128, 7
      %v4130 = vsub.s32 0, %v4129
      %v4131 = vrot.slane %v3992, %v4130
      %v4132 = vlaneseq
      %v4133 = vshrl.u32 %v4132, 7
      %v4134 = vsub.s32 0, %v4133
      %v4135 = vrot.slane %v3994, %v4134
      %v4136 = vsel %vm4003, %v4135, %v4131
      %v4138 = vlaneseq
      %v4139 = vshrl.u32 %v4138, 7
      %v4140 = vsub.s32 1, %v4139
      %v4141 = vrot.slane %v3992, %v4140
      %v4142 = vlaneseq
      %v4143 = vshrl.u32 %v4142, 7
      %v4144 = vsub.s32 1, %v4143
      %v4145 = vrot.slane %v3994, %v4144
      %v4146 = vsel %vm4003, %v4145, %v4141
      %4147 = vrot.lane.b32.xlu0 %v4146, 64
      %v4148 = vpop.permute.xlu0 %4147
      %v4150 = vlaneseq
      %v4151 = vshrl.u32 %v4150, 7
      %v4152 = vsub.s32 2, %v4151
      %v4153 = vrot.slane %v3992, %v4152
      %v4154 = vlaneseq
      %v4155 = vshrl.u32 %v4154, 7
      %v4156 = vsub.s32 2, %v4155
      %v4157 = vrot.slane %v3994, %v4156
      %v4158 = vsel %vm4003, %v4157, %v4153
      %v4160 = vlaneseq
      %v4161 = vshrl.u32 %v4160, 7
      %v4162 = vsub.s32 3, %v4161
      %v4163 = vrot.slane %v3992, %v4162
      %v4164 = vlaneseq
      %v4165 = vshrl.u32 %v4164, 7
      %v4166 = vsub.s32 3, %v4165
      %v4167 = vrot.slane %v3994, %v4166
      %v4168 = vsel %vm4003, %v4167, %v4163
      %4169 = vrot.lane.b32.xlu0 %v4168, 64
      %v4170 = vpop.permute.xlu0 %4169
      %v4172 = vsel %vm1681, %v4004, %v4016
      %v4173 = vsel %vm1681, %v4026, %v4038
      %v4174 = vsel %vm1681, %v4048, %v4060
      %v4175 = vsel %vm1681, %v4070, %v4082
      %v4176 = vsel %vm1681, %v4092, %v4104
      %v4177 = vsel %vm1681, %v4114, %v4126
      %v4178 = vsel %vm1681, %v4136, %v4148
      %v4179 = vsel %vm1681, %v4158, %v4170
      %v4180 = vpack.c.bf16 %v4172, %v4172
      %v4181 = vpack.c.bf16 %v4173, %v4173
      %v4182 = vpack.c.bf16 %v4174, %v4174
      %v4183 = vpack.c.bf16 %v4175, %v4175
      %v4184 = vpack.c.bf16 %v4176, %v4176
      %v4185 = vpack.c.bf16 %v4177, %v4177
      %v4186 = vpack.c.bf16 %v4178, %v4178
      %v4187 = vpack.c.bf16 %v4179, %v4179
      %v4188 = vld [vmem:[%s439] sm:$0xf]
      %v4189 = vld [vmem:[%s439 + $0x4] sm:$0xf]
      %v4190 = vld [vmem:[%s439 + $0x8] sm:$0xf]
      %v4191 = vld [vmem:[%s439 + $0xc] sm:$0xf]
      %v4192 = vld [vmem:[%s439 + $0x10] sm:$0xf]
      %v4193 = vld [vmem:[%s439 + $0x14] sm:$0xf]
      %v4194 = vld [vmem:[%s439 + $0x18] sm:$0xf]
      %v4195 = vld [vmem:[%s439 + $0x1c] sm:$0xf]
      %v4196 = vld [vmem:[%s439 + $0x20] sm:$0xf]
      %v4197 = vld [vmem:[%s439 + $0x24] sm:$0xf]
      %v4198 = vld [vmem:[%s439 + $0x28] sm:$0xf]
      %v4199 = vld [vmem:[%s439 + $0x2c] sm:$0xf]
      %v4200 = vld [vmem:[%s439 + $0x30] sm:$0xf]
      %v4201 = vld [vmem:[%s439 + $0x34] sm:$0xf]
      %v4202 = vld [vmem:[%s439 + $0x38] sm:$0xf]
      %v4203 = vld [vmem:[%s439 + $0x3c] sm:$0xf]
      %v4204 = vld [vmem:[%s439 + $0x40] sm:$0xf]
      %v4205 = vld [vmem:[%s439 + $0x44] sm:$0xf]
      %v4206 = vld [vmem:[%s439 + $0x48] sm:$0xf]
      %v4207 = vld [vmem:[%s439 + $0x4c] sm:$0xf]
      %v4208 = vld [vmem:[%s439 + $0x50] sm:$0xf]
      %v4209 = vld [vmem:[%s439 + $0x54] sm:$0xf]
      %v4210 = vld [vmem:[%s439 + $0x58] sm:$0xf]
      %v4211 = vld [vmem:[%s439 + $0x5c] sm:$0xf]
      %v4212 = vld [vmem:[%s439 + $0x60] sm:$0xf]
      %v4213 = vld [vmem:[%s439 + $0x64] sm:$0xf]
      %v4214 = vld [vmem:[%s439 + $0x68] sm:$0xf]
      %v4215 = vld [vmem:[%s439 + $0x6c] sm:$0xf]
      %v4216 = vld [vmem:[%s439 + $0x70] sm:$0xf]
      %v4217 = vld [vmem:[%s439 + $0x74] sm:$0xf]
      %v4218 = vld [vmem:[%s439 + $0x78] sm:$0xf]
      %v4219 = vld [vmem:[%s439 + $0x7c] sm:$0xf]
      %v4220 = vld [vmem:[%s439 + $0x80] sm:$0xf]
      %v4221 = vld [vmem:[%s439 + $0x84] sm:$0xf]
      %v4222 = vld [vmem:[%s439 + $0x88] sm:$0xf]
      %v4223 = vld [vmem:[%s439 + $0x8c] sm:$0xf]
      %v4224 = vld [vmem:[%s439 + $0x90] sm:$0xf]
      %v4225 = vld [vmem:[%s439 + $0x94] sm:$0xf]
      %v4226 = vld [vmem:[%s439 + $0x98] sm:$0xf]
      %v4227 = vld [vmem:[%s439 + $0x9c] sm:$0xf]
      %v4228 = vld [vmem:[%s439 + $0xa0] sm:$0xf]
      %v4229 = vld [vmem:[%s439 + $0xa4] sm:$0xf]
      %v4230 = vld [vmem:[%s439 + $0xa8] sm:$0xf]
      %v4231 = vld [vmem:[%s439 + $0xac] sm:$0xf]
      %v4232 = vld [vmem:[%s439 + $0xb0] sm:$0xf]
      %v4233 = vld [vmem:[%s439 + $0xb4] sm:$0xf]
      %v4234 = vld [vmem:[%s439 + $0xb8] sm:$0xf]
      %v4235 = vld [vmem:[%s439 + $0xbc] sm:$0xf]
      %v4236 = vld [vmem:[%s439 + $0xc0] sm:$0xf]
      %v4237 = vld [vmem:[%s439 + $0xc4] sm:$0xf]
      %v4238 = vld [vmem:[%s439 + $0xc8] sm:$0xf]
      %v4239 = vld [vmem:[%s439 + $0xcc] sm:$0xf]
      %v4240 = vld [vmem:[%s439 + $0xd0] sm:$0xf]
      %v4241 = vld [vmem:[%s439 + $0xd4] sm:$0xf]
      %v4242 = vld [vmem:[%s439 + $0xd8] sm:$0xf]
      %v4243 = vld [vmem:[%s439 + $0xdc] sm:$0xf]
      %v4244 = vld [vmem:[%s439 + $0xe0] sm:$0xf]
      %v4245 = vld [vmem:[%s439 + $0xe4] sm:$0xf]
      %v4246 = vld [vmem:[%s439 + $0xe8] sm:$0xf]
      %v4247 = vld [vmem:[%s439 + $0xec] sm:$0xf]
      %v4248 = vld [vmem:[%s439 + $0xf0] sm:$0xf]
      %v4249 = vld [vmem:[%s439 + $0xf4] sm:$0xf]
      %v4250 = vld [vmem:[%s439 + $0xf8] sm:$0xf]
      %v4251 = vld [vmem:[%s439 + $0xfc] sm:$0xf]
      %v4252 = vld [vmem:[%s439 + $0x100] sm:$0xf]
      %v4253 = vld [vmem:[%s439 + $0x104] sm:$0xf]
      %v4254 = vld [vmem:[%s439 + $0x108] sm:$0xf]
      %v4255 = vld [vmem:[%s439 + $0x10c] sm:$0xf]
      %v4256 = vld [vmem:[%s439 + $0x110] sm:$0xf]
      %v4257 = vld [vmem:[%s439 + $0x114] sm:$0xf]
      %v4258 = vld [vmem:[%s439 + $0x118] sm:$0xf]
      %v4259 = vld [vmem:[%s439 + $0x11c] sm:$0xf]
      %v4260 = vld [vmem:[%s439 + $0x120] sm:$0xf]
      %v4261 = vld [vmem:[%s439 + $0x124] sm:$0xf]
      %v4262 = vld [vmem:[%s439 + $0x128] sm:$0xf]
      %v4263 = vld [vmem:[%s439 + $0x12c] sm:$0xf]
      %v4264 = vld [vmem:[%s439 + $0x130] sm:$0xf]
      %v4265 = vld [vmem:[%s439 + $0x134] sm:$0xf]
      %v4266 = vld [vmem:[%s439 + $0x138] sm:$0xf]
      %v4267 = vld [vmem:[%s439 + $0x13c] sm:$0xf]
      %v4268 = vld [vmem:[%s439 + $0x140] sm:$0xf]
      %v4269 = vld [vmem:[%s439 + $0x144] sm:$0xf]
      %v4270 = vld [vmem:[%s439 + $0x148] sm:$0xf]
      %v4271 = vld [vmem:[%s439 + $0x14c] sm:$0xf]
      %v4272 = vld [vmem:[%s439 + $0x150] sm:$0xf]
      %v4273 = vld [vmem:[%s439 + $0x154] sm:$0xf]
      %v4274 = vld [vmem:[%s439 + $0x158] sm:$0xf]
      %v4275 = vld [vmem:[%s439 + $0x15c] sm:$0xf]
      %v4276 = vld [vmem:[%s439 + $0x160] sm:$0xf]
      %v4277 = vld [vmem:[%s439 + $0x164] sm:$0xf]
      %v4278 = vld [vmem:[%s439 + $0x168] sm:$0xf]
      %v4279 = vld [vmem:[%s439 + $0x16c] sm:$0xf]
      %v4280 = vld [vmem:[%s439 + $0x170] sm:$0xf]
      %v4281 = vld [vmem:[%s439 + $0x174] sm:$0xf]
      %v4282 = vld [vmem:[%s439 + $0x178] sm:$0xf]
      %v4283 = vld [vmem:[%s439 + $0x17c] sm:$0xf]
      %v4284 = vld [vmem:[%s439 + $0x180] sm:$0xf]
      %v4285 = vld [vmem:[%s439 + $0x184] sm:$0xf]
      %v4286 = vld [vmem:[%s439 + $0x188] sm:$0xf]
      %v4287 = vld [vmem:[%s439 + $0x18c] sm:$0xf]
      %v4288 = vld [vmem:[%s439 + $0x190] sm:$0xf]
      %v4289 = vld [vmem:[%s439 + $0x194] sm:$0xf]
      %v4290 = vld [vmem:[%s439 + $0x198] sm:$0xf]
      %v4291 = vld [vmem:[%s439 + $0x19c] sm:$0xf]
      %v4292 = vld [vmem:[%s439 + $0x1a0] sm:$0xf]
      %v4293 = vld [vmem:[%s439 + $0x1a4] sm:$0xf]
      %v4294 = vld [vmem:[%s439 + $0x1a8] sm:$0xf]
      %v4295 = vld [vmem:[%s439 + $0x1ac] sm:$0xf]
      %v4296 = vld [vmem:[%s439 + $0x1b0] sm:$0xf]
      %v4297 = vld [vmem:[%s439 + $0x1b4] sm:$0xf]
      %v4298 = vld [vmem:[%s439 + $0x1b8] sm:$0xf]
      %v4299 = vld [vmem:[%s439 + $0x1bc] sm:$0xf]
      %v4300 = vld [vmem:[%s439 + $0x1c0] sm:$0xf]
      %v4301 = vld [vmem:[%s439 + $0x1c4] sm:$0xf]
      %v4302 = vld [vmem:[%s439 + $0x1c8] sm:$0xf]
      %v4303 = vld [vmem:[%s439 + $0x1cc] sm:$0xf]
      %v4304 = vld [vmem:[%s439 + $0x1d0] sm:$0xf]
      %v4305 = vld [vmem:[%s439 + $0x1d4] sm:$0xf]
      %v4306 = vld [vmem:[%s439 + $0x1d8] sm:$0xf]
      %v4307 = vld [vmem:[%s439 + $0x1dc] sm:$0xf]
      %v4308 = vld [vmem:[%s439 + $0x1e0] sm:$0xf]
      %v4309 = vld [vmem:[%s439 + $0x1e4] sm:$0xf]
      %v4310 = vld [vmem:[%s439 + $0x1e8] sm:$0xf]
      %v4311 = vld [vmem:[%s439 + $0x1ec] sm:$0xf]
      %v4312 = vld [vmem:[%s439 + $0x1f0] sm:$0xf]
      %v4313 = vld [vmem:[%s439 + $0x1f4] sm:$0xf]
      %v4314 = vld [vmem:[%s439 + $0x1f8] sm:$0xf]
      %v4315 = vld [vmem:[%s439 + $0x1fc] sm:$0xf]
      %v4316 = vld [vmem:[%s442] sm:$0x1]
      %v4318 = vlaneseq
      %v4319 = vshrl.u32 %v4318, 7
      %v4320 = vsub.s32 0, %v4319
      %v4321 = vrot.slane %v4316, %v4320
      %v4451 = vunpack.c.l.b16 %v4188
      %v4452 = vunpack.c.l.b16 %v4189
      %v4453 = vunpack.c.l.b16 %v4190
      %v4454 = vunpack.c.l.b16 %v4191
      %v4455 = vunpack.c.l.b16 %v4192
      %v4456 = vunpack.c.l.b16 %v4193
      %v4457 = vunpack.c.l.b16 %v4194
      %v4458 = vunpack.c.l.b16 %v4195
      %v4459 = vunpack.c.l.b16 %v4196
      %v4460 = vunpack.c.l.b16 %v4197
      %v4461 = vunpack.c.l.b16 %v4198
      %v4462 = vunpack.c.l.b16 %v4199
      %v4463 = vunpack.c.l.b16 %v4200
      %v4464 = vunpack.c.l.b16 %v4201
      %v4465 = vunpack.c.l.b16 %v4202
      %v4466 = vunpack.c.l.b16 %v4203
      %v4467 = vunpack.c.l.b16 %v4204
      %v4468 = vunpack.c.l.b16 %v4205
      %v4469 = vunpack.c.l.b16 %v4206
      %v4470 = vunpack.c.l.b16 %v4207
      %v4471 = vunpack.c.l.b16 %v4208
      %v4472 = vunpack.c.l.b16 %v4209
      %v4473 = vunpack.c.l.b16 %v4210
      %v4474 = vunpack.c.l.b16 %v4211
      %v4475 = vunpack.c.l.b16 %v4212
      %v4476 = vunpack.c.l.b16 %v4213
      %v4477 = vunpack.c.l.b16 %v4214
      %v4478 = vunpack.c.l.b16 %v4215
      %v4479 = vunpack.c.l.b16 %v4216
      %v4480 = vunpack.c.l.b16 %v4217
      %v4481 = vunpack.c.l.b16 %v4218
      %v4482 = vunpack.c.l.b16 %v4219
      %v4483 = vunpack.c.l.b16 %v4220
      %v4484 = vunpack.c.l.b16 %v4221
      %v4485 = vunpack.c.l.b16 %v4222
      %v4486 = vunpack.c.l.b16 %v4223
      %v4487 = vunpack.c.l.b16 %v4224
      %v4488 = vunpack.c.l.b16 %v4225
      %v4489 = vunpack.c.l.b16 %v4226
      %v4490 = vunpack.c.l.b16 %v4227
      %v4491 = vunpack.c.l.b16 %v4228
      %v4492 = vunpack.c.l.b16 %v4229
      %v4493 = vunpack.c.l.b16 %v4230
      %v4494 = vunpack.c.l.b16 %v4231
      %v4495 = vunpack.c.l.b16 %v4232
      %v4496 = vunpack.c.l.b16 %v4233
      %v4497 = vunpack.c.l.b16 %v4234
      %v4498 = vunpack.c.l.b16 %v4235
      %v4499 = vunpack.c.l.b16 %v4236
      %v4500 = vunpack.c.l.b16 %v4237
      %v4501 = vunpack.c.l.b16 %v4238
      %v4502 = vunpack.c.l.b16 %v4239
      %v4503 = vunpack.c.l.b16 %v4240
      %v4504 = vunpack.c.l.b16 %v4241
      %v4505 = vunpack.c.l.b16 %v4242
      %v4506 = vunpack.c.l.b16 %v4243
      %v4507 = vunpack.c.l.b16 %v4244
      %v4508 = vunpack.c.l.b16 %v4245
      %v4509 = vunpack.c.l.b16 %v4246
      %v4510 = vunpack.c.l.b16 %v4247
      %v4511 = vunpack.c.l.b16 %v4248
      %v4512 = vunpack.c.l.b16 %v4249
      %v4513 = vunpack.c.l.b16 %v4250
      %v4514 = vunpack.c.l.b16 %v4251
      %v4515 = vunpack.c.l.b16 %v4252
      %v4516 = vunpack.c.l.b16 %v4253
      %v4517 = vunpack.c.l.b16 %v4254
      %v4518 = vunpack.c.l.b16 %v4255
      %v4519 = vunpack.c.l.b16 %v4256
      %v4520 = vunpack.c.l.b16 %v4257
      %v4521 = vunpack.c.l.b16 %v4258
      %v4522 = vunpack.c.l.b16 %v4259
      %v4523 = vunpack.c.l.b16 %v4260
      %v4524 = vunpack.c.l.b16 %v4261
      %v4525 = vunpack.c.l.b16 %v4262
      %v4526 = vunpack.c.l.b16 %v4263
      %v4527 = vunpack.c.l.b16 %v4264
      %v4528 = vunpack.c.l.b16 %v4265
      %v4529 = vunpack.c.l.b16 %v4266
      %v4530 = vunpack.c.l.b16 %v4267
      %v4531 = vunpack.c.l.b16 %v4268
      %v4532 = vunpack.c.l.b16 %v4269
      %v4533 = vunpack.c.l.b16 %v4270
      %v4534 = vunpack.c.l.b16 %v4271
      %v4535 = vunpack.c.l.b16 %v4272
      %v4536 = vunpack.c.l.b16 %v4273
      %v4537 = vunpack.c.l.b16 %v4274
      %v4538 = vunpack.c.l.b16 %v4275
      %v4539 = vunpack.c.l.b16 %v4276
      %v4540 = vunpack.c.l.b16 %v4277
      %v4541 = vunpack.c.l.b16 %v4278
      %v4542 = vunpack.c.l.b16 %v4279
      %v4543 = vunpack.c.l.b16 %v4280
      %v4544 = vunpack.c.l.b16 %v4281
      %v4545 = vunpack.c.l.b16 %v4282
      %v4546 = vunpack.c.l.b16 %v4283
      %v4547 = vunpack.c.l.b16 %v4284
      %v4548 = vunpack.c.l.b16 %v4285
      %v4549 = vunpack.c.l.b16 %v4286
      %v4550 = vunpack.c.l.b16 %v4287
      %v4551 = vunpack.c.l.b16 %v4288
      %v4552 = vunpack.c.l.b16 %v4289
      %v4553 = vunpack.c.l.b16 %v4290
      %v4554 = vunpack.c.l.b16 %v4291
      %v4555 = vunpack.c.l.b16 %v4292
      %v4556 = vunpack.c.l.b16 %v4293
      %v4557 = vunpack.c.l.b16 %v4294
      %v4558 = vunpack.c.l.b16 %v4295
      %v4559 = vunpack.c.l.b16 %v4296
      %v4560 = vunpack.c.l.b16 %v4297
      %v4561 = vunpack.c.l.b16 %v4298
      %v4562 = vunpack.c.l.b16 %v4299
      %v4563 = vunpack.c.l.b16 %v4300
      %v4564 = vunpack.c.l.b16 %v4301
      %v4565 = vunpack.c.l.b16 %v4302
      %v4566 = vunpack.c.l.b16 %v4303
      %v4567 = vunpack.c.l.b16 %v4304
      %v4568 = vunpack.c.l.b16 %v4305
      %v4569 = vunpack.c.l.b16 %v4306
      %v4570 = vunpack.c.l.b16 %v4307
      %v4571 = vunpack.c.l.b16 %v4308
      %v4572 = vunpack.c.l.b16 %v4309
      %v4573 = vunpack.c.l.b16 %v4310
      %v4574 = vunpack.c.l.b16 %v4311
      %v4575 = vunpack.c.l.b16 %v4312
      %v4576 = vunpack.c.l.b16 %v4313
      %v4577 = vunpack.c.l.b16 %v4314
      %v4578 = vunpack.c.l.b16 %v4315
      %v4579 = vpack.c.b16 %v4452, %v4451
      %v4580 = vpack.c.b16 %v4454, %v4453
      %v4581 = vpack.c.b16 %v4456, %v4455
      %v4582 = vpack.c.b16 %v4458, %v4457
      %v4583 = vpack.c.b16 %v4460, %v4459
      %v4584 = vpack.c.b16 %v4462, %v4461
      %v4585 = vpack.c.b16 %v4464, %v4463
      %v4586 = vpack.c.b16 %v4466, %v4465
      %v4587 = vpack.c.b16 %v4468, %v4467
      %v4588 = vpack.c.b16 %v4470, %v4469
      %v4589 = vpack.c.b16 %v4472, %v4471
      %v4590 = vpack.c.b16 %v4474, %v4473
      %v4591 = vpack.c.b16 %v4476, %v4475
      %v4592 = vpack.c.b16 %v4478, %v4477
      %v4593 = vpack.c.b16 %v4480, %v4479
      %v4594 = vpack.c.b16 %v4482, %v4481
      %v4595 = vpack.c.b16 %v4484, %v4483
      %v4596 = vpack.c.b16 %v4486, %v4485
      %v4597 = vpack.c.b16 %v4488, %v4487
      %v4598 = vpack.c.b16 %v4490, %v4489
      %v4599 = vpack.c.b16 %v4492, %v4491
      %v4600 = vpack.c.b16 %v4494, %v4493
      %v4601 = vpack.c.b16 %v4496, %v4495
      %v4602 = vpack.c.b16 %v4498, %v4497
      %v4603 = vpack.c.b16 %v4500, %v4499
      %v4604 = vpack.c.b16 %v4502, %v4501
      %v4605 = vpack.c.b16 %v4504, %v4503
      %v4606 = vpack.c.b16 %v4506, %v4505
      %v4607 = vpack.c.b16 %v4508, %v4507
      %v4608 = vpack.c.b16 %v4510, %v4509
      %v4609 = vpack.c.b16 %v4512, %v4511
      %v4610 = vpack.c.b16 %v4514, %v4513
      %v4611 = vpack.c.b16 %v4516, %v4515
      %v4612 = vpack.c.b16 %v4518, %v4517
      %v4613 = vpack.c.b16 %v4520, %v4519
      %v4614 = vpack.c.b16 %v4522, %v4521
      %v4615 = vpack.c.b16 %v4524, %v4523
      %v4616 = vpack.c.b16 %v4526, %v4525
      %v4617 = vpack.c.b16 %v4528, %v4527
      %v4618 = vpack.c.b16 %v4530, %v4529
      %v4619 = vpack.c.b16 %v4532, %v4531
      %v4620 = vpack.c.b16 %v4534, %v4533
      %v4621 = vpack.c.b16 %v4536, %v4535
      %v4622 = vpack.c.b16 %v4538, %v4537
      %v4623 = vpack.c.b16 %v4540, %v4539
      %v4624 = vpack.c.b16 %v4542, %v4541
      %v4625 = vpack.c.b16 %v4544, %v4543
      %v4626 = vpack.c.b16 %v4546, %v4545
      %v4627 = vpack.c.b16 %v4548, %v4547
      %v4628 = vpack.c.b16 %v4550, %v4549
      %v4629 = vpack.c.b16 %v4552, %v4551
      %v4630 = vpack.c.b16 %v4554, %v4553
      %v4631 = vpack.c.b16 %v4556, %v4555
      %v4632 = vpack.c.b16 %v4558, %v4557
      %v4633 = vpack.c.b16 %v4560, %v4559
      %v4634 = vpack.c.b16 %v4562, %v4561
      %v4635 = vpack.c.b16 %v4564, %v4563
      %v4636 = vpack.c.b16 %v4566, %v4565
      %v4637 = vpack.c.b16 %v4568, %v4567
      %v4638 = vpack.c.b16 %v4570, %v4569
      %v4639 = vpack.c.b16 %v4572, %v4571
      %v4640 = vpack.c.b16 %v4574, %v4573
      %v4641 = vpack.c.b16 %v4576, %v4575
      %v4642 = vpack.c.b16 %v4578, %v4577
      %4707 = vmatprep.subr.bf16.mxu0 0
      %4708 = vmatpush1.bf16.msra.mxu0 %v4579
      %4709 = vmatprep.subr.bf16.mxu0 0
      %4710 = vmatpush1.bf16.msra.mxu0 %v4580
      %4711 = vmatprep.subr.bf16.mxu0 0
      %4712 = vmatpush1.bf16.msra.mxu0 %v4581
      %4713 = vmatprep.subr.bf16.mxu0 0
      %4714 = vmatpush1.bf16.msra.mxu0 %v4582
      %4715 = vmatprep.subr.bf16.mxu0 0
      %4716 = vmatpush1.bf16.msra.mxu0 %v4583
      %4717 = vmatprep.subr.bf16.mxu0 0
      %4718 = vmatpush1.bf16.msra.mxu0 %v4584
      %4719 = vmatprep.subr.bf16.mxu0 0
      %4720 = vmatpush1.bf16.msra.mxu0 %v4585
      %4721 = vmatprep.subr.bf16.mxu0 0
      %4722 = vmatpush1.bf16.msra.mxu0 %v4586
      %4723 = vmatprep.subr.bf16.mxu0 0
      %4724 = vmatpush1.bf16.msra.mxu0 %v4587
      %4725 = vmatprep.subr.bf16.mxu0 0
      %4726 = vmatpush1.bf16.msra.mxu0 %v4588
      %4727 = vmatprep.subr.bf16.mxu0 0
      %4728 = vmatpush1.bf16.msra.mxu0 %v4589
      %4729 = vmatprep.subr.bf16.mxu0 0
      %4730 = vmatpush1.bf16.msra.mxu0 %v4590
      %4731 = vmatprep.subr.bf16.mxu0 0
      %4732 = vmatpush1.bf16.msra.mxu0 %v4591
      %4733 = vmatprep.subr.bf16.mxu0 0
      %4734 = vmatpush1.bf16.msra.mxu0 %v4592
      %4735 = vmatprep.subr.bf16.mxu0 0
      %4736 = vmatpush1.bf16.msra.mxu0 %v4593
      %4737 = vmatprep.subr.bf16.mxu0 0
      %4738 = vmatpush1.bf16.msra.mxu0 %v4594
      %4739 = vmatprep.mubr.bf16.mxu0 %v4181
      %4740 = vmatmul.mubr.bf16.gmra.mrb[0].mxu0 %v4180
      %v4741 = vpop.f32.mrb[0].mxu0
      %v4742 = vadd.f32 %v4321, %v4741
      %v4743 = vpop.f32.mrb[0].mxu0
      %v4744 = vpop.f32.mrb[0].mxu0
      %v4745 = vpop.f32.mrb[0].mxu0
      %4746 = vdwg.mxu0
      %4747 = vmatprep.subr.bf16.mxu0 0
      %4748 = vmatpush1.bf16.msra.mxu0 %v4595
      %4749 = vmatprep.subr.bf16.mxu0 0
      %4750 = vmatpush1.bf16.msra.mxu0 %v4596
      %4751 = vmatprep.subr.bf16.mxu0 0
      %4752 = vmatpush1.bf16.msra.mxu0 %v4597
      %4753 = vmatprep.subr.bf16.mxu0 0
      %4754 = vmatpush1.bf16.msra.mxu0 %v4598
      %4755 = vmatprep.subr.bf16.mxu0 0
      %4756 = vmatpush1.bf16.msra.mxu0 %v4599
      %4757 = vmatprep.subr.bf16.mxu0 0
      %4758 = vmatpush1.bf16.msra.mxu0 %v4600
      %4759 = vmatprep.subr.bf16.mxu0 0
      %4760 = vmatpush1.bf16.msra.mxu0 %v4601
      %4761 = vmatprep.subr.bf16.mxu0 0
      %4762 = vmatpush1.bf16.msra.mxu0 %v4602
      %4763 = vmatprep.subr.bf16.mxu0 0
      %4764 = vmatpush1.bf16.msra.mxu0 %v4603
      %4765 = vmatprep.subr.bf16.mxu0 0
      %4766 = vmatpush1.bf16.msra.mxu0 %v4604
      %4767 = vmatprep.subr.bf16.mxu0 0
      %4768 = vmatpush1.bf16.msra.mxu0 %v4605
      %4769 = vmatprep.subr.bf16.mxu0 0
      %4770 = vmatpush1.bf16.msra.mxu0 %v4606
      %4771 = vmatprep.subr.bf16.mxu0 0
      %4772 = vmatpush1.bf16.msra.mxu0 %v4607
      %4773 = vmatprep.subr.bf16.mxu0 0
      %4774 = vmatpush1.bf16.msra.mxu0 %v4608
      %4775 = vmatprep.subr.bf16.mxu0 0
      %4776 = vmatpush1.bf16.msra.mxu0 %v4609
      %4777 = vmatprep.subr.bf16.mxu0 0
      %4778 = vmatpush1.bf16.msra.mxu0 %v4610
      %4779 = vmatprep.mubr.bf16.mxu0 %v4183
      %4780 = vmatmul.mubr.bf16.gmra.mrb[0].mxu0 %v4182
      %v4781 = vpop.f32.mrb[0].mxu0
      %v4782 = vadd.f32 %v4742, %v4781
      %v4783 = vpop.f32.mrb[0].mxu0
      %v4784 = vpop.f32.mrb[0].mxu0
      %v4785 = vpop.f32.mrb[0].mxu0
      %4786 = vdwg.mxu0
      %4787 = vmatprep.subr.bf16.mxu0 0
      %4788 = vmatpush1.bf16.msra.mxu0 %v4611
      %4789 = vmatprep.subr.bf16.mxu0 0
      %4790 = vmatpush1.bf16.msra.mxu0 %v4612
      %4791 = vmatprep.subr.bf16.mxu0 0
      %4792 = vmatpush1.bf16.msra.mxu0 %v4613
      %4793 = vmatprep.subr.bf16.mxu0 0
      %4794 = vmatpush1.bf16.msra.mxu0 %v4614
      %4795 = vmatprep.subr.bf16.mxu0 0
      %4796 = vmatpush1.bf16.msra.mxu0 %v4615
      %4797 = vmatprep.subr.bf16.mxu0 0
      %4798 = vmatpush1.bf16.msra.mxu0 %v4616
      %4799 = vmatprep.subr.bf16.mxu0 0
      %4800 = vmatpush1.bf16.msra.mxu0 %v4617
      %4801 = vmatprep.subr.bf16.mxu0 0
      %4802 = vmatpush1.bf16.msra.mxu0 %v4618
      %4803 = vmatprep.subr.bf16.mxu0 0
      %4804 = vmatpush1.bf16.msra.mxu0 %v4619
      %4805 = vmatprep.subr.bf16.mxu0 0
      %4806 = vmatpush1.bf16.msra.mxu0 %v4620
      %4807 = vmatprep.subr.bf16.mxu0 0
      %4808 = vmatpush1.bf16.msra.mxu0 %v4621
      %4809 = vmatprep.subr.bf16.mxu0 0
      %4810 = vmatpush1.bf16.msra.mxu0 %v4622
      %4811 = vmatprep.subr.bf16.mxu0 0
      %4812 = vmatpush1.bf16.msra.mxu0 %v4623
      %4813 = vmatprep.subr.bf16.mxu0 0
      %4814 = vmatpush1.bf16.msra.mxu0 %v4624
      %4815 = vmatprep.subr.bf16.mxu0 0
      %4816 = vmatpush1.bf16.msra.mxu0 %v4625
      %4817 = vmatprep.subr.bf16.mxu0 0
      %4818 = vmatpush1.bf16.msra.mxu0 %v4626
      %4819 = vmatprep.mubr.bf16.mxu0 %v4185
      %4820 = vmatmul.mubr.bf16.gmra.mrb[0].mxu0 %v4184
      %v4821 = vpop.f32.mrb[0].mxu0
      %v4822 = vadd.f32 %v4782, %v4821
      %v4823 = vpop.f32.mrb[0].mxu0
      %v4824 = vpop.f32.mrb[0].mxu0
      %v4825 = vpop.f32.mrb[0].mxu0
      %4826 = vdwg.mxu0
      %4827 = vmatprep.subr.bf16.mxu0 0
      %4828 = vmatpush1.bf16.msra.mxu0 %v4627
      %4829 = vmatprep.subr.bf16.mxu0 0
      %4830 = vmatpush1.bf16.msra.mxu0 %v4628
      %4831 = vmatprep.subr.bf16.mxu0 0
      %4832 = vmatpush1.bf16.msra.mxu0 %v4629
      %4833 = vmatprep.subr.bf16.mxu0 0
      %4834 = vmatpush1.bf16.msra.mxu0 %v4630
      %4835 = vmatprep.subr.bf16.mxu0 0
      %4836 = vmatpush1.bf16.msra.mxu0 %v4631
      %4837 = vmatprep.subr.bf16.mxu0 0
      %4838 = vmatpush1.bf16.msra.mxu0 %v4632
      %4839 = vmatprep.subr.bf16.mxu0 0
      %4840 = vmatpush1.bf16.msra.mxu0 %v4633
      %4841 = vmatprep.subr.bf16.mxu0 0
      %4842 = vmatpush1.bf16.msra.mxu0 %v4634
      %4843 = vmatprep.subr.bf16.mxu0 0
      %4844 = vmatpush1.bf16.msra.mxu0 %v4635
      %4845 = vmatprep.subr.bf16.mxu0 0
      %4846 = vmatpush1.bf16.msra.mxu0 %v4636
      %4847 = vmatprep.subr.bf16.mxu0 0
      %4848 = vmatpush1.bf16.msra.mxu0 %v4637
      %4849 = vmatprep.subr.bf16.mxu0 0
      %4850 = vmatpush1.bf16.msra.mxu0 %v4638
      %4851 = vmatprep.subr.bf16.mxu0 0
      %4852 = vmatpush1.bf16.msra.mxu0 %v4639
      %4853 = vmatprep.subr.bf16.mxu0 0
      %4854 = vmatpush1.bf16.msra.mxu0 %v4640
      %4855 = vmatprep.subr.bf16.mxu0 0
      %4856 = vmatpush1.bf16.msra.mxu0 %v4641
      %4857 = vmatprep.subr.bf16.mxu0 0
      %4858 = vmatpush1.bf16.msra.mxu0 %v4642
      %4859 = vmatprep.mubr.bf16.mxu0 %v4187
      %4860 = vmatmul.mubr.bf16.gmra.mrb[0].mxu0 %v4186
      %v4861 = vpop.f32.mrb[0].mxu0
      %v4862 = vadd.f32 %v4822, %v4861
      %v4863 = vpop.f32.mrb[0].mxu0
      %v4864 = vpop.f32.mrb[0].mxu0
      %v4865 = vpop.f32.mrb[0].mxu0
      %4866 = vdwg.mxu0
      %v4867 = vmax.f32 %v4862, 0.0
      %vm4868 = vcmask 254976
      %4869 = vst.msk [vmem:[%s446] sm:$0x3] %vm4868, %v4867
      %p4870 = scmp.lt.s32.totalorder %s20, 1
      %s4871 = scalar_select %p4870, %s20, 1
      %s4872 = smul.addr %s4871, 2
      %s4873 = scalar_lea.vmem %s9, %s4872
      // Predicated region
      $region57: #{multiple_cnn_forward.1} parent=55 // pred_check
        %p4874 = pneg %p267
      $region58: #{multiple_cnn_forward.1} parent=55 // pred_check_branch
        %4876 = sbr.rel (%p4874) target = $region60
      $region59: #{multiple_cnn_forward.1} parent=55 // pred_region
        _
      $region60: #{multiple_cnn_forward.1} parent=55 // pred_fallthru
        _
    $region56: #{multiple_cnn_forward.1} parent=5 // pred_fallthru
      _
    %p4877 = scmp.le.s32.totalorder 2, %s15
    // Predicated region
    $region61: #{multiple_cnn_forward.1} parent=5 // pred_check
      %p4878 = pneg %p4877
    $region62: #{multiple_cnn_forward.1} parent=5 // pred_check_branch
      %4880 = sbr.rel (%p4878) target = $region64
    $region63: #{multiple_cnn_forward.1} parent=5 // pred_region
      %s4881 = ssub.s32 %s15, 2
      // Predicated region
      $region65: #{multiple_cnn_forward.1} parent=63 // pred_check
        %p4882 = pneg %p273
      $region66: #{multiple_cnn_forward.1} parent=63 // pred_check_branch
        %4884 = sbr.rel (%p4882) target = $region68
      $region67: #{multiple_cnn_forward.1} parent=63 // pred_region
        %p4885 = scmp.lt.s32.totalorder %s21, 1
        %s4886 = scalar_select %p4885, %s21, 1
        %s4887 = smul.addr %s4886, 2
        %s4888 = scalar_lea.vmem %s9, %s4887
      $region68: #{multiple_cnn_forward.1} parent=63 // pred_fallthru
        _
    $region64: #{multiple_cnn_forward.1} parent=5 // pred_fallthru
      _
  $region6: #{multiple_cnn_forward.1} parent=0 // loop_footer
    %s19 = sadd.s32 1, %s15
  $region7: #{multiple_cnn_forward.1} parent=0 // loop_footer_branch
    %14 = sbr.rel target = $region3
  $region8: #{multiple_cnn_forward.1} parent=0 // loop_exit
    _

</llo_original>
